<compile_context>
chip_gen: v7x
topology: tpu7x:2x2x1
jax: 0.10.0
libtpu: 0.0.40
codegen_flags: <defaults>
</compile_context>

<pallas_src>
import functools

import jax
import jax.numpy as jnp
from jax.experimental import pallas as pl
from jax.experimental.pallas import tpu as pltpu


MAX_B_TILE = 512   # max batch lanes per grid step (multiple of 128)
LB = 128           # lane sub-block size: all routing math runs at 128 lanes


# -----------------------------------------------------------------------------
# squash used INSIDE the kernel (batch in lanes, norm over `axis`)
# -----------------------------------------------------------------------------
def _squash_in_kernel(t, axis, eps=1e-7):
    sq = jnp.sum(t * t, axis=axis, keepdims=True)
    inv_norm = jax.lax.rsqrt(sq + eps)                      # 1 / sqrt(sq + eps)
    scale = sq * pl.reciprocal(1.0 + sq, approx=True)       # sq / (1 + sq)  (EUP)
    return scale * inv_norm * t


# -----------------------------------------------------------------------------
# Pallas kernel: one b_tile batch block per grid step, processed in 128-lane
# sub-blocks so the routing working set never exceeds ~40 vregs.
# -----------------------------------------------------------------------------
def _caps_kernel(x_ref, w_ref, o_ref, uhat_ref, *,
                 D, M, P, I, O, num_iterations, lane_sub):
    # x_ref:    (P, M*I, b_tile)   primary capsules, batch in lanes
    # w_ref:    (M*D*O, M*I)       block-diagonal weights (all m in one matmul)
    # o_ref:    (D, O, b_tile)     digit capsules, batch in lanes (lane-dense)
    # uhat_ref: (P, M*D*O, 128)    VMEM scratch, reused per 128-lane sub-block
    DO = D * O
    w = w_ref[...]                                     # tiny (<= 8 KiB), resident

    for lb in range(lane_sub):                         # static inner lane loop
        lo = lb * LB

        # ---- u_hat: one (M*D*O, M*I) @ (M*I, 128) MXU matmul per p ----------
        # Single full-tile store per p (no per-d slicing of the result).
        for p in range(P):
            uhat_ref[p] = jnp.dot(w, x_ref[p, :, lo:lo + LB],
                                  preferred_element_type=jnp.float32)

        def uh(m, p):
            # Stream one 8-vreg (D, O, 128) slice of u_hat from scratch.
            # D*O is a multiple of 8 -> aligned read; reshape is free (O % 8 == 0).
            return uhat_ref[p, m * DO:(m + 1) * DO, :].reshape(D, O, LB)

        # ---- dynamic routing (torch loop runs num_iterations - 1 times) -----
        b = jnp.zeros((D, M, P, LB), jnp.float32)
        for _ in range(num_iterations - 1):
            # softmax over the digit-capsule axis D (torch dim=1)
            e = jnp.exp(b - jnp.max(b, axis=0, keepdims=True))
            c = e * pl.reciprocal(jnp.sum(e, axis=0, keepdims=True), approx=True)

            # s[d, o] = sum_{m,p} c[d, m, p] * u_hat[d, m, p, o]   (streamed)
            s = jnp.zeros((D, O, LB), jnp.float32)
            for m in range(M):
                for p in range(P):
                    cmp_ = c[:, m, p, :]                         # (D, LB)
                    s = s + cmp_[:, None, :] * uh(m, p)
            v = _squash_in_kernel(s, axis=1)                     # (D, O, LB)

            # uv[d, m, p] = sum_o u_hat[d, m, p, o] * v[d, o]    (streamed)
            uv_rows = []
            for m in range(M):
                for p in range(P):
                    uv_rows.append(jnp.sum(uh(m, p) * v, axis=1))   # (D, LB)
            uv = jnp.stack(uv_rows, axis=1).reshape(D, M, P, LB)
            b = b + uv

        # ---- final pass: softmax over the primary-capsule axis P (torch dim=3)
        e = jnp.exp(b - jnp.max(b, axis=2, keepdims=True))
        c = e * pl.reciprocal(jnp.sum(e, axis=2, keepdims=True), approx=True)
        s = jnp.zeros((D, O, LB), jnp.float32)
        for m in range(M):
            for p in range(P):
                cmp_ = c[:, m, p, :]
                s = s + cmp_[:, None, :] * uh(m, p)
        o_ref[:, :, lo:lo + LB] = _squash_in_kernel(s, axis=1)   # lane-dense store


# -----------------------------------------------------------------------------
# Wrapper: layout plumbing + pallas_call
# -----------------------------------------------------------------------------
def caps_shape_layer(x, W, *, num_iterations, max_b_tile=MAX_B_TILE):
    """x: (B, M, P, I) float32; W: (1, D, M, 1, O, I) float32 -> (B, D, O)."""
    B, M, P, I = x.shape
    D = W.shape[1]
    O = W.shape[4]
    assert W.shape == (1, D, M, 1, O, I)
    assert O % 8 == 0 and (M * I) % 8 == 0, "sublane alignment of scratch / x tiles"

    # --- batch blocking: multiples of 128 lanes; >= 2 blocks for v7x's 2 TCs --
    n_groups = pl.cdiv(B, LB)                       # 128-lane groups after padding
    gpb = min(max(max_b_tile // LB, 1), n_groups)   # lane groups per grid block
    if n_groups >= 2 and pl.cdiv(n_groups, gpb) < 2:
        gpb = pl.cdiv(n_groups, 2)                  # keep both TensorCores busy
    b_tile = gpb * LB
    n_blocks = pl.cdiv(n_groups, gpb)
    Bp = n_blocks * b_tile

    # batch -> lanes, pre-blocked so each grid step DMAs one contiguous slab:
    # (B, M, P, I) -> (P, M*I, Bp) -> (n_blocks, P, M*I, b_tile)
    xf = x.astype(jnp.float32)
    x_t = jnp.transpose(xf, (2, 1, 3, 0)).reshape(P, M * I, B)
    if Bp != B:
        x_t = jnp.pad(x_t, ((0, 0), (0, 0), (0, Bp - B)))
    x_blk = jnp.transpose(x_t.reshape(P, M * I, n_blocks, b_tile), (2, 0, 1, 3))

    # (1, D, M, 1, O, I) -> block-diagonal (M*D*O, M*I): one matmul per p covers all m
    W0 = W[0, :, :, 0].astype(jnp.float32)                        # (D, M, O, I)
    W_m = jnp.transpose(W0, (1, 0, 2, 3)).reshape(M, D * O, I)    # (M, D*O, I)
    Wbd = jnp.zeros((M * D * O, M * I), jnp.float32)
    for m in range(M):
        Wbd = Wbd.at[m * D * O:(m + 1) * D * O, m * I:(m + 1) * I].set(W_m[m])

    kernel = functools.partial(_caps_kernel, D=D, M=M, P=P, I=I, O=O,
                               num_iterations=num_iterations, lane_sub=gpb)

    out = pl.pallas_call(
        kernel,
        out_shape=jax.ShapeDtypeStruct((D, O, Bp), jnp.float32),
        grid_spec=pltpu.PrefetchScalarGridSpec(
            num_scalar_prefetch=0,
            grid=(n_blocks,),
            in_specs=[
                # contiguous per-step x slab; leading block dim squeezed out
                pl.BlockSpec((None, P, M * I, b_tile), lambda g: (g, 0, 0, 0)),
                # constant block index -> weights stay resident, no re-DMA
                pl.BlockSpec((M * D * O, M * I), lambda g: (0, 0)),
            ],
            out_specs=pl.BlockSpec((D, O, b_tile), lambda g: (0, 0, g)),
            scratch_shapes=[pltpu.VMEM((P, M * D * O, LB), jnp.float32)],
        ),
        compiler_params=pltpu.CompilerParams(
            dimension_semantics=("parallel",)),
    )(x_blk, Wbd)

    # (D, O, Bp) -> (B, D, O): drop batch padding, move batch back to the front
    return jnp.transpose(out[:, :, :B], (2, 0, 1))


# -----------------------------------------------------------------------------
# Pure-JAX reference mirroring the PyTorch forward exactly (for checking)
# -----------------------------------------------------------------------------
def _squash_ref(t, axis=-1, eps=1e-7):
    squared_norm = jnp.sum(t * t, axis=axis, keepdims=True)
    safe_norm = jnp.sqrt(squared_norm + eps)
    scale = squared_norm / (1.0 + squared_norm)
    return scale * (t / safe_norm)


def ref_forward(x, W, num_iterations):
    B = x.shape[0]
    O = W.shape[4]
    u = x[:, None, :, :, :, None]                            # (B,1,M,P,I,1)
    u_hat = jnp.squeeze(jnp.matmul(W, u), -1)                # (B,D,M,P,O)
    b = jnp.zeros((B, W.shape[1], u_hat.shape[2], u_hat.shape[3], 1), jnp.float32)
    for _ in range(num_iterations - 1):
        c = jax.nn.softmax(b, axis=1)
        s = (c * u_hat).sum(axis=2).sum(axis=2)
        v = _squash_ref(s)
        uv = jnp.matmul(u_hat.reshape(B, W.shape[1], -1, O), v[..., None])
        b = b + uv.reshape(b.shape)
    c = jax.nn.softmax(b, axis=3)
    s = (c * u_hat).sum(axis=2).sum(axis=2)
    return _squash_ref(s)


if __name__ == "__main__":
    # Small, self-consistent shapes (batch is padded to 128 lanes internally).
    B = 2                 # batch
    D = 4                 # num_digit_cap
    M = 2                 # num_prim_map
    P = 8                 # num_prim_cap
    I = 8                 # in_cap_dim
    O = 16                # out_cap_dim
    NUM_ITERATIONS = 3

    key = jax.random.PRNGKey(0)
    kx, kw = jax.random.split(key)
    x = jax.random.normal(kx, (B, M, P, I), dtype=jnp.float32)
    # Deterministic parameter init matching nn.Parameter(0.01 * randn(...)).
    W = 0.01 * jax.random.normal(kw, (1, D, M, 1, O, I), dtype=jnp.float32)

    out = caps_shape_layer(x, W, num_iterations=NUM_ITERATIONS)
    out = jax.block_until_ready(out)

    ref = ref_forward(x, W, NUM_ITERATIONS)
    assert out.shape == (B, D, O), out.shape
    # Tolerance slightly loosened vs a pure-f32 check: the kernel uses the EUP
    # approximate reciprocal for softmax denominators and the squash scaling
    # (known, documented source of mismatch — not a logic bug).
    if not jnp.allclose(out, ref, atol=1e-4, rtol=1e-2):
        max_err = float(jnp.max(jnp.abs(out - ref)))
        raise AssertionError(f"Pallas kernel mismatch vs reference, max_err={max_err}")

    print("KERNEL_OK")
</pallas_src>

<mosaic_0001>
module attributes {stable_mosaic.version = 11 : i64} {
  func.func @_caps_kernel(%arg0: i32, %arg1: memref<1x8x16x128xf32, #tpu.memory_space<vmem>>, %arg2: memref<128x16xf32, #tpu.memory_space<vmem>>, %arg3: memref<4x16x128xf32, #tpu.memory_space<vmem>>, %arg4: memref<8x128x128xf32, #tpu.memory_space<vmem>>) attributes {dimension_semantics = [#tpu.dimension_semantics<parallel>], iteration_bounds = array<i64: 1>, scalar_prefetch = 0 : i64, scratch_operands = 1 : i64, tpu.core_type = #tpu.core_type<tc>, window_params = [{transform_indices = @transform_0, window_bounds = array<i64: 1, 8, 16, 128>}, {pipeline_mode = #tpu.pipeline_mode<synchronous>, transform_indices = @transform_1, window_bounds = array<i64: 128, 16>}, {transform_indices = @transform_2, window_bounds = array<i64: 4, 16, 128>}]} {
    %c0 = arith.constant 0 : index
    %c0_0 = arith.constant 0 : index
    %0 = vector.load %arg2[%c0, %c0_0] : memref<128x16xf32, #tpu.memory_space<vmem>>, vector<128x16xf32>
    %c0_1 = arith.constant 0 : index
    %c0_2 = arith.constant 0 : index
    %c0_3 = arith.constant 0 : index
    %c0_4 = arith.constant 0 : index
    %1 = vector.load %arg1[%c0_1, %c0_2, %c0_3, %c0_4] : memref<1x8x16x128xf32, #tpu.memory_space<vmem>>, vector<1x1x16x128xf32>
    %2 = vector.shape_cast %1 : vector<1x1x16x128xf32> to vector<16x128xf32>
    %cst = arith.constant dense<0.000000e+00> : vector<128x128xf32>
    %3 = tpu.matmul %0, %2, %cst {dimension_numbers = #tpu.dot_dimension_numbers<[1], [0], [0], [1], [0, 0, 1, 1], [], []>} : vector<128x16xf32>, vector<16x128xf32>, vector<128x128xf32> -> vector<128x128xf32>
    %c0_5 = arith.constant 0 : index
    %c0_6 = arith.constant 0 : index
    %c0_7 = arith.constant 0 : index
    %4 = vector.load %arg4[%c0_5, %c0_6, %c0_7] : memref<8x128x128xf32, #tpu.memory_space<vmem>>, vector<1x128x128xf32>
    %5 = vector.shape_cast %4 : vector<1x128x128xf32> to vector<128x128xf32>
    %6 = vector.shape_cast %3 : vector<128x128xf32> to vector<1x128x128xf32>
    tpu.vector_store %arg4[%c0_5, %c0_6, %c0_7], %6 {strides = array<i32>} : memref<8x128x128xf32, #tpu.memory_space<vmem>>, vector<1x128x128xf32>,
    %c0_8 = arith.constant 0 : index
    %c1 = arith.constant 1 : index
    %c0_9 = arith.constant 0 : index
    %c0_10 = arith.constant 0 : index
    %7 = vector.load %arg1[%c0_8, %c1, %c0_9, %c0_10] : memref<1x8x16x128xf32, #tpu.memory_space<vmem>>, vector<1x1x16x128xf32>
    %8 = vector.shape_cast %7 : vector<1x1x16x128xf32> to vector<16x128xf32>
    %cst_11 = arith.constant dense<0.000000e+00> : vector<128x128xf32>
    %9 = tpu.matmul %0, %8, %cst_11 {dimension_numbers = #tpu.dot_dimension_numbers<[1], [0], [0], [1], [0, 0, 1, 1], [], []>} : vector<128x16xf32>, vector<16x128xf32>, vector<128x128xf32> -> vector<128x128xf32>
    %c1_12 = arith.constant 1 : index
    %c0_13 = arith.constant 0 : index
    %c0_14 = arith.constant 0 : index
    %10 = vector.load %arg4[%c1_12, %c0_13, %c0_14] : memref<8x128x128xf32, #tpu.memory_space<vmem>>, vector<1x128x128xf32>
    %11 = vector.shape_cast %10 : vector<1x128x128xf32> to vector<128x128xf32>
    %12 = vector.shape_cast %9 : vector<128x128xf32> to vector<1x128x128xf32>
    tpu.vector_store %arg4[%c1_12, %c0_13, %c0_14], %12 {strides = array<i32>} : memref<8x128x128xf32, #tpu.memory_space<vmem>>, vector<1x128x128xf32>,
    %c0_15 = arith.constant 0 : index
    %c2 = arith.constant 2 : index
    %c0_16 = arith.constant 0 : index
    %c0_17 = arith.constant 0 : index
    %13 = vector.load %arg1[%c0_15, %c2, %c0_16, %c0_17] : memref<1x8x16x128xf32, #tpu.memory_space<vmem>>, vector<1x1x16x128xf32>
    %14 = vector.shape_cast %13 : vector<1x1x16x128xf32> to vector<16x128xf32>
    %cst_18 = arith.constant dense<0.000000e+00> : vector<128x128xf32>
    %15 = tpu.matmul %0, %14, %cst_18 {dimension_numbers = #tpu.dot_dimension_numbers<[1], [0], [0], [1], [0, 0, 1, 1], [], []>} : vector<128x16xf32>, vector<16x128xf32>, vector<128x128xf32> -> vector<128x128xf32>
    %c2_19 = arith.constant 2 : index
    %c0_20 = arith.constant 0 : index
    %c0_21 = arith.constant 0 : index
    %16 = vector.load %arg4[%c2_19, %c0_20, %c0_21] : memref<8x128x128xf32, #tpu.memory_space<vmem>>, vector<1x128x128xf32>
    %17 = vector.shape_cast %16 : vector<1x128x128xf32> to vector<128x128xf32>
    %18 = vector.shape_cast %15 : vector<128x128xf32> to vector<1x128x128xf32>
    tpu.vector_store %arg4[%c2_19, %c0_20, %c0_21], %18 {strides = array<i32>} : memref<8x128x128xf32, #tpu.memory_space<vmem>>, vector<1x128x128xf32>,
    %c0_22 = arith.constant 0 : index
    %c3 = arith.constant 3 : index
    %c0_23 = arith.constant 0 : index
    %c0_24 = arith.constant 0 : index
    %19 = vector.load %arg1[%c0_22, %c3, %c0_23, %c0_24] : memref<1x8x16x128xf32, #tpu.memory_space<vmem>>, vector<1x1x16x128xf32>
    %20 = vector.shape_cast %19 : vector<1x1x16x128xf32> to vector<16x128xf32>
    %cst_25 = arith.constant dense<0.000000e+00> : vector<128x128xf32>
    %21 = tpu.matmul %0, %20, %cst_25 {dimension_numbers = #tpu.dot_dimension_numbers<[1], [0], [0], [1], [0, 0, 1, 1], [], []>} : vector<128x16xf32>, vector<16x128xf32>, vector<128x128xf32> -> vector<128x128xf32>
    %c3_26 = arith.constant 3 : index
    %c0_27 = arith.constant 0 : index
    %c0_28 = arith.constant 0 : index
    %22 = vector.load %arg4[%c3_26, %c0_27, %c0_28] : memref<8x128x128xf32, #tpu.memory_space<vmem>>, vector<1x128x128xf32>
    %23 = vector.shape_cast %22 : vector<1x128x128xf32> to vector<128x128xf32>
    %24 = vector.shape_cast %21 : vector<128x128xf32> to vector<1x128x128xf32>
    tpu.vector_store %arg4[%c3_26, %c0_27, %c0_28], %24 {strides = array<i32>} : memref<8x128x128xf32, #tpu.memory_space<vmem>>, vector<1x128x128xf32>,
    %c0_29 = arith.constant 0 : index
    %c4 = arith.constant 4 : index
    %c0_30 = arith.constant 0 : index
    %c0_31 = arith.constant 0 : index
    %25 = vector.load %arg1[%c0_29, %c4, %c0_30, %c0_31] : memref<1x8x16x128xf32, #tpu.memory_space<vmem>>, vector<1x1x16x128xf32>
    %26 = vector.shape_cast %25 : vector<1x1x16x128xf32> to vector<16x128xf32>
    %cst_32 = arith.constant dense<0.000000e+00> : vector<128x128xf32>
    %27 = tpu.matmul %0, %26, %cst_32 {dimension_numbers = #tpu.dot_dimension_numbers<[1], [0], [0], [1], [0, 0, 1, 1], [], []>} : vector<128x16xf32>, vector<16x128xf32>, vector<128x128xf32> -> vector<128x128xf32>
    %c4_33 = arith.constant 4 : index
    %c0_34 = arith.constant 0 : index
    %c0_35 = arith.constant 0 : index
    %28 = vector.load %arg4[%c4_33, %c0_34, %c0_35] : memref<8x128x128xf32, #tpu.memory_space<vmem>>, vector<1x128x128xf32>
    %29 = vector.shape_cast %28 : vector<1x128x128xf32> to vector<128x128xf32>
    %30 = vector.shape_cast %27 : vector<128x128xf32> to vector<1x128x128xf32>
    tpu.vector_store %arg4[%c4_33, %c0_34, %c0_35], %30 {strides = array<i32>} : memref<8x128x128xf32, #tpu.memory_space<vmem>>, vector<1x128x128xf32>,
    %c0_36 = arith.constant 0 : index
    %c5 = arith.constant 5 : index
    %c0_37 = arith.constant 0 : index
    %c0_38 = arith.constant 0 : index
    %31 = vector.load %arg1[%c0_36, %c5, %c0_37, %c0_38] : memref<1x8x16x128xf32, #tpu.memory_space<vmem>>, vector<1x1x16x128xf32>
    %32 = vector.shape_cast %31 : vector<1x1x16x128xf32> to vector<16x128xf32>
    %cst_39 = arith.constant dense<0.000000e+00> : vector<128x128xf32>
    %33 = tpu.matmul %0, %32, %cst_39 {dimension_numbers = #tpu.dot_dimension_numbers<[1], [0], [0], [1], [0, 0, 1, 1], [], []>} : vector<128x16xf32>, vector<16x128xf32>, vector<128x128xf32> -> vector<128x128xf32>
    %c5_40 = arith.constant 5 : index
    %c0_41 = arith.constant 0 : index
    %c0_42 = arith.constant 0 : index
    %34 = vector.load %arg4[%c5_40, %c0_41, %c0_42] : memref<8x128x128xf32, #tpu.memory_space<vmem>>, vector<1x128x128xf32>
    %35 = vector.shape_cast %34 : vector<1x128x128xf32> to vector<128x128xf32>
    %36 = vector.shape_cast %33 : vector<128x128xf32> to vector<1x128x128xf32>
    tpu.vector_store %arg4[%c5_40, %c0_41, %c0_42], %36 {strides = array<i32>} : memref<8x128x128xf32, #tpu.memory_space<vmem>>, vector<1x128x128xf32>,
    %c0_43 = arith.constant 0 : index
    %c6 = arith.constant 6 : index
    %c0_44 = arith.constant 0 : index
    %c0_45 = arith.constant 0 : index
    %37 = vector.load %arg1[%c0_43, %c6, %c0_44, %c0_45] : memref<1x8x16x128xf32, #tpu.memory_space<vmem>>, vector<1x1x16x128xf32>
    %38 = vector.shape_cast %37 : vector<1x1x16x128xf32> to vector<16x128xf32>
    %cst_46 = arith.constant dense<0.000000e+00> : vector<128x128xf32>
    %39 = tpu.matmul %0, %38, %cst_46 {dimension_numbers = #tpu.dot_dimension_numbers<[1], [0], [0], [1], [0, 0, 1, 1], [], []>} : vector<128x16xf32>, vector<16x128xf32>, vector<128x128xf32> -> vector<128x128xf32>
    %c6_47 = arith.constant 6 : index
    %c0_48 = arith.constant 0 : index
    %c0_49 = arith.constant 0 : index
    %40 = vector.load %arg4[%c6_47, %c0_48, %c0_49] : memref<8x128x128xf32, #tpu.memory_space<vmem>>, vector<1x128x128xf32>
    %41 = vector.shape_cast %40 : vector<1x128x128xf32> to vector<128x128xf32>
    %42 = vector.shape_cast %39 : vector<128x128xf32> to vector<1x128x128xf32>
    tpu.vector_store %arg4[%c6_47, %c0_48, %c0_49], %42 {strides = array<i32>} : memref<8x128x128xf32, #tpu.memory_space<vmem>>, vector<1x128x128xf32>,
    %c0_50 = arith.constant 0 : index
    %c7 = arith.constant 7 : index
    %c0_51 = arith.constant 0 : index
    %c0_52 = arith.constant 0 : index
    %43 = vector.load %arg1[%c0_50, %c7, %c0_51, %c0_52] : memref<1x8x16x128xf32, #tpu.memory_space<vmem>>, vector<1x1x16x128xf32>
    %44 = vector.shape_cast %43 : vector<1x1x16x128xf32> to vector<16x128xf32>
    %cst_53 = arith.constant dense<0.000000e+00> : vector<128x128xf32>
    %45 = tpu.matmul %0, %44, %cst_53 {dimension_numbers = #tpu.dot_dimension_numbers<[1], [0], [0], [1], [0, 0, 1, 1], [], []>} : vector<128x16xf32>, vector<16x128xf32>, vector<128x128xf32> -> vector<128x128xf32>
    %c7_54 = arith.constant 7 : index
    %c0_55 = arith.constant 0 : index
    %c0_56 = arith.constant 0 : index
    %46 = vector.load %arg4[%c7_54, %c0_55, %c0_56] : memref<8x128x128xf32, #tpu.memory_space<vmem>>, vector<1x128x128xf32>
    %47 = vector.shape_cast %46 : vector<1x128x128xf32> to vector<128x128xf32>
    %48 = vector.shape_cast %45 : vector<128x128xf32> to vector<1x128x128xf32>
    tpu.vector_store %arg4[%c7_54, %c0_55, %c0_56], %48 {strides = array<i32>} : memref<8x128x128xf32, #tpu.memory_space<vmem>>, vector<1x128x128xf32>,
    %cst_57 = arith.constant 0.000000e+00 : f32
    %49 = vector.broadcast %cst_57 : f32 to vector<4x2x8x128xf32>
    %cst_58 = arith.constant dense<0xFF800000> : vector<2x8x128xf32>
    %50 = vector.multi_reduction <maximumf>, %49, %cst_58 [0] : vector<4x2x8x128xf32> to vector<2x8x128xf32>
    %51 = vector.shape_cast %50 : vector<2x8x128xf32> to vector<1x2x8x128xf32>
    %52 = vector.broadcast %51 : vector<1x2x8x128xf32> to vector<4x2x8x128xf32>
    %53 = arith.subf %49, %52 : vector<4x2x8x128xf32>
    %54 = math.exp %53 : vector<4x2x8x128xf32>
    %cst_59 = arith.constant dense<0.000000e+00> : vector<2x8x128xf32>
    %55 = vector.multi_reduction <add>, %54, %cst_59 [0] : vector<4x2x8x128xf32> to vector<2x8x128xf32>
    %56 = vector.shape_cast %55 : vector<2x8x128xf32> to vector<1x2x8x128xf32>
    %57 = tpu.reciprocal %56 {approx = true} : vector<1x2x8x128xf32> -> vector<1x2x8x128xf32>
    %58 = vector.broadcast %57 : vector<1x2x8x128xf32> to vector<4x2x8x128xf32>
    %59 = arith.mulf %54, %58 : vector<4x2x8x128xf32>
    %cst_60 = arith.constant 0.000000e+00 : f32
    %60 = vector.broadcast %cst_60 : f32 to vector<4x16x128xf32>
    %61 = vector.extract_strided_slice %59 {offsets = [0, 0, 0, 0], sizes = [4, 1, 1, 128], strides = [1, 1, 1, 1]} : vector<4x2x8x128xf32> to vector<4x1x1x128xf32>
    %62 = vector.shape_cast %61 : vector<4x1x1x128xf32> to vector<4x128xf32>
    %63 = vector.shape_cast %62 : vector<4x128xf32> to vector<4x1x128xf32>
    %c0_61 = arith.constant 0 : index
    %c0_62 = arith.constant 0 : index
    %c0_63 = arith.constant 0 : index
    %64 = vector.load %arg4[%c0_61, %c0_62, %c0_63] : memref<8x128x128xf32, #tpu.memory_space<vmem>>, vector<1x64x128xf32>
    %65 = vector.shape_cast %64 : vector<1x64x128xf32> to vector<64x128xf32>
    %66 = vector.shape_cast %65 : vector<64x128xf32> to vector<4x16x128xf32>
    %67 = vector.broadcast %63 : vector<4x1x128xf32> to vector<4x16x128xf32>
    %68 = arith.mulf %67, %66 : vector<4x16x128xf32>
    %69 = arith.addf %60, %68 : vector<4x16x128xf32>
    %70 = vector.extract_strided_slice %59 {offsets = [0, 0, 1, 0], sizes = [4, 1, 1, 128], strides = [1, 1, 1, 1]} : vector<4x2x8x128xf32> to vector<4x1x1x128xf32>
    %71 = vector.shape_cast %70 : vector<4x1x1x128xf32> to vector<4x128xf32>
    %72 = vector.shape_cast %71 : vector<4x128xf32> to vector<4x1x128xf32>
    %c1_64 = arith.constant 1 : index
    %c0_65 = arith.constant 0 : index
    %c0_66 = arith.constant 0 : index
    %73 = vector.load %arg4[%c1_64, %c0_65, %c0_66] : memref<8x128x128xf32, #tpu.memory_space<vmem>>, vector<1x64x128xf32>
    %74 = vector.shape_cast %73 : vector<1x64x128xf32> to vector<64x128xf32>
    %75 = vector.shape_cast %74 : vector<64x128xf32> to vector<4x16x128xf32>
    %76 = vector.broadcast %72 : vector<4x1x128xf32> to vector<4x16x128xf32>
    %77 = arith.mulf %76, %75 : vector<4x16x128xf32>
    %78 = arith.addf %69, %77 : vector<4x16x128xf32>
    %79 = vector.extract_strided_slice %59 {offsets = [0, 0, 2, 0], sizes = [4, 1, 1, 128], strides = [1, 1, 1, 1]} : vector<4x2x8x128xf32> to vector<4x1x1x128xf32>
    %80 = vector.shape_cast %79 : vector<4x1x1x128xf32> to vector<4x128xf32>
    %81 = vector.shape_cast %80 : vector<4x128xf32> to vector<4x1x128xf32>
    %c2_67 = arith.constant 2 : index
    %c0_68 = arith.constant 0 : index
    %c0_69 = arith.constant 0 : index
    %82 = vector.load %arg4[%c2_67, %c0_68, %c0_69] : memref<8x128x128xf32, #tpu.memory_space<vmem>>, vector<1x64x128xf32>
    %83 = vector.shape_cast %82 : vector<1x64x128xf32> to vector<64x128xf32>
    %84 = vector.shape_cast %83 : vector<64x128xf32> to vector<4x16x128xf32>
    %85 = vector.broadcast %81 : vector<4x1x128xf32> to vector<4x16x128xf32>
    %86 = arith.mulf %85, %84 : vector<4x16x128xf32>
    %87 = arith.addf %78, %86 : vector<4x16x128xf32>
    %88 = vector.extract_strided_slice %59 {offsets = [0, 0, 3, 0], sizes = [4, 1, 1, 128], strides = [1, 1, 1, 1]} : vector<4x2x8x128xf32> to vector<4x1x1x128xf32>
    %89 = vector.shape_cast %88 : vector<4x1x1x128xf32> to vector<4x128xf32>
    %90 = vector.shape_cast %89 : vector<4x128xf32> to vector<4x1x128xf32>
    %c3_70 = arith.constant 3 : index
    %c0_71 = arith.constant 0 : index
    %c0_72 = arith.constant 0 : index
    %91 = vector.load %arg4[%c3_70, %c0_71, %c0_72] : memref<8x128x128xf32, #tpu.memory_space<vmem>>, vector<1x64x128xf32>
    %92 = vector.shape_cast %91 : vector<1x64x128xf32> to vector<64x128xf32>
    %93 = vector.shape_cast %92 : vector<64x128xf32> to vector<4x16x128xf32>
    %94 = vector.broadcast %90 : vector<4x1x128xf32> to vector<4x16x128xf32>
    %95 = arith.mulf %94, %93 : vector<4x16x128xf32>
    %96 = arith.addf %87, %95 : vector<4x16x128xf32>
    %97 = vector.extract_strided_slice %59 {offsets = [0, 0, 4, 0], sizes = [4, 1, 1, 128], strides = [1, 1, 1, 1]} : vector<4x2x8x128xf32> to vector<4x1x1x128xf32>
    %98 = vector.shape_cast %97 : vector<4x1x1x128xf32> to vector<4x128xf32>
    %99 = vector.shape_cast %98 : vector<4x128xf32> to vector<4x1x128xf32>
    %c4_73 = arith.constant 4 : index
    %c0_74 = arith.constant 0 : index
    %c0_75 = arith.constant 0 : index
    %100 = vector.load %arg4[%c4_73, %c0_74, %c0_75] : memref<8x128x128xf32, #tpu.memory_space<vmem>>, vector<1x64x128xf32>
    %101 = vector.shape_cast %100 : vector<1x64x128xf32> to vector<64x128xf32>
    %102 = vector.shape_cast %101 : vector<64x128xf32> to vector<4x16x128xf32>
    %103 = vector.broadcast %99 : vector<4x1x128xf32> to vector<4x16x128xf32>
    %104 = arith.mulf %103, %102 : vector<4x16x128xf32>
    %105 = arith.addf %96, %104 : vector<4x16x128xf32>
    %106 = vector.extract_strided_slice %59 {offsets = [0, 0, 5, 0], sizes = [4, 1, 1, 128], strides = [1, 1, 1, 1]} : vector<4x2x8x128xf32> to vector<4x1x1x128xf32>
    %107 = vector.shape_cast %106 : vector<4x1x1x128xf32> to vector<4x128xf32>
    %108 = vector.shape_cast %107 : vector<4x128xf32> to vector<4x1x128xf32>
    %c5_76 = arith.constant 5 : index
    %c0_77 = arith.constant 0 : index
    %c0_78 = arith.constant 0 : index
    %109 = vector.load %arg4[%c5_76, %c0_77, %c0_78] : memref<8x128x128xf32, #tpu.memory_space<vmem>>, vector<1x64x128xf32>
    %110 = vector.shape_cast %109 : vector<1x64x128xf32> to vector<64x128xf32>
    %111 = vector.shape_cast %110 : vector<64x128xf32> to vector<4x16x128xf32>
    %112 = vector.broadcast %108 : vector<4x1x128xf32> to vector<4x16x128xf32>
    %113 = arith.mulf %112, %111 : vector<4x16x128xf32>
    %114 = arith.addf %105, %113 : vector<4x16x128xf32>
    %115 = vector.extract_strided_slice %59 {offsets = [0, 0, 6, 0], sizes = [4, 1, 1, 128], strides = [1, 1, 1, 1]} : vector<4x2x8x128xf32> to vector<4x1x1x128xf32>
    %116 = vector.shape_cast %115 : vector<4x1x1x128xf32> to vector<4x128xf32>
    %117 = vector.shape_cast %116 : vector<4x128xf32> to vector<4x1x128xf32>
    %c6_79 = arith.constant 6 : index
    %c0_80 = arith.constant 0 : index
    %c0_81 = arith.constant 0 : index
    %118 = vector.load %arg4[%c6_79, %c0_80, %c0_81] : memref<8x128x128xf32, #tpu.memory_space<vmem>>, vector<1x64x128xf32>
    %119 = vector.shape_cast %118 : vector<1x64x128xf32> to vector<64x128xf32>
    %120 = vector.shape_cast %119 : vector<64x128xf32> to vector<4x16x128xf32>
    %121 = vector.broadcast %117 : vector<4x1x128xf32> to vector<4x16x128xf32>
    %122 = arith.mulf %121, %120 : vector<4x16x128xf32>
    %123 = arith.addf %114, %122 : vector<4x16x128xf32>
    %124 = vector.extract_strided_slice %59 {offsets = [0, 0, 7, 0], sizes = [4, 1, 1, 128], strides = [1, 1, 1, 1]} : vector<4x2x8x128xf32> to vector<4x1x1x128xf32>
    %125 = vector.shape_cast %124 : vector<4x1x1x128xf32> to vector<4x128xf32>
    %126 = vector.shape_cast %125 : vector<4x128xf32> to vector<4x1x128xf32>
    %c7_82 = arith.constant 7 : index
    %c0_83 = arith.constant 0 : index
    %c0_84 = arith.constant 0 : index
    %127 = vector.load %arg4[%c7_82, %c0_83, %c0_84] : memref<8x128x128xf32, #tpu.memory_space<vmem>>, vector<1x64x128xf32>
    %128 = vector.shape_cast %127 : vector<1x64x128xf32> to vector<64x128xf32>
    %129 = vector.shape_cast %128 : vector<64x128xf32> to vector<4x16x128xf32>
    %130 = vector.broadcast %126 : vector<4x1x128xf32> to vector<4x16x128xf32>
    %131 = arith.mulf %130, %129 : vector<4x16x128xf32>
    %132 = arith.addf %123, %131 : vector<4x16x128xf32>
    %133 = vector.extract_strided_slice %59 {offsets = [0, 1, 0, 0], sizes = [4, 1, 1, 128], strides = [1, 1, 1, 1]} : vector<4x2x8x128xf32> to vector<4x1x1x128xf32>
    %134 = vector.shape_cast %133 : vector<4x1x1x128xf32> to vector<4x128xf32>
    %135 = vector.shape_cast %134 : vector<4x128xf32> to vector<4x1x128xf32>
    %c0_85 = arith.constant 0 : index
    %c64 = arith.constant 64 : index
    %c0_86 = arith.constant 0 : index
    %136 = vector.load %arg4[%c0_85, %c64, %c0_86] : memref<8x128x128xf32, #tpu.memory_space<vmem>>, vector<1x64x128xf32>
    %137 = vector.shape_cast %136 : vector<1x64x128xf32> to vector<64x128xf32>
    %138 = vector.shape_cast %137 : vector<64x128xf32> to vector<4x16x128xf32>
    %139 = vector.broadcast %135 : vector<4x1x128xf32> to vector<4x16x128xf32>
    %140 = arith.mulf %139, %138 : vector<4x16x128xf32>
    %141 = arith.addf %132, %140 : vector<4x16x128xf32>
    %142 = vector.extract_strided_slice %59 {offsets = [0, 1, 1, 0], sizes = [4, 1, 1, 128], strides = [1, 1, 1, 1]} : vector<4x2x8x128xf32> to vector<4x1x1x128xf32>
    %143 = vector.shape_cast %142 : vector<4x1x1x128xf32> to vector<4x128xf32>
    %144 = vector.shape_cast %143 : vector<4x128xf32> to vector<4x1x128xf32>
    %c1_87 = arith.constant 1 : index
    %c64_88 = arith.constant 64 : index
    %c0_89 = arith.constant 0 : index
    %145 = vector.load %arg4[%c1_87, %c64_88, %c0_89] : memref<8x128x128xf32, #tpu.memory_space<vmem>>, vector<1x64x128xf32>
    %146 = vector.shape_cast %145 : vector<1x64x128xf32> to vector<64x128xf32>
    %147 = vector.shape_cast %146 : vector<64x128xf32> to vector<4x16x128xf32>
    %148 = vector.broadcast %144 : vector<4x1x128xf32> to vector<4x16x128xf32>
    %149 = arith.mulf %148, %147 : vector<4x16x128xf32>
    %150 = arith.addf %141, %149 : vector<4x16x128xf32>
    %151 = vector.extract_strided_slice %59 {offsets = [0, 1, 2, 0], sizes = [4, 1, 1, 128], strides = [1, 1, 1, 1]} : vector<4x2x8x128xf32> to vector<4x1x1x128xf32>
    %152 = vector.shape_cast %151 : vector<4x1x1x128xf32> to vector<4x128xf32>
    %153 = vector.shape_cast %152 : vector<4x128xf32> to vector<4x1x128xf32>
    %c2_90 = arith.constant 2 : index
    %c64_91 = arith.constant 64 : index
    %c0_92 = arith.constant 0 : index
    %154 = vector.load %arg4[%c2_90, %c64_91, %c0_92] : memref<8x128x128xf32, #tpu.memory_space<vmem>>, vector<1x64x128xf32>
    %155 = vector.shape_cast %154 : vector<1x64x128xf32> to vector<64x128xf32>
    %156 = vector.shape_cast %155 : vector<64x128xf32> to vector<4x16x128xf32>
    %157 = vector.broadcast %153 : vector<4x1x128xf32> to vector<4x16x128xf32>
    %158 = arith.mulf %157, %156 : vector<4x16x128xf32>
    %159 = arith.addf %150, %158 : vector<4x16x128xf32>
    %160 = vector.extract_strided_slice %59 {offsets = [0, 1, 3, 0], sizes = [4, 1, 1, 128], strides = [1, 1, 1, 1]} : vector<4x2x8x128xf32> to vector<4x1x1x128xf32>
    %161 = vector.shape_cast %160 : vector<4x1x1x128xf32> to vector<4x128xf32>
    %162 = vector.shape_cast %161 : vector<4x128xf32> to vector<4x1x128xf32>
    %c3_93 = arith.constant 3 : index
    %c64_94 = arith.constant 64 : index
    %c0_95 = arith.constant 0 : index
    %163 = vector.load %arg4[%c3_93, %c64_94, %c0_95] : memref<8x128x128xf32, #tpu.memory_space<vmem>>, vector<1x64x128xf32>
    %164 = vector.shape_cast %163 : vector<1x64x128xf32> to vector<64x128xf32>
    %165 = vector.shape_cast %164 : vector<64x128xf32> to vector<4x16x128xf32>
    %166 = vector.broadcast %162 : vector<4x1x128xf32> to vector<4x16x128xf32>
    %167 = arith.mulf %166, %165 : vector<4x16x128xf32>
    %168 = arith.addf %159, %167 : vector<4x16x128xf32>
    %169 = vector.extract_strided_slice %59 {offsets = [0, 1, 4, 0], sizes = [4, 1, 1, 128], strides = [1, 1, 1, 1]} : vector<4x2x8x128xf32> to vector<4x1x1x128xf32>
    %170 = vector.shape_cast %169 : vector<4x1x1x128xf32> to vector<4x128xf32>
    %171 = vector.shape_cast %170 : vector<4x128xf32> to vector<4x1x128xf32>
    %c4_96 = arith.constant 4 : index
    %c64_97 = arith.constant 64 : index
    %c0_98 = arith.constant 0 : index
    %172 = vector.load %arg4[%c4_96, %c64_97, %c0_98] : memref<8x128x128xf32, #tpu.memory_space<vmem>>, vector<1x64x128xf32>
    %173 = vector.shape_cast %172 : vector<1x64x128xf32> to vector<64x128xf32>
    %174 = vector.shape_cast %173 : vector<64x128xf32> to vector<4x16x128xf32>
    %175 = vector.broadcast %171 : vector<4x1x128xf32> to vector<4x16x128xf32>
    %176 = arith.mulf %175, %174 : vector<4x16x128xf32>
    %177 = arith.addf %168, %176 : vector<4x16x128xf32>
    %178 = vector.extract_strided_slice %59 {offsets = [0, 1, 5, 0], sizes = [4, 1, 1, 128], strides = [1, 1, 1, 1]} : vector<4x2x8x128xf32> to vector<4x1x1x128xf32>
    %179 = vector.shape_cast %178 : vector<4x1x1x128xf32> to vector<4x128xf32>
    %180 = vector.shape_cast %179 : vector<4x128xf32> to vector<4x1x128xf32>
    %c5_99 = arith.constant 5 : index
    %c64_100 = arith.constant 64 : index
    %c0_101 = arith.constant 0 : index
    %181 = vector.load %arg4[%c5_99, %c64_100, %c0_101] : memref<8x128x128xf32, #tpu.memory_space<vmem>>, vector<1x64x128xf32>
    %182 = vector.shape_cast %181 : vector<1x64x128xf32> to vector<64x128xf32>
    %183 = vector.shape_cast %182 : vector<64x128xf32> to vector<4x16x128xf32>
    %184 = vector.broadcast %180 : vector<4x1x128xf32> to vector<4x16x128xf32>
    %185 = arith.mulf %184, %183 : vector<4x16x128xf32>
    %186 = arith.addf %177, %185 : vector<4x16x128xf32>
    %187 = vector.extract_strided_slice %59 {offsets = [0, 1, 6, 0], sizes = [4, 1, 1, 128], strides = [1, 1, 1, 1]} : vector<4x2x8x128xf32> to vector<4x1x1x128xf32>
    %188 = vector.shape_cast %187 : vector<4x1x1x128xf32> to vector<4x128xf32>
    %189 = vector.shape_cast %188 : vector<4x128xf32> to vector<4x1x128xf32>
    %c6_102 = arith.constant 6 : index
    %c64_103 = arith.constant 64 : index
    %c0_104 = arith.constant 0 : index
    %190 = vector.load %arg4[%c6_102, %c64_103, %c0_104] : memref<8x128x128xf32, #tpu.memory_space<vmem>>, vector<1x64x128xf32>
    %191 = vector.shape_cast %190 : vector<1x64x128xf32> to vector<64x128xf32>
    %192 = vector.shape_cast %191 : vector<64x128xf32> to vector<4x16x128xf32>
    %193 = vector.broadcast %189 : vector<4x1x128xf32> to vector<4x16x128xf32>
    %194 = arith.mulf %193, %192 : vector<4x16x128xf32>
    %195 = arith.addf %186, %194 : vector<4x16x128xf32>
    %196 = vector.extract_strided_slice %59 {offsets = [0, 1, 7, 0], sizes = [4, 1, 1, 128], strides = [1, 1, 1, 1]} : vector<4x2x8x128xf32> to vector<4x1x1x128xf32>
    %197 = vector.shape_cast %196 : vector<4x1x1x128xf32> to vector<4x128xf32>
    %198 = vector.shape_cast %197 : vector<4x128xf32> to vector<4x1x128xf32>
    %c7_105 = arith.constant 7 : index
    %c64_106 = arith.constant 64 : index
    %c0_107 = arith.constant 0 : index
    %199 = vector.load %arg4[%c7_105, %c64_106, %c0_107] : memref<8x128x128xf32, #tpu.memory_space<vmem>>, vector<1x64x128xf32>
    %200 = vector.shape_cast %199 : vector<1x64x128xf32> to vector<64x128xf32>
    %201 = vector.shape_cast %200 : vector<64x128xf32> to vector<4x16x128xf32>
    %202 = vector.broadcast %198 : vector<4x1x128xf32> to vector<4x16x128xf32>
    %203 = arith.mulf %202, %201 : vector<4x16x128xf32>
    %204 = arith.addf %195, %203 : vector<4x16x128xf32>
    %205 = arith.mulf %204, %204 : vector<4x16x128xf32>
    %cst_108 = arith.constant dense<0.000000e+00> : vector<4x128xf32>
    %206 = vector.multi_reduction <add>, %205, %cst_108 [1] : vector<4x16x128xf32> to vector<4x128xf32>
    %207 = vector.shape_cast %206 : vector<4x128xf32> to vector<4x1x128xf32>
    %cst_109 = arith.constant 1.000000e-07 : f32
    %208 = vector.broadcast %cst_109 : f32 to vector<4x1x128xf32>
    %209 = arith.addf %207, %208 : vector<4x1x128xf32>
    %210 = math.rsqrt %209 : vector<4x1x128xf32>
    %cst_110 = arith.constant 1.000000e+00 : f32
    %211 = vector.broadcast %cst_110 : f32 to vector<4x1x128xf32>
    %212 = arith.addf %211, %207 : vector<4x1x128xf32>
    %213 = tpu.reciprocal %212 {approx = true} : vector<4x1x128xf32> -> vector<4x1x128xf32>
    %214 = arith.mulf %207, %213 : vector<4x1x128xf32>
    %215 = arith.mulf %214, %210 : vector<4x1x128xf32>
    %216 = vector.broadcast %215 : vector<4x1x128xf32> to vector<4x16x128xf32>
    %217 = arith.mulf %216, %204 : vector<4x16x128xf32>
    %c0_111 = arith.constant 0 : index
    %c0_112 = arith.constant 0 : index
    %c0_113 = arith.constant 0 : index
    %218 = vector.load %arg4[%c0_111, %c0_112, %c0_113] : memref<8x128x128xf32, #tpu.memory_space<vmem>>, vector<1x64x128xf32>
    %219 = vector.shape_cast %218 : vector<1x64x128xf32> to vector<64x128xf32>
    %220 = vector.shape_cast %219 : vector<64x128xf32> to vector<4x16x128xf32>
    %221 = arith.mulf %220, %217 : vector<4x16x128xf32>
    %cst_114 = arith.constant dense<0.000000e+00> : vector<4x128xf32>
    %222 = vector.multi_reduction <add>, %221, %cst_114 [1] : vector<4x16x128xf32> to vector<4x128xf32>
    %c1_115 = arith.constant 1 : index
    %c0_116 = arith.constant 0 : index
    %c0_117 = arith.constant 0 : index
    %223 = vector.load %arg4[%c1_115, %c0_116, %c0_117] : memref<8x128x128xf32, #tpu.memory_space<vmem>>, vector<1x64x128xf32>
    %224 = vector.shape_cast %223 : vector<1x64x128xf32> to vector<64x128xf32>
    %225 = vector.shape_cast %224 : vector<64x128xf32> to vector<4x16x128xf32>
    %226 = arith.mulf %225, %217 : vector<4x16x128xf32>
    %cst_118 = arith.constant dense<0.000000e+00> : vector<4x128xf32>
    %227 = vector.multi_reduction <add>, %226, %cst_118 [1] : vector<4x16x128xf32> to vector<4x128xf32>
    %c2_119 = arith.constant 2 : index
    %c0_120 = arith.constant 0 : index
    %c0_121 = arith.constant 0 : index
    %228 = vector.load %arg4[%c2_119, %c0_120, %c0_121] : memref<8x128x128xf32, #tpu.memory_space<vmem>>, vector<1x64x128xf32>
    %229 = vector.shape_cast %228 : vector<1x64x128xf32> to vector<64x128xf32>
    %230 = vector.shape_cast %229 : vector<64x128xf32> to vector<4x16x128xf32>
    %231 = arith.mulf %230, %217 : vector<4x16x128xf32>
    %cst_122 = arith.constant dense<0.000000e+00> : vector<4x128xf32>
    %232 = vector.multi_reduction <add>, %231, %cst_122 [1] : vector<4x16x128xf32> to vector<4x128xf32>
    %c3_123 = arith.constant 3 : index
    %c0_124 = arith.constant 0 : index
    %c0_125 = arith.constant 0 : index
    %233 = vector.load %arg4[%c3_123, %c0_124, %c0_125] : memref<8x128x128xf32, #tpu.memory_space<vmem>>, vector<1x64x128xf32>
    %234 = vector.shape_cast %233 : vector<1x64x128xf32> to vector<64x128xf32>
    %235 = vector.shape_cast %234 : vector<64x128xf32> to vector<4x16x128xf32>
    %236 = arith.mulf %235, %217 : vector<4x16x128xf32>
    %cst_126 = arith.constant dense<0.000000e+00> : vector<4x128xf32>
    %237 = vector.multi_reduction <add>, %236, %cst_126 [1] : vector<4x16x128xf32> to vector<4x128xf32>
    %c4_127 = arith.constant 4 : index
    %c0_128 = arith.constant 0 : index
    %c0_129 = arith.constant 0 : index
    %238 = vector.load %arg4[%c4_127, %c0_128, %c0_129] : memref<8x128x128xf32, #tpu.memory_space<vmem>>, vector<1x64x128xf32>
    %239 = vector.shape_cast %238 : vector<1x64x128xf32> to vector<64x128xf32>
    %240 = vector.shape_cast %239 : vector<64x128xf32> to vector<4x16x128xf32>
    %241 = arith.mulf %240, %217 : vector<4x16x128xf32>
    %cst_130 = arith.constant dense<0.000000e+00> : vector<4x128xf32>
    %242 = vector.multi_reduction <add>, %241, %cst_130 [1] : vector<4x16x128xf32> to vector<4x128xf32>
    %c5_131 = arith.constant 5 : index
    %c0_132 = arith.constant 0 : index
    %c0_133 = arith.constant 0 : index
    %243 = vector.load %arg4[%c5_131, %c0_132, %c0_133] : memref<8x128x128xf32, #tpu.memory_space<vmem>>, vector<1x64x128xf32>
    %244 = vector.shape_cast %243 : vector<1x64x128xf32> to vector<64x128xf32>
    %245 = vector.shape_cast %244 : vector<64x128xf32> to vector<4x16x128xf32>
    %246 = arith.mulf %245, %217 : vector<4x16x128xf32>
    %cst_134 = arith.constant dense<0.000000e+00> : vector<4x128xf32>
    %247 = vector.multi_reduction <add>, %246, %cst_134 [1] : vector<4x16x128xf32> to vector<4x128xf32>
    %c6_135 = arith.constant 6 : index
    %c0_136 = arith.constant 0 : index
    %c0_137 = arith.constant 0 : index
    %248 = vector.load %arg4[%c6_135, %c0_136, %c0_137] : memref<8x128x128xf32, #tpu.memory_space<vmem>>, vector<1x64x128xf32>
    %249 = vector.shape_cast %248 : vector<1x64x128xf32> to vector<64x128xf32>
    %250 = vector.shape_cast %249 : vector<64x128xf32> to vector<4x16x128xf32>
    %251 = arith.mulf %250, %217 : vector<4x16x128xf32>
    %cst_138 = arith.constant dense<0.000000e+00> : vector<4x128xf32>
    %252 = vector.multi_reduction <add>, %251, %cst_138 [1] : vector<4x16x128xf32> to vector<4x128xf32>
    %c7_139 = arith.constant 7 : index
    %c0_140 = arith.constant 0 : index
    %c0_141 = arith.constant 0 : index
    %253 = vector.load %arg4[%c7_139, %c0_140, %c0_141] : memref<8x128x128xf32, #tpu.memory_space<vmem>>, vector<1x64x128xf32>
    %254 = vector.shape_cast %253 : vector<1x64x128xf32> to vector<64x128xf32>
    %255 = vector.shape_cast %254 : vector<64x128xf32> to vector<4x16x128xf32>
    %256 = arith.mulf %255, %217 : vector<4x16x128xf32>
    %cst_142 = arith.constant dense<0.000000e+00> : vector<4x128xf32>
    %257 = vector.multi_reduction <add>, %256, %cst_142 [1] : vector<4x16x128xf32> to vector<4x128xf32>
    %c0_143 = arith.constant 0 : index
    %c64_144 = arith.constant 64 : index
    %c0_145 = arith.constant 0 : index
    %258 = vector.load %arg4[%c0_143, %c64_144, %c0_145] : memref<8x128x128xf32, #tpu.memory_space<vmem>>, vector<1x64x128xf32>
    %259 = vector.shape_cast %258 : vector<1x64x128xf32> to vector<64x128xf32>
    %260 = vector.shape_cast %259 : vector<64x128xf32> to vector<4x16x128xf32>
    %261 = arith.mulf %260, %217 : vector<4x16x128xf32>
    %cst_146 = arith.constant dense<0.000000e+00> : vector<4x128xf32>
    %262 = vector.multi_reduction <add>, %261, %cst_146 [1] : vector<4x16x128xf32> to vector<4x128xf32>
    %c1_147 = arith.constant 1 : index
    %c64_148 = arith.constant 64 : index
    %c0_149 = arith.constant 0 : index
    %263 = vector.load %arg4[%c1_147, %c64_148, %c0_149] : memref<8x128x128xf32, #tpu.memory_space<vmem>>, vector<1x64x128xf32>
    %264 = vector.shape_cast %263 : vector<1x64x128xf32> to vector<64x128xf32>
    %265 = vector.shape_cast %264 : vector<64x128xf32> to vector<4x16x128xf32>
    %266 = arith.mulf %265, %217 : vector<4x16x128xf32>
    %cst_150 = arith.constant dense<0.000000e+00> : vector<4x128xf32>
    %267 = vector.multi_reduction <add>, %266, %cst_150 [1] : vector<4x16x128xf32> to vector<4x128xf32>
    %c2_151 = arith.constant 2 : index
    %c64_152 = arith.constant 64 : index
    %c0_153 = arith.constant 0 : index
    %268 = vector.load %arg4[%c2_151, %c64_152, %c0_153] : memref<8x128x128xf32, #tpu.memory_space<vmem>>, vector<1x64x128xf32>
    %269 = vector.shape_cast %268 : vector<1x64x128xf32> to vector<64x128xf32>
    %270 = vector.shape_cast %269 : vector<64x128xf32> to vector<4x16x128xf32>
    %271 = arith.mulf %270, %217 : vector<4x16x128xf32>
    %cst_154 = arith.constant dense<0.000000e+00> : vector<4x128xf32>
    %272 = vector.multi_reduction <add>, %271, %cst_154 [1] : vector<4x16x128xf32> to vector<4x128xf32>
    %c3_155 = arith.constant 3 : index
    %c64_156 = arith.constant 64 : index
    %c0_157 = arith.constant 0 : index
    %273 = vector.load %arg4[%c3_155, %c64_156, %c0_157] : memref<8x128x128xf32, #tpu.memory_space<vmem>>, vector<1x64x128xf32>
    %274 = vector.shape_cast %273 : vector<1x64x128xf32> to vector<64x128xf32>
    %275 = vector.shape_cast %274 : vector<64x128xf32> to vector<4x16x128xf32>
    %276 = arith.mulf %275, %217 : vector<4x16x128xf32>
    %cst_158 = arith.constant dense<0.000000e+00> : vector<4x128xf32>
    %277 = vector.multi_reduction <add>, %276, %cst_158 [1] : vector<4x16x128xf32> to vector<4x128xf32>
    %c4_159 = arith.constant 4 : index
    %c64_160 = arith.constant 64 : index
    %c0_161 = arith.constant 0 : index
    %278 = vector.load %arg4[%c4_159, %c64_160, %c0_161] : memref<8x128x128xf32, #tpu.memory_space<vmem>>, vector<1x64x128xf32>
    %279 = vector.shape_cast %278 : vector<1x64x128xf32> to vector<64x128xf32>
    %280 = vector.shape_cast %279 : vector<64x128xf32> to vector<4x16x128xf32>
    %281 = arith.mulf %280, %217 : vector<4x16x128xf32>
    %cst_162 = arith.constant dense<0.000000e+00> : vector<4x128xf32>
    %282 = vector.multi_reduction <add>, %281, %cst_162 [1] : vector<4x16x128xf32> to vector<4x128xf32>
    %c5_163 = arith.constant 5 : index
    %c64_164 = arith.constant 64 : index
    %c0_165 = arith.constant 0 : index
    %283 = vector.load %arg4[%c5_163, %c64_164, %c0_165] : memref<8x128x128xf32, #tpu.memory_space<vmem>>, vector<1x64x128xf32>
    %284 = vector.shape_cast %283 : vector<1x64x128xf32> to vector<64x128xf32>
    %285 = vector.shape_cast %284 : vector<64x128xf32> to vector<4x16x128xf32>
    %286 = arith.mulf %285, %217 : vector<4x16x128xf32>
    %cst_166 = arith.constant dense<0.000000e+00> : vector<4x128xf32>
    %287 = vector.multi_reduction <add>, %286, %cst_166 [1] : vector<4x16x128xf32> to vector<4x128xf32>
    %c6_167 = arith.constant 6 : index
    %c64_168 = arith.constant 64 : index
    %c0_169 = arith.constant 0 : index
    %288 = vector.load %arg4[%c6_167, %c64_168, %c0_169] : memref<8x128x128xf32, #tpu.memory_space<vmem>>, vector<1x64x128xf32>
    %289 = vector.shape_cast %288 : vector<1x64x128xf32> to vector<64x128xf32>
    %290 = vector.shape_cast %289 : vector<64x128xf32> to vector<4x16x128xf32>
    %291 = arith.mulf %290, %217 : vector<4x16x128xf32>
    %cst_170 = arith.constant dense<0.000000e+00> : vector<4x128xf32>
    %292 = vector.multi_reduction <add>, %291, %cst_170 [1] : vector<4x16x128xf32> to vector<4x128xf32>
    %c7_171 = arith.constant 7 : index
    %c64_172 = arith.constant 64 : index
    %c0_173 = arith.constant 0 : index
    %293 = vector.load %arg4[%c7_171, %c64_172, %c0_173] : memref<8x128x128xf32, #tpu.memory_space<vmem>>, vector<1x64x128xf32>
    %294 = vector.shape_cast %293 : vector<1x64x128xf32> to vector<64x128xf32>
    %295 = vector.shape_cast %294 : vector<64x128xf32> to vector<4x16x128xf32>
    %296 = arith.mulf %295, %217 : vector<4x16x128xf32>
    %cst_174 = arith.constant dense<0.000000e+00> : vector<4x128xf32>
    %297 = vector.multi_reduction <add>, %296, %cst_174 [1] : vector<4x16x128xf32> to vector<4x128xf32>
    %298 = vector.shape_cast %222 : vector<4x128xf32> to vector<4x1x128xf32>
    %299 = vector.shape_cast %227 : vector<4x128xf32> to vector<4x1x128xf32>
    %300 = vector.shape_cast %232 : vector<4x128xf32> to vector<4x1x128xf32>
    %301 = vector.shape_cast %237 : vector<4x128xf32> to vector<4x1x128xf32>
    %302 = vector.shape_cast %242 : vector<4x128xf32> to vector<4x1x128xf32>
    %303 = vector.shape_cast %247 : vector<4x128xf32> to vector<4x1x128xf32>
    %304 = vector.shape_cast %252 : vector<4x128xf32> to vector<4x1x128xf32>
    %305 = vector.shape_cast %257 : vector<4x128xf32> to vector<4x1x128xf32>
    %306 = vector.shape_cast %262 : vector<4x128xf32> to vector<4x1x128xf32>
    %307 = vector.shape_cast %267 : vector<4x128xf32> to vector<4x1x128xf32>
    %308 = vector.shape_cast %272 : vector<4x128xf32> to vector<4x1x128xf32>
    %309 = vector.shape_cast %277 : vector<4x128xf32> to vector<4x1x128xf32>
    %310 = vector.shape_cast %282 : vector<4x128xf32> to vector<4x1x128xf32>
    %311 = vector.shape_cast %287 : vector<4x128xf32> to vector<4x1x128xf32>
    %312 = vector.shape_cast %292 : vector<4x128xf32> to vector<4x1x128xf32>
    %313 = vector.shape_cast %297 : vector<4x128xf32> to vector<4x1x128xf32>
    %314 = tpu.concatenate %298, %299, %300, %301, %302, %303, %304, %305, %306, %307, %308, %309, %310, %311, %312, %313 in 1 : vector<4x1x128xf32>, vector<4x1x128xf32>, vector<4x1x128xf32>, vector<4x1x128xf32>, vector<4x1x128xf32>, vector<4x1x128xf32>, vector<4x1x128xf32>, vector<4x1x128xf32>, vector<4x1x128xf32>, vector<4x1x128xf32>, vector<4x1x128xf32>, vector<4x1x128xf32>, vector<4x1x128xf32>, vector<4x1x128xf32>, vector<4x1x128xf32>, vector<4x1x128xf32> -> vector<4x16x128xf32>
    %315 = vector.shape_cast %314 : vector<4x16x128xf32> to vector<4x2x8x128xf32>
    %316 = arith.addf %49, %315 : vector<4x2x8x128xf32>
    %cst_175 = arith.constant dense<0xFF800000> : vector<2x8x128xf32>
    %317 = vector.multi_reduction <maximumf>, %316, %cst_175 [0] : vector<4x2x8x128xf32> to vector<2x8x128xf32>
    %318 = vector.shape_cast %317 : vector<2x8x128xf32> to vector<1x2x8x128xf32>
    %319 = vector.broadcast %318 : vector<1x2x8x128xf32> to vector<4x2x8x128xf32>
    %320 = arith.subf %316, %319 : vector<4x2x8x128xf32>
    %321 = math.exp %320 : vector<4x2x8x128xf32>
    %cst_176 = arith.constant dense<0.000000e+00> : vector<2x8x128xf32>
    %322 = vector.multi_reduction <add>, %321, %cst_176 [0] : vector<4x2x8x128xf32> to vector<2x8x128xf32>
    %323 = vector.shape_cast %322 : vector<2x8x128xf32> to vector<1x2x8x128xf32>
    %324 = tpu.reciprocal %323 {approx = true} : vector<1x2x8x128xf32> -> vector<1x2x8x128xf32>
    %325 = vector.broadcast %324 : vector<1x2x8x128xf32> to vector<4x2x8x128xf32>
    %326 = arith.mulf %321, %325 : vector<4x2x8x128xf32>
    %cst_177 = arith.constant 0.000000e+00 : f32
    %327 = vector.broadcast %cst_177 : f32 to vector<4x16x128xf32>
    %328 = vector.extract_strided_slice %326 {offsets = [0, 0, 0, 0], sizes = [4, 1, 1, 128], strides = [1, 1, 1, 1]} : vector<4x2x8x128xf32> to vector<4x1x1x128xf32>
    %329 = vector.shape_cast %328 : vector<4x1x1x128xf32> to vector<4x128xf32>
    %330 = vector.shape_cast %329 : vector<4x128xf32> to vector<4x1x128xf32>
    %c0_178 = arith.constant 0 : index
    %c0_179 = arith.constant 0 : index
    %c0_180 = arith.constant 0 : index
    %331 = vector.load %arg4[%c0_178, %c0_179, %c0_180] : memref<8x128x128xf32, #tpu.memory_space<vmem>>, vector<1x64x128xf32>
    %332 = vector.shape_cast %331 : vector<1x64x128xf32> to vector<64x128xf32>
    %333 = vector.shape_cast %332 : vector<64x128xf32> to vector<4x16x128xf32>
    %334 = vector.broadcast %330 : vector<4x1x128xf32> to vector<4x16x128xf32>
    %335 = arith.mulf %334, %333 : vector<4x16x128xf32>
    %336 = arith.addf %327, %335 : vector<4x16x128xf32>
    %337 = vector.extract_strided_slice %326 {offsets = [0, 0, 1, 0], sizes = [4, 1, 1, 128], strides = [1, 1, 1, 1]} : vector<4x2x8x128xf32> to vector<4x1x1x128xf32>
    %338 = vector.shape_cast %337 : vector<4x1x1x128xf32> to vector<4x128xf32>
    %339 = vector.shape_cast %338 : vector<4x128xf32> to vector<4x1x128xf32>
    %c1_181 = arith.constant 1 : index
    %c0_182 = arith.constant 0 : index
    %c0_183 = arith.constant 0 : index
    %340 = vector.load %arg4[%c1_181, %c0_182, %c0_183] : memref<8x128x128xf32, #tpu.memory_space<vmem>>, vector<1x64x128xf32>
    %341 = vector.shape_cast %340 : vector<1x64x128xf32> to vector<64x128xf32>
    %342 = vector.shape_cast %341 : vector<64x128xf32> to vector<4x16x128xf32>
    %343 = vector.broadcast %339 : vector<4x1x128xf32> to vector<4x16x128xf32>
    %344 = arith.mulf %343, %342 : vector<4x16x128xf32>
    %345 = arith.addf %336, %344 : vector<4x16x128xf32>
    %346 = vector.extract_strided_slice %326 {offsets = [0, 0, 2, 0], sizes = [4, 1, 1, 128], strides = [1, 1, 1, 1]} : vector<4x2x8x128xf32> to vector<4x1x1x128xf32>
    %347 = vector.shape_cast %346 : vector<4x1x1x128xf32> to vector<4x128xf32>
    %348 = vector.shape_cast %347 : vector<4x128xf32> to vector<4x1x128xf32>
    %c2_184 = arith.constant 2 : index
    %c0_185 = arith.constant 0 : index
    %c0_186 = arith.constant 0 : index
    %349 = vector.load %arg4[%c2_184, %c0_185, %c0_186] : memref<8x128x128xf32, #tpu.memory_space<vmem>>, vector<1x64x128xf32>
    %350 = vector.shape_cast %349 : vector<1x64x128xf32> to vector<64x128xf32>
    %351 = vector.shape_cast %350 : vector<64x128xf32> to vector<4x16x128xf32>
    %352 = vector.broadcast %348 : vector<4x1x128xf32> to vector<4x16x128xf32>
    %353 = arith.mulf %352, %351 : vector<4x16x128xf32>
    %354 = arith.addf %345, %353 : vector<4x16x128xf32>
    %355 = vector.extract_strided_slice %326 {offsets = [0, 0, 3, 0], sizes = [4, 1, 1, 128], strides = [1, 1, 1, 1]} : vector<4x2x8x128xf32> to vector<4x1x1x128xf32>
    %356 = vector.shape_cast %355 : vector<4x1x1x128xf32> to vector<4x128xf32>
    %357 = vector.shape_cast %356 : vector<4x128xf32> to vector<4x1x128xf32>
    %c3_187 = arith.constant 3 : index
    %c0_188 = arith.constant 0 : index
    %c0_189 = arith.constant 0 : index
    %358 = vector.load %arg4[%c3_187, %c0_188, %c0_189] : memref<8x128x128xf32, #tpu.memory_space<vmem>>, vector<1x64x128xf32>
    %359 = vector.shape_cast %358 : vector<1x64x128xf32> to vector<64x128xf32>
    %360 = vector.shape_cast %359 : vector<64x128xf32> to vector<4x16x128xf32>
    %361 = vector.broadcast %357 : vector<4x1x128xf32> to vector<4x16x128xf32>
    %362 = arith.mulf %361, %360 : vector<4x16x128xf32>
    %363 = arith.addf %354, %362 : vector<4x16x128xf32>
    %364 = vector.extract_strided_slice %326 {offsets = [0, 0, 4, 0], sizes = [4, 1, 1, 128], strides = [1, 1, 1, 1]} : vector<4x2x8x128xf32> to vector<4x1x1x128xf32>
    %365 = vector.shape_cast %364 : vector<4x1x1x128xf32> to vector<4x128xf32>
    %366 = vector.shape_cast %365 : vector<4x128xf32> to vector<4x1x128xf32>
    %c4_190 = arith.constant 4 : index
    %c0_191 = arith.constant 0 : index
    %c0_192 = arith.constant 0 : index
    %367 = vector.load %arg4[%c4_190, %c0_191, %c0_192] : memref<8x128x128xf32, #tpu.memory_space<vmem>>, vector<1x64x128xf32>
    %368 = vector.shape_cast %367 : vector<1x64x128xf32> to vector<64x128xf32>
    %369 = vector.shape_cast %368 : vector<64x128xf32> to vector<4x16x128xf32>
    %370 = vector.broadcast %366 : vector<4x1x128xf32> to vector<4x16x128xf32>
    %371 = arith.mulf %370, %369 : vector<4x16x128xf32>
    %372 = arith.addf %363, %371 : vector<4x16x128xf32>
    %373 = vector.extract_strided_slice %326 {offsets = [0, 0, 5, 0], sizes = [4, 1, 1, 128], strides = [1, 1, 1, 1]} : vector<4x2x8x128xf32> to vector<4x1x1x128xf32>
    %374 = vector.shape_cast %373 : vector<4x1x1x128xf32> to vector<4x128xf32>
    %375 = vector.shape_cast %374 : vector<4x128xf32> to vector<4x1x128xf32>
    %c5_193 = arith.constant 5 : index
    %c0_194 = arith.constant 0 : index
    %c0_195 = arith.constant 0 : index
    %376 = vector.load %arg4[%c5_193, %c0_194, %c0_195] : memref<8x128x128xf32, #tpu.memory_space<vmem>>, vector<1x64x128xf32>
    %377 = vector.shape_cast %376 : vector<1x64x128xf32> to vector<64x128xf32>
    %378 = vector.shape_cast %377 : vector<64x128xf32> to vector<4x16x128xf32>
    %379 = vector.broadcast %375 : vector<4x1x128xf32> to vector<4x16x128xf32>
    %380 = arith.mulf %379, %378 : vector<4x16x128xf32>
    %381 = arith.addf %372, %380 : vector<4x16x128xf32>
    %382 = vector.extract_strided_slice %326 {offsets = [0, 0, 6, 0], sizes = [4, 1, 1, 128], strides = [1, 1, 1, 1]} : vector<4x2x8x128xf32> to vector<4x1x1x128xf32>
    %383 = vector.shape_cast %382 : vector<4x1x1x128xf32> to vector<4x128xf32>
    %384 = vector.shape_cast %383 : vector<4x128xf32> to vector<4x1x128xf32>
    %c6_196 = arith.constant 6 : index
    %c0_197 = arith.constant 0 : index
    %c0_198 = arith.constant 0 : index
    %385 = vector.load %arg4[%c6_196, %c0_197, %c0_198] : memref<8x128x128xf32, #tpu.memory_space<vmem>>, vector<1x64x128xf32>
    %386 = vector.shape_cast %385 : vector<1x64x128xf32> to vector<64x128xf32>
    %387 = vector.shape_cast %386 : vector<64x128xf32> to vector<4x16x128xf32>
    %388 = vector.broadcast %384 : vector<4x1x128xf32> to vector<4x16x128xf32>
    %389 = arith.mulf %388, %387 : vector<4x16x128xf32>
    %390 = arith.addf %381, %389 : vector<4x16x128xf32>
    %391 = vector.extract_strided_slice %326 {offsets = [0, 0, 7, 0], sizes = [4, 1, 1, 128], strides = [1, 1, 1, 1]} : vector<4x2x8x128xf32> to vector<4x1x1x128xf32>
    %392 = vector.shape_cast %391 : vector<4x1x1x128xf32> to vector<4x128xf32>
    %393 = vector.shape_cast %392 : vector<4x128xf32> to vector<4x1x128xf32>
    %c7_199 = arith.constant 7 : index
    %c0_200 = arith.constant 0 : index
    %c0_201 = arith.constant 0 : index
    %394 = vector.load %arg4[%c7_199, %c0_200, %c0_201] : memref<8x128x128xf32, #tpu.memory_space<vmem>>, vector<1x64x128xf32>
    %395 = vector.shape_cast %394 : vector<1x64x128xf32> to vector<64x128xf32>
    %396 = vector.shape_cast %395 : vector<64x128xf32> to vector<4x16x128xf32>
    %397 = vector.broadcast %393 : vector<4x1x128xf32> to vector<4x16x128xf32>
    %398 = arith.mulf %397, %396 : vector<4x16x128xf32>
    %399 = arith.addf %390, %398 : vector<4x16x128xf32>
    %400 = vector.extract_strided_slice %326 {offsets = [0, 1, 0, 0], sizes = [4, 1, 1, 128], strides = [1, 1, 1, 1]} : vector<4x2x8x128xf32> to vector<4x1x1x128xf32>
    %401 = vector.shape_cast %400 : vector<4x1x1x128xf32> to vector<4x128xf32>
    %402 = vector.shape_cast %401 : vector<4x128xf32> to vector<4x1x128xf32>
    %c0_202 = arith.constant 0 : index
    %c64_203 = arith.constant 64 : index
    %c0_204 = arith.constant 0 : index
    %403 = vector.load %arg4[%c0_202, %c64_203, %c0_204] : memref<8x128x128xf32, #tpu.memory_space<vmem>>, vector<1x64x128xf32>
    %404 = vector.shape_cast %403 : vector<1x64x128xf32> to vector<64x128xf32>
    %405 = vector.shape_cast %404 : vector<64x128xf32> to vector<4x16x128xf32>
    %406 = vector.broadcast %402 : vector<4x1x128xf32> to vector<4x16x128xf32>
    %407 = arith.mulf %406, %405 : vector<4x16x128xf32>
    %408 = arith.addf %399, %407 : vector<4x16x128xf32>
    %409 = vector.extract_strided_slice %326 {offsets = [0, 1, 1, 0], sizes = [4, 1, 1, 128], strides = [1, 1, 1, 1]} : vector<4x2x8x128xf32> to vector<4x1x1x128xf32>
    %410 = vector.shape_cast %409 : vector<4x1x1x128xf32> to vector<4x128xf32>
    %411 = vector.shape_cast %410 : vector<4x128xf32> to vector<4x1x128xf32>
    %c1_205 = arith.constant 1 : index
    %c64_206 = arith.constant 64 : index
    %c0_207 = arith.constant 0 : index
    %412 = vector.load %arg4[%c1_205, %c64_206, %c0_207] : memref<8x128x128xf32, #tpu.memory_space<vmem>>, vector<1x64x128xf32>
    %413 = vector.shape_cast %412 : vector<1x64x128xf32> to vector<64x128xf32>
    %414 = vector.shape_cast %413 : vector<64x128xf32> to vector<4x16x128xf32>
    %415 = vector.broadcast %411 : vector<4x1x128xf32> to vector<4x16x128xf32>
    %416 = arith.mulf %415, %414 : vector<4x16x128xf32>
    %417 = arith.addf %408, %416 : vector<4x16x128xf32>
    %418 = vector.extract_strided_slice %326 {offsets = [0, 1, 2, 0], sizes = [4, 1, 1, 128], strides = [1, 1, 1, 1]} : vector<4x2x8x128xf32> to vector<4x1x1x128xf32>
    %419 = vector.shape_cast %418 : vector<4x1x1x128xf32> to vector<4x128xf32>
    %420 = vector.shape_cast %419 : vector<4x128xf32> to vector<4x1x128xf32>
    %c2_208 = arith.constant 2 : index
    %c64_209 = arith.constant 64 : index
    %c0_210 = arith.constant 0 : index
    %421 = vector.load %arg4[%c2_208, %c64_209, %c0_210] : memref<8x128x128xf32, #tpu.memory_space<vmem>>, vector<1x64x128xf32>
    %422 = vector.shape_cast %421 : vector<1x64x128xf32> to vector<64x128xf32>
    %423 = vector.shape_cast %422 : vector<64x128xf32> to vector<4x16x128xf32>
    %424 = vector.broadcast %420 : vector<4x1x128xf32> to vector<4x16x128xf32>
    %425 = arith.mulf %424, %423 : vector<4x16x128xf32>
    %426 = arith.addf %417, %425 : vector<4x16x128xf32>
    %427 = vector.extract_strided_slice %326 {offsets = [0, 1, 3, 0], sizes = [4, 1, 1, 128], strides = [1, 1, 1, 1]} : vector<4x2x8x128xf32> to vector<4x1x1x128xf32>
    %428 = vector.shape_cast %427 : vector<4x1x1x128xf32> to vector<4x128xf32>
    %429 = vector.shape_cast %428 : vector<4x128xf32> to vector<4x1x128xf32>
    %c3_211 = arith.constant 3 : index
    %c64_212 = arith.constant 64 : index
    %c0_213 = arith.constant 0 : index
    %430 = vector.load %arg4[%c3_211, %c64_212, %c0_213] : memref<8x128x128xf32, #tpu.memory_space<vmem>>, vector<1x64x128xf32>
    %431 = vector.shape_cast %430 : vector<1x64x128xf32> to vector<64x128xf32>
    %432 = vector.shape_cast %431 : vector<64x128xf32> to vector<4x16x128xf32>
    %433 = vector.broadcast %429 : vector<4x1x128xf32> to vector<4x16x128xf32>
    %434 = arith.mulf %433, %432 : vector<4x16x128xf32>
    %435 = arith.addf %426, %434 : vector<4x16x128xf32>
    %436 = vector.extract_strided_slice %326 {offsets = [0, 1, 4, 0], sizes = [4, 1, 1, 128], strides = [1, 1, 1, 1]} : vector<4x2x8x128xf32> to vector<4x1x1x128xf32>
    %437 = vector.shape_cast %436 : vector<4x1x1x128xf32> to vector<4x128xf32>
    %438 = vector.shape_cast %437 : vector<4x128xf32> to vector<4x1x128xf32>
    %c4_214 = arith.constant 4 : index
    %c64_215 = arith.constant 64 : index
    %c0_216 = arith.constant 0 : index
    %439 = vector.load %arg4[%c4_214, %c64_215, %c0_216] : memref<8x128x128xf32, #tpu.memory_space<vmem>>, vector<1x64x128xf32>
    %440 = vector.shape_cast %439 : vector<1x64x128xf32> to vector<64x128xf32>
    %441 = vector.shape_cast %440 : vector<64x128xf32> to vector<4x16x128xf32>
    %442 = vector.broadcast %438 : vector<4x1x128xf32> to vector<4x16x128xf32>
    %443 = arith.mulf %442, %441 : vector<4x16x128xf32>
    %444 = arith.addf %435, %443 : vector<4x16x128xf32>
    %445 = vector.extract_strided_slice %326 {offsets = [0, 1, 5, 0], sizes = [4, 1, 1, 128], strides = [1, 1, 1, 1]} : vector<4x2x8x128xf32> to vector<4x1x1x128xf32>
    %446 = vector.shape_cast %445 : vector<4x1x1x128xf32> to vector<4x128xf32>
    %447 = vector.shape_cast %446 : vector<4x128xf32> to vector<4x1x128xf32>
    %c5_217 = arith.constant 5 : index
    %c64_218 = arith.constant 64 : index
    %c0_219 = arith.constant 0 : index
    %448 = vector.load %arg4[%c5_217, %c64_218, %c0_219] : memref<8x128x128xf32, #tpu.memory_space<vmem>>, vector<1x64x128xf32>
    %449 = vector.shape_cast %448 : vector<1x64x128xf32> to vector<64x128xf32>
    %450 = vector.shape_cast %449 : vector<64x128xf32> to vector<4x16x128xf32>
    %451 = vector.broadcast %447 : vector<4x1x128xf32> to vector<4x16x128xf32>
    %452 = arith.mulf %451, %450 : vector<4x16x128xf32>
    %453 = arith.addf %444, %452 : vector<4x16x128xf32>
    %454 = vector.extract_strided_slice %326 {offsets = [0, 1, 6, 0], sizes = [4, 1, 1, 128], strides = [1, 1, 1, 1]} : vector<4x2x8x128xf32> to vector<4x1x1x128xf32>
    %455 = vector.shape_cast %454 : vector<4x1x1x128xf32> to vector<4x128xf32>
    %456 = vector.shape_cast %455 : vector<4x128xf32> to vector<4x1x128xf32>
    %c6_220 = arith.constant 6 : index
    %c64_221 = arith.constant 64 : index
    %c0_222 = arith.constant 0 : index
    %457 = vector.load %arg4[%c6_220, %c64_221, %c0_222] : memref<8x128x128xf32, #tpu.memory_space<vmem>>, vector<1x64x128xf32>
    %458 = vector.shape_cast %457 : vector<1x64x128xf32> to vector<64x128xf32>
    %459 = vector.shape_cast %458 : vector<64x128xf32> to vector<4x16x128xf32>
    %460 = vector.broadcast %456 : vector<4x1x128xf32> to vector<4x16x128xf32>
    %461 = arith.mulf %460, %459 : vector<4x16x128xf32>
    %462 = arith.addf %453, %461 : vector<4x16x128xf32>
    %463 = vector.extract_strided_slice %326 {offsets = [0, 1, 7, 0], sizes = [4, 1, 1, 128], strides = [1, 1, 1, 1]} : vector<4x2x8x128xf32> to vector<4x1x1x128xf32>
    %464 = vector.shape_cast %463 : vector<4x1x1x128xf32> to vector<4x128xf32>
    %465 = vector.shape_cast %464 : vector<4x128xf32> to vector<4x1x128xf32>
    %c7_223 = arith.constant 7 : index
    %c64_224 = arith.constant 64 : index
    %c0_225 = arith.constant 0 : index
    %466 = vector.load %arg4[%c7_223, %c64_224, %c0_225] : memref<8x128x128xf32, #tpu.memory_space<vmem>>, vector<1x64x128xf32>
    %467 = vector.shape_cast %466 : vector<1x64x128xf32> to vector<64x128xf32>
    %468 = vector.shape_cast %467 : vector<64x128xf32> to vector<4x16x128xf32>
    %469 = vector.broadcast %465 : vector<4x1x128xf32> to vector<4x16x128xf32>
    %470 = arith.mulf %469, %468 : vector<4x16x128xf32>
    %471 = arith.addf %462, %470 : vector<4x16x128xf32>
    %472 = arith.mulf %471, %471 : vector<4x16x128xf32>
    %cst_226 = arith.constant dense<0.000000e+00> : vector<4x128xf32>
    %473 = vector.multi_reduction <add>, %472, %cst_226 [1] : vector<4x16x128xf32> to vector<4x128xf32>
    %474 = vector.shape_cast %473 : vector<4x128xf32> to vector<4x1x128xf32>
    %cst_227 = arith.constant 1.000000e-07 : f32
    %475 = vector.broadcast %cst_227 : f32 to vector<4x1x128xf32>
    %476 = arith.addf %474, %475 : vector<4x1x128xf32>
    %477 = math.rsqrt %476 : vector<4x1x128xf32>
    %cst_228 = arith.constant 1.000000e+00 : f32
    %478 = vector.broadcast %cst_228 : f32 to vector<4x1x128xf32>
    %479 = arith.addf %478, %474 : vector<4x1x128xf32>
    %480 = tpu.reciprocal %479 {approx = true} : vector<4x1x128xf32> -> vector<4x1x128xf32>
    %481 = arith.mulf %474, %480 : vector<4x1x128xf32>
    %482 = arith.mulf %481, %477 : vector<4x1x128xf32>
    %483 = vector.broadcast %482 : vector<4x1x128xf32> to vector<4x16x128xf32>
    %484 = arith.mulf %483, %471 : vector<4x16x128xf32>
    %c0_229 = arith.constant 0 : index
    %c0_230 = arith.constant 0 : index
    %c0_231 = arith.constant 0 : index
    %485 = vector.load %arg4[%c0_229, %c0_230, %c0_231] : memref<8x128x128xf32, #tpu.memory_space<vmem>>, vector<1x64x128xf32>
    %486 = vector.shape_cast %485 : vector<1x64x128xf32> to vector<64x128xf32>
    %487 = vector.shape_cast %486 : vector<64x128xf32> to vector<4x16x128xf32>
    %488 = arith.mulf %487, %484 : vector<4x16x128xf32>
    %cst_232 = arith.constant dense<0.000000e+00> : vector<4x128xf32>
    %489 = vector.multi_reduction <add>, %488, %cst_232 [1] : vector<4x16x128xf32> to vector<4x128xf32>
    %c1_233 = arith.constant 1 : index
    %c0_234 = arith.constant 0 : index
    %c0_235 = arith.constant 0 : index
    %490 = vector.load %arg4[%c1_233, %c0_234, %c0_235] : memref<8x128x128xf32, #tpu.memory_space<vmem>>, vector<1x64x128xf32>
    %491 = vector.shape_cast %490 : vector<1x64x128xf32> to vector<64x128xf32>
    %492 = vector.shape_cast %491 : vector<64x128xf32> to vector<4x16x128xf32>
    %493 = arith.mulf %492, %484 : vector<4x16x128xf32>
    %cst_236 = arith.constant dense<0.000000e+00> : vector<4x128xf32>
    %494 = vector.multi_reduction <add>, %493, %cst_236 [1] : vector<4x16x128xf32> to vector<4x128xf32>
    %c2_237 = arith.constant 2 : index
    %c0_238 = arith.constant 0 : index
    %c0_239 = arith.constant 0 : index
    %495 = vector.load %arg4[%c2_237, %c0_238, %c0_239] : memref<8x128x128xf32, #tpu.memory_space<vmem>>, vector<1x64x128xf32>
    %496 = vector.shape_cast %495 : vector<1x64x128xf32> to vector<64x128xf32>
    %497 = vector.shape_cast %496 : vector<64x128xf32> to vector<4x16x128xf32>
    %498 = arith.mulf %497, %484 : vector<4x16x128xf32>
    %cst_240 = arith.constant dense<0.000000e+00> : vector<4x128xf32>
    %499 = vector.multi_reduction <add>, %498, %cst_240 [1] : vector<4x16x128xf32> to vector<4x128xf32>
    %c3_241 = arith.constant 3 : index
    %c0_242 = arith.constant 0 : index
    %c0_243 = arith.constant 0 : index
    %500 = vector.load %arg4[%c3_241, %c0_242, %c0_243] : memref<8x128x128xf32, #tpu.memory_space<vmem>>, vector<1x64x128xf32>
    %501 = vector.shape_cast %500 : vector<1x64x128xf32> to vector<64x128xf32>
    %502 = vector.shape_cast %501 : vector<64x128xf32> to vector<4x16x128xf32>
    %503 = arith.mulf %502, %484 : vector<4x16x128xf32>
    %cst_244 = arith.constant dense<0.000000e+00> : vector<4x128xf32>
    %504 = vector.multi_reduction <add>, %503, %cst_244 [1] : vector<4x16x128xf32> to vector<4x128xf32>
    %c4_245 = arith.constant 4 : index
    %c0_246 = arith.constant 0 : index
    %c0_247 = arith.constant 0 : index
    %505 = vector.load %arg4[%c4_245, %c0_246, %c0_247] : memref<8x128x128xf32, #tpu.memory_space<vmem>>, vector<1x64x128xf32>
    %506 = vector.shape_cast %505 : vector<1x64x128xf32> to vector<64x128xf32>
    %507 = vector.shape_cast %506 : vector<64x128xf32> to vector<4x16x128xf32>
    %508 = arith.mulf %507, %484 : vector<4x16x128xf32>
    %cst_248 = arith.constant dense<0.000000e+00> : vector<4x128xf32>
    %509 = vector.multi_reduction <add>, %508, %cst_248 [1] : vector<4x16x128xf32> to vector<4x128xf32>
    %c5_249 = arith.constant 5 : index
    %c0_250 = arith.constant 0 : index
    %c0_251 = arith.constant 0 : index
    %510 = vector.load %arg4[%c5_249, %c0_250, %c0_251] : memref<8x128x128xf32, #tpu.memory_space<vmem>>, vector<1x64x128xf32>
    %511 = vector.shape_cast %510 : vector<1x64x128xf32> to vector<64x128xf32>
    %512 = vector.shape_cast %511 : vector<64x128xf32> to vector<4x16x128xf32>
    %513 = arith.mulf %512, %484 : vector<4x16x128xf32>
    %cst_252 = arith.constant dense<0.000000e+00> : vector<4x128xf32>
    %514 = vector.multi_reduction <add>, %513, %cst_252 [1] : vector<4x16x128xf32> to vector<4x128xf32>
    %c6_253 = arith.constant 6 : index
    %c0_254 = arith.constant 0 : index
    %c0_255 = arith.constant 0 : index
    %515 = vector.load %arg4[%c6_253, %c0_254, %c0_255] : memref<8x128x128xf32, #tpu.memory_space<vmem>>, vector<1x64x128xf32>
    %516 = vector.shape_cast %515 : vector<1x64x128xf32> to vector<64x128xf32>
    %517 = vector.shape_cast %516 : vector<64x128xf32> to vector<4x16x128xf32>
    %518 = arith.mulf %517, %484 : vector<4x16x128xf32>
    %cst_256 = arith.constant dense<0.000000e+00> : vector<4x128xf32>
    %519 = vector.multi_reduction <add>, %518, %cst_256 [1] : vector<4x16x128xf32> to vector<4x128xf32>
    %c7_257 = arith.constant 7 : index
    %c0_258 = arith.constant 0 : index
    %c0_259 = arith.constant 0 : index
    %520 = vector.load %arg4[%c7_257, %c0_258, %c0_259] : memref<8x128x128xf32, #tpu.memory_space<vmem>>, vector<1x64x128xf32>
    %521 = vector.shape_cast %520 : vector<1x64x128xf32> to vector<64x128xf32>
    %522 = vector.shape_cast %521 : vector<64x128xf32> to vector<4x16x128xf32>
    %523 = arith.mulf %522, %484 : vector<4x16x128xf32>
    %cst_260 = arith.constant dense<0.000000e+00> : vector<4x128xf32>
    %524 = vector.multi_reduction <add>, %523, %cst_260 [1] : vector<4x16x128xf32> to vector<4x128xf32>
    %c0_261 = arith.constant 0 : index
    %c64_262 = arith.constant 64 : index
    %c0_263 = arith.constant 0 : index
    %525 = vector.load %arg4[%c0_261, %c64_262, %c0_263] : memref<8x128x128xf32, #tpu.memory_space<vmem>>, vector<1x64x128xf32>
    %526 = vector.shape_cast %525 : vector<1x64x128xf32> to vector<64x128xf32>
    %527 = vector.shape_cast %526 : vector<64x128xf32> to vector<4x16x128xf32>
    %528 = arith.mulf %527, %484 : vector<4x16x128xf32>
    %cst_264 = arith.constant dense<0.000000e+00> : vector<4x128xf32>
    %529 = vector.multi_reduction <add>, %528, %cst_264 [1] : vector<4x16x128xf32> to vector<4x128xf32>
    %c1_265 = arith.constant 1 : index
    %c64_266 = arith.constant 64 : index
    %c0_267 = arith.constant 0 : index
    %530 = vector.load %arg4[%c1_265, %c64_266, %c0_267] : memref<8x128x128xf32, #tpu.memory_space<vmem>>, vector<1x64x128xf32>
    %531 = vector.shape_cast %530 : vector<1x64x128xf32> to vector<64x128xf32>
    %532 = vector.shape_cast %531 : vector<64x128xf32> to vector<4x16x128xf32>
    %533 = arith.mulf %532, %484 : vector<4x16x128xf32>
    %cst_268 = arith.constant dense<0.000000e+00> : vector<4x128xf32>
    %534 = vector.multi_reduction <add>, %533, %cst_268 [1] : vector<4x16x128xf32> to vector<4x128xf32>
    %c2_269 = arith.constant 2 : index
    %c64_270 = arith.constant 64 : index
    %c0_271 = arith.constant 0 : index
    %535 = vector.load %arg4[%c2_269, %c64_270, %c0_271] : memref<8x128x128xf32, #tpu.memory_space<vmem>>, vector<1x64x128xf32>
    %536 = vector.shape_cast %535 : vector<1x64x128xf32> to vector<64x128xf32>
    %537 = vector.shape_cast %536 : vector<64x128xf32> to vector<4x16x128xf32>
    %538 = arith.mulf %537, %484 : vector<4x16x128xf32>
    %cst_272 = arith.constant dense<0.000000e+00> : vector<4x128xf32>
    %539 = vector.multi_reduction <add>, %538, %cst_272 [1] : vector<4x16x128xf32> to vector<4x128xf32>
    %c3_273 = arith.constant 3 : index
    %c64_274 = arith.constant 64 : index
    %c0_275 = arith.constant 0 : index
    %540 = vector.load %arg4[%c3_273, %c64_274, %c0_275] : memref<8x128x128xf32, #tpu.memory_space<vmem>>, vector<1x64x128xf32>
    %541 = vector.shape_cast %540 : vector<1x64x128xf32> to vector<64x128xf32>
    %542 = vector.shape_cast %541 : vector<64x128xf32> to vector<4x16x128xf32>
    %543 = arith.mulf %542, %484 : vector<4x16x128xf32>
    %cst_276 = arith.constant dense<0.000000e+00> : vector<4x128xf32>
    %544 = vector.multi_reduction <add>, %543, %cst_276 [1] : vector<4x16x128xf32> to vector<4x128xf32>
    %c4_277 = arith.constant 4 : index
    %c64_278 = arith.constant 64 : index
    %c0_279 = arith.constant 0 : index
    %545 = vector.load %arg4[%c4_277, %c64_278, %c0_279] : memref<8x128x128xf32, #tpu.memory_space<vmem>>, vector<1x64x128xf32>
    %546 = vector.shape_cast %545 : vector<1x64x128xf32> to vector<64x128xf32>
    %547 = vector.shape_cast %546 : vector<64x128xf32> to vector<4x16x128xf32>
    %548 = arith.mulf %547, %484 : vector<4x16x128xf32>
    %cst_280 = arith.constant dense<0.000000e+00> : vector<4x128xf32>
    %549 = vector.multi_reduction <add>, %548, %cst_280 [1] : vector<4x16x128xf32> to vector<4x128xf32>
    %c5_281 = arith.constant 5 : index
    %c64_282 = arith.constant 64 : index
    %c0_283 = arith.constant 0 : index
    %550 = vector.load %arg4[%c5_281, %c64_282, %c0_283] : memref<8x128x128xf32, #tpu.memory_space<vmem>>, vector<1x64x128xf32>
    %551 = vector.shape_cast %550 : vector<1x64x128xf32> to vector<64x128xf32>
    %552 = vector.shape_cast %551 : vector<64x128xf32> to vector<4x16x128xf32>
    %553 = arith.mulf %552, %484 : vector<4x16x128xf32>
    %cst_284 = arith.constant dense<0.000000e+00> : vector<4x128xf32>
    %554 = vector.multi_reduction <add>, %553, %cst_284 [1] : vector<4x16x128xf32> to vector<4x128xf32>
    %c6_285 = arith.constant 6 : index
    %c64_286 = arith.constant 64 : index
    %c0_287 = arith.constant 0 : index
    %555 = vector.load %arg4[%c6_285, %c64_286, %c0_287] : memref<8x128x128xf32, #tpu.memory_space<vmem>>, vector<1x64x128xf32>
    %556 = vector.shape_cast %555 : vector<1x64x128xf32> to vector<64x128xf32>
    %557 = vector.shape_cast %556 : vector<64x128xf32> to vector<4x16x128xf32>
    %558 = arith.mulf %557, %484 : vector<4x16x128xf32>
    %cst_288 = arith.constant dense<0.000000e+00> : vector<4x128xf32>
    %559 = vector.multi_reduction <add>, %558, %cst_288 [1] : vector<4x16x128xf32> to vector<4x128xf32>
    %c7_289 = arith.constant 7 : index
    %c64_290 = arith.constant 64 : index
    %c0_291 = arith.constant 0 : index
    %560 = vector.load %arg4[%c7_289, %c64_290, %c0_291] : memref<8x128x128xf32, #tpu.memory_space<vmem>>, vector<1x64x128xf32>
    %561 = vector.shape_cast %560 : vector<1x64x128xf32> to vector<64x128xf32>
    %562 = vector.shape_cast %561 : vector<64x128xf32> to vector<4x16x128xf32>
    %563 = arith.mulf %562, %484 : vector<4x16x128xf32>
    %cst_292 = arith.constant dense<0.000000e+00> : vector<4x128xf32>
    %564 = vector.multi_reduction <add>, %563, %cst_292 [1] : vector<4x16x128xf32> to vector<4x128xf32>
    %565 = vector.shape_cast %489 : vector<4x128xf32> to vector<4x1x128xf32>
    %566 = vector.shape_cast %494 : vector<4x128xf32> to vector<4x1x128xf32>
    %567 = vector.shape_cast %499 : vector<4x128xf32> to vector<4x1x128xf32>
    %568 = vector.shape_cast %504 : vector<4x128xf32> to vector<4x1x128xf32>
    %569 = vector.shape_cast %509 : vector<4x128xf32> to vector<4x1x128xf32>
    %570 = vector.shape_cast %514 : vector<4x128xf32> to vector<4x1x128xf32>
    %571 = vector.shape_cast %519 : vector<4x128xf32> to vector<4x1x128xf32>
    %572 = vector.shape_cast %524 : vector<4x128xf32> to vector<4x1x128xf32>
    %573 = vector.shape_cast %529 : vector<4x128xf32> to vector<4x1x128xf32>
    %574 = vector.shape_cast %534 : vector<4x128xf32> to vector<4x1x128xf32>
    %575 = vector.shape_cast %539 : vector<4x128xf32> to vector<4x1x128xf32>
    %576 = vector.shape_cast %544 : vector<4x128xf32> to vector<4x1x128xf32>
    %577 = vector.shape_cast %549 : vector<4x128xf32> to vector<4x1x128xf32>
    %578 = vector.shape_cast %554 : vector<4x128xf32> to vector<4x1x128xf32>
    %579 = vector.shape_cast %559 : vector<4x128xf32> to vector<4x1x128xf32>
    %580 = vector.shape_cast %564 : vector<4x128xf32> to vector<4x1x128xf32>
    %581 = tpu.concatenate %565, %566, %567, %568, %569, %570, %571, %572, %573, %574, %575, %576, %577, %578, %579, %580 in 1 : vector<4x1x128xf32>, vector<4x1x128xf32>, vector<4x1x128xf32>, vector<4x1x128xf32>, vector<4x1x128xf32>, vector<4x1x128xf32>, vector<4x1x128xf32>, vector<4x1x128xf32>, vector<4x1x128xf32>, vector<4x1x128xf32>, vector<4x1x128xf32>, vector<4x1x128xf32>, vector<4x1x128xf32>, vector<4x1x128xf32>, vector<4x1x128xf32>, vector<4x1x128xf32> -> vector<4x16x128xf32>
    %582 = vector.shape_cast %581 : vector<4x16x128xf32> to vector<4x2x8x128xf32>
    %583 = arith.addf %316, %582 : vector<4x2x8x128xf32>
    %cst_293 = arith.constant dense<0xFF800000> : vector<4x2x128xf32>
    %584 = vector.multi_reduction <maximumf>, %583, %cst_293 [2] : vector<4x2x8x128xf32> to vector<4x2x128xf32>
    %585 = vector.shape_cast %584 : vector<4x2x128xf32> to vector<4x2x1x128xf32>
    %586 = vector.broadcast %585 : vector<4x2x1x128xf32> to vector<4x2x8x128xf32>
    %587 = arith.subf %583, %586 : vector<4x2x8x128xf32>
    %588 = math.exp %587 : vector<4x2x8x128xf32>
    %cst_294 = arith.constant dense<0.000000e+00> : vector<4x2x128xf32>
    %589 = vector.multi_reduction <add>, %588, %cst_294 [2] : vector<4x2x8x128xf32> to vector<4x2x128xf32>
    %590 = vector.shape_cast %589 : vector<4x2x128xf32> to vector<4x2x1x128xf32>
    %591 = tpu.reciprocal %590 {approx = true} : vector<4x2x1x128xf32> -> vector<4x2x1x128xf32>
    %592 = vector.broadcast %591 : vector<4x2x1x128xf32> to vector<4x2x8x128xf32>
    %593 = arith.mulf %588, %592 : vector<4x2x8x128xf32>
    %cst_295 = arith.constant 0.000000e+00 : f32
    %594 = vector.broadcast %cst_295 : f32 to vector<4x16x128xf32>
    %595 = vector.extract_strided_slice %593 {offsets = [0, 0, 0, 0], sizes = [4, 1, 1, 128], strides = [1, 1, 1, 1]} : vector<4x2x8x128xf32> to vector<4x1x1x128xf32>
    %596 = vector.shape_cast %595 : vector<4x1x1x128xf32> to vector<4x128xf32>
    %597 = vector.shape_cast %596 : vector<4x128xf32> to vector<4x1x128xf32>
    %c0_296 = arith.constant 0 : index
    %c0_297 = arith.constant 0 : index
    %c0_298 = arith.constant 0 : index
    %598 = vector.load %arg4[%c0_296, %c0_297, %c0_298] : memref<8x128x128xf32, #tpu.memory_space<vmem>>, vector<1x64x128xf32>
    %599 = vector.shape_cast %598 : vector<1x64x128xf32> to vector<64x128xf32>
    %600 = vector.shape_cast %599 : vector<64x128xf32> to vector<4x16x128xf32>
    %601 = vector.broadcast %597 : vector<4x1x128xf32> to vector<4x16x128xf32>
    %602 = arith.mulf %601, %600 : vector<4x16x128xf32>
    %603 = arith.addf %594, %602 : vector<4x16x128xf32>
    %604 = vector.extract_strided_slice %593 {offsets = [0, 0, 1, 0], sizes = [4, 1, 1, 128], strides = [1, 1, 1, 1]} : vector<4x2x8x128xf32> to vector<4x1x1x128xf32>
    %605 = vector.shape_cast %604 : vector<4x1x1x128xf32> to vector<4x128xf32>
    %606 = vector.shape_cast %605 : vector<4x128xf32> to vector<4x1x128xf32>
    %c1_299 = arith.constant 1 : index
    %c0_300 = arith.constant 0 : index
    %c0_301 = arith.constant 0 : index
    %607 = vector.load %arg4[%c1_299, %c0_300, %c0_301] : memref<8x128x128xf32, #tpu.memory_space<vmem>>, vector<1x64x128xf32>
    %608 = vector.shape_cast %607 : vector<1x64x128xf32> to vector<64x128xf32>
    %609 = vector.shape_cast %608 : vector<64x128xf32> to vector<4x16x128xf32>
    %610 = vector.broadcast %606 : vector<4x1x128xf32> to vector<4x16x128xf32>
    %611 = arith.mulf %610, %609 : vector<4x16x128xf32>
    %612 = arith.addf %603, %611 : vector<4x16x128xf32>
    %613 = vector.extract_strided_slice %593 {offsets = [0, 0, 2, 0], sizes = [4, 1, 1, 128], strides = [1, 1, 1, 1]} : vector<4x2x8x128xf32> to vector<4x1x1x128xf32>
    %614 = vector.shape_cast %613 : vector<4x1x1x128xf32> to vector<4x128xf32>
    %615 = vector.shape_cast %614 : vector<4x128xf32> to vector<4x1x128xf32>
    %c2_302 = arith.constant 2 : index
    %c0_303 = arith.constant 0 : index
    %c0_304 = arith.constant 0 : index
    %616 = vector.load %arg4[%c2_302, %c0_303, %c0_304] : memref<8x128x128xf32, #tpu.memory_space<vmem>>, vector<1x64x128xf32>
    %617 = vector.shape_cast %616 : vector<1x64x128xf32> to vector<64x128xf32>
    %618 = vector.shape_cast %617 : vector<64x128xf32> to vector<4x16x128xf32>
    %619 = vector.broadcast %615 : vector<4x1x128xf32> to vector<4x16x128xf32>
    %620 = arith.mulf %619, %618 : vector<4x16x128xf32>
    %621 = arith.addf %612, %620 : vector<4x16x128xf32>
    %622 = vector.extract_strided_slice %593 {offsets = [0, 0, 3, 0], sizes = [4, 1, 1, 128], strides = [1, 1, 1, 1]} : vector<4x2x8x128xf32> to vector<4x1x1x128xf32>
    %623 = vector.shape_cast %622 : vector<4x1x1x128xf32> to vector<4x128xf32>
    %624 = vector.shape_cast %623 : vector<4x128xf32> to vector<4x1x128xf32>
    %c3_305 = arith.constant 3 : index
    %c0_306 = arith.constant 0 : index
    %c0_307 = arith.constant 0 : index
    %625 = vector.load %arg4[%c3_305, %c0_306, %c0_307] : memref<8x128x128xf32, #tpu.memory_space<vmem>>, vector<1x64x128xf32>
    %626 = vector.shape_cast %625 : vector<1x64x128xf32> to vector<64x128xf32>
    %627 = vector.shape_cast %626 : vector<64x128xf32> to vector<4x16x128xf32>
    %628 = vector.broadcast %624 : vector<4x1x128xf32> to vector<4x16x128xf32>
    %629 = arith.mulf %628, %627 : vector<4x16x128xf32>
    %630 = arith.addf %621, %629 : vector<4x16x128xf32>
    %631 = vector.extract_strided_slice %593 {offsets = [0, 0, 4, 0], sizes = [4, 1, 1, 128], strides = [1, 1, 1, 1]} : vector<4x2x8x128xf32> to vector<4x1x1x128xf32>
    %632 = vector.shape_cast %631 : vector<4x1x1x128xf32> to vector<4x128xf32>
    %633 = vector.shape_cast %632 : vector<4x128xf32> to vector<4x1x128xf32>
    %c4_308 = arith.constant 4 : index
    %c0_309 = arith.constant 0 : index
    %c0_310 = arith.constant 0 : index
    %634 = vector.load %arg4[%c4_308, %c0_309, %c0_310] : memref<8x128x128xf32, #tpu.memory_space<vmem>>, vector<1x64x128xf32>
    %635 = vector.shape_cast %634 : vector<1x64x128xf32> to vector<64x128xf32>
    %636 = vector.shape_cast %635 : vector<64x128xf32> to vector<4x16x128xf32>
    %637 = vector.broadcast %633 : vector<4x1x128xf32> to vector<4x16x128xf32>
    %638 = arith.mulf %637, %636 : vector<4x16x128xf32>
    %639 = arith.addf %630, %638 : vector<4x16x128xf32>
    %640 = vector.extract_strided_slice %593 {offsets = [0, 0, 5, 0], sizes = [4, 1, 1, 128], strides = [1, 1, 1, 1]} : vector<4x2x8x128xf32> to vector<4x1x1x128xf32>
    %641 = vector.shape_cast %640 : vector<4x1x1x128xf32> to vector<4x128xf32>
    %642 = vector.shape_cast %641 : vector<4x128xf32> to vector<4x1x128xf32>
    %c5_311 = arith.constant 5 : index
    %c0_312 = arith.constant 0 : index
    %c0_313 = arith.constant 0 : index
    %643 = vector.load %arg4[%c5_311, %c0_312, %c0_313] : memref<8x128x128xf32, #tpu.memory_space<vmem>>, vector<1x64x128xf32>
    %644 = vector.shape_cast %643 : vector<1x64x128xf32> to vector<64x128xf32>
    %645 = vector.shape_cast %644 : vector<64x128xf32> to vector<4x16x128xf32>
    %646 = vector.broadcast %642 : vector<4x1x128xf32> to vector<4x16x128xf32>
    %647 = arith.mulf %646, %645 : vector<4x16x128xf32>
    %648 = arith.addf %639, %647 : vector<4x16x128xf32>
    %649 = vector.extract_strided_slice %593 {offsets = [0, 0, 6, 0], sizes = [4, 1, 1, 128], strides = [1, 1, 1, 1]} : vector<4x2x8x128xf32> to vector<4x1x1x128xf32>
    %650 = vector.shape_cast %649 : vector<4x1x1x128xf32> to vector<4x128xf32>
    %651 = vector.shape_cast %650 : vector<4x128xf32> to vector<4x1x128xf32>
    %c6_314 = arith.constant 6 : index
    %c0_315 = arith.constant 0 : index
    %c0_316 = arith.constant 0 : index
    %652 = vector.load %arg4[%c6_314, %c0_315, %c0_316] : memref<8x128x128xf32, #tpu.memory_space<vmem>>, vector<1x64x128xf32>
    %653 = vector.shape_cast %652 : vector<1x64x128xf32> to vector<64x128xf32>
    %654 = vector.shape_cast %653 : vector<64x128xf32> to vector<4x16x128xf32>
    %655 = vector.broadcast %651 : vector<4x1x128xf32> to vector<4x16x128xf32>
    %656 = arith.mulf %655, %654 : vector<4x16x128xf32>
    %657 = arith.addf %648, %656 : vector<4x16x128xf32>
    %658 = vector.extract_strided_slice %593 {offsets = [0, 0, 7, 0], sizes = [4, 1, 1, 128], strides = [1, 1, 1, 1]} : vector<4x2x8x128xf32> to vector<4x1x1x128xf32>
    %659 = vector.shape_cast %658 : vector<4x1x1x128xf32> to vector<4x128xf32>
    %660 = vector.shape_cast %659 : vector<4x128xf32> to vector<4x1x128xf32>
    %c7_317 = arith.constant 7 : index
    %c0_318 = arith.constant 0 : index
    %c0_319 = arith.constant 0 : index
    %661 = vector.load %arg4[%c7_317, %c0_318, %c0_319] : memref<8x128x128xf32, #tpu.memory_space<vmem>>, vector<1x64x128xf32>
    %662 = vector.shape_cast %661 : vector<1x64x128xf32> to vector<64x128xf32>
    %663 = vector.shape_cast %662 : vector<64x128xf32> to vector<4x16x128xf32>
    %664 = vector.broadcast %660 : vector<4x1x128xf32> to vector<4x16x128xf32>
    %665 = arith.mulf %664, %663 : vector<4x16x128xf32>
    %666 = arith.addf %657, %665 : vector<4x16x128xf32>
    %667 = vector.extract_strided_slice %593 {offsets = [0, 1, 0, 0], sizes = [4, 1, 1, 128], strides = [1, 1, 1, 1]} : vector<4x2x8x128xf32> to vector<4x1x1x128xf32>
    %668 = vector.shape_cast %667 : vector<4x1x1x128xf32> to vector<4x128xf32>
    %669 = vector.shape_cast %668 : vector<4x128xf32> to vector<4x1x128xf32>
    %c0_320 = arith.constant 0 : index
    %c64_321 = arith.constant 64 : index
    %c0_322 = arith.constant 0 : index
    %670 = vector.load %arg4[%c0_320, %c64_321, %c0_322] : memref<8x128x128xf32, #tpu.memory_space<vmem>>, vector<1x64x128xf32>
    %671 = vector.shape_cast %670 : vector<1x64x128xf32> to vector<64x128xf32>
    %672 = vector.shape_cast %671 : vector<64x128xf32> to vector<4x16x128xf32>
    %673 = vector.broadcast %669 : vector<4x1x128xf32> to vector<4x16x128xf32>
    %674 = arith.mulf %673, %672 : vector<4x16x128xf32>
    %675 = arith.addf %666, %674 : vector<4x16x128xf32>
    %676 = vector.extract_strided_slice %593 {offsets = [0, 1, 1, 0], sizes = [4, 1, 1, 128], strides = [1, 1, 1, 1]} : vector<4x2x8x128xf32> to vector<4x1x1x128xf32>
    %677 = vector.shape_cast %676 : vector<4x1x1x128xf32> to vector<4x128xf32>
    %678 = vector.shape_cast %677 : vector<4x128xf32> to vector<4x1x128xf32>
    %c1_323 = arith.constant 1 : index
    %c64_324 = arith.constant 64 : index
    %c0_325 = arith.constant 0 : index
    %679 = vector.load %arg4[%c1_323, %c64_324, %c0_325] : memref<8x128x128xf32, #tpu.memory_space<vmem>>, vector<1x64x128xf32>
    %680 = vector.shape_cast %679 : vector<1x64x128xf32> to vector<64x128xf32>
    %681 = vector.shape_cast %680 : vector<64x128xf32> to vector<4x16x128xf32>
    %682 = vector.broadcast %678 : vector<4x1x128xf32> to vector<4x16x128xf32>
    %683 = arith.mulf %682, %681 : vector<4x16x128xf32>
    %684 = arith.addf %675, %683 : vector<4x16x128xf32>
    %685 = vector.extract_strided_slice %593 {offsets = [0, 1, 2, 0], sizes = [4, 1, 1, 128], strides = [1, 1, 1, 1]} : vector<4x2x8x128xf32> to vector<4x1x1x128xf32>
    %686 = vector.shape_cast %685 : vector<4x1x1x128xf32> to vector<4x128xf32>
    %687 = vector.shape_cast %686 : vector<4x128xf32> to vector<4x1x128xf32>
    %c2_326 = arith.constant 2 : index
    %c64_327 = arith.constant 64 : index
    %c0_328 = arith.constant 0 : index
    %688 = vector.load %arg4[%c2_326, %c64_327, %c0_328] : memref<8x128x128xf32, #tpu.memory_space<vmem>>, vector<1x64x128xf32>
    %689 = vector.shape_cast %688 : vector<1x64x128xf32> to vector<64x128xf32>
    %690 = vector.shape_cast %689 : vector<64x128xf32> to vector<4x16x128xf32>
    %691 = vector.broadcast %687 : vector<4x1x128xf32> to vector<4x16x128xf32>
    %692 = arith.mulf %691, %690 : vector<4x16x128xf32>
    %693 = arith.addf %684, %692 : vector<4x16x128xf32>
    %694 = vector.extract_strided_slice %593 {offsets = [0, 1, 3, 0], sizes = [4, 1, 1, 128], strides = [1, 1, 1, 1]} : vector<4x2x8x128xf32> to vector<4x1x1x128xf32>
    %695 = vector.shape_cast %694 : vector<4x1x1x128xf32> to vector<4x128xf32>
    %696 = vector.shape_cast %695 : vector<4x128xf32> to vector<4x1x128xf32>
    %c3_329 = arith.constant 3 : index
    %c64_330 = arith.constant 64 : index
    %c0_331 = arith.constant 0 : index
    %697 = vector.load %arg4[%c3_329, %c64_330, %c0_331] : memref<8x128x128xf32, #tpu.memory_space<vmem>>, vector<1x64x128xf32>
    %698 = vector.shape_cast %697 : vector<1x64x128xf32> to vector<64x128xf32>
    %699 = vector.shape_cast %698 : vector<64x128xf32> to vector<4x16x128xf32>
    %700 = vector.broadcast %696 : vector<4x1x128xf32> to vector<4x16x128xf32>
    %701 = arith.mulf %700, %699 : vector<4x16x128xf32>
    %702 = arith.addf %693, %701 : vector<4x16x128xf32>
    %703 = vector.extract_strided_slice %593 {offsets = [0, 1, 4, 0], sizes = [4, 1, 1, 128], strides = [1, 1, 1, 1]} : vector<4x2x8x128xf32> to vector<4x1x1x128xf32>
    %704 = vector.shape_cast %703 : vector<4x1x1x128xf32> to vector<4x128xf32>
    %705 = vector.shape_cast %704 : vector<4x128xf32> to vector<4x1x128xf32>
    %c4_332 = arith.constant 4 : index
    %c64_333 = arith.constant 64 : index
    %c0_334 = arith.constant 0 : index
    %706 = vector.load %arg4[%c4_332, %c64_333, %c0_334] : memref<8x128x128xf32, #tpu.memory_space<vmem>>, vector<1x64x128xf32>
    %707 = vector.shape_cast %706 : vector<1x64x128xf32> to vector<64x128xf32>
    %708 = vector.shape_cast %707 : vector<64x128xf32> to vector<4x16x128xf32>
    %709 = vector.broadcast %705 : vector<4x1x128xf32> to vector<4x16x128xf32>
    %710 = arith.mulf %709, %708 : vector<4x16x128xf32>
    %711 = arith.addf %702, %710 : vector<4x16x128xf32>
    %712 = vector.extract_strided_slice %593 {offsets = [0, 1, 5, 0], sizes = [4, 1, 1, 128], strides = [1, 1, 1, 1]} : vector<4x2x8x128xf32> to vector<4x1x1x128xf32>
    %713 = vector.shape_cast %712 : vector<4x1x1x128xf32> to vector<4x128xf32>
    %714 = vector.shape_cast %713 : vector<4x128xf32> to vector<4x1x128xf32>
    %c5_335 = arith.constant 5 : index
    %c64_336 = arith.constant 64 : index
    %c0_337 = arith.constant 0 : index
    %715 = vector.load %arg4[%c5_335, %c64_336, %c0_337] : memref<8x128x128xf32, #tpu.memory_space<vmem>>, vector<1x64x128xf32>
    %716 = vector.shape_cast %715 : vector<1x64x128xf32> to vector<64x128xf32>
    %717 = vector.shape_cast %716 : vector<64x128xf32> to vector<4x16x128xf32>
    %718 = vector.broadcast %714 : vector<4x1x128xf32> to vector<4x16x128xf32>
    %719 = arith.mulf %718, %717 : vector<4x16x128xf32>
    %720 = arith.addf %711, %719 : vector<4x16x128xf32>
    %721 = vector.extract_strided_slice %593 {offsets = [0, 1, 6, 0], sizes = [4, 1, 1, 128], strides = [1, 1, 1, 1]} : vector<4x2x8x128xf32> to vector<4x1x1x128xf32>
    %722 = vector.shape_cast %721 : vector<4x1x1x128xf32> to vector<4x128xf32>
    %723 = vector.shape_cast %722 : vector<4x128xf32> to vector<4x1x128xf32>
    %c6_338 = arith.constant 6 : index
    %c64_339 = arith.constant 64 : index
    %c0_340 = arith.constant 0 : index
    %724 = vector.load %arg4[%c6_338, %c64_339, %c0_340] : memref<8x128x128xf32, #tpu.memory_space<vmem>>, vector<1x64x128xf32>
    %725 = vector.shape_cast %724 : vector<1x64x128xf32> to vector<64x128xf32>
    %726 = vector.shape_cast %725 : vector<64x128xf32> to vector<4x16x128xf32>
    %727 = vector.broadcast %723 : vector<4x1x128xf32> to vector<4x16x128xf32>
    %728 = arith.mulf %727, %726 : vector<4x16x128xf32>
    %729 = arith.addf %720, %728 : vector<4x16x128xf32>
    %730 = vector.extract_strided_slice %593 {offsets = [0, 1, 7, 0], sizes = [4, 1, 1, 128], strides = [1, 1, 1, 1]} : vector<4x2x8x128xf32> to vector<4x1x1x128xf32>
    %731 = vector.shape_cast %730 : vector<4x1x1x128xf32> to vector<4x128xf32>
    %732 = vector.shape_cast %731 : vector<4x128xf32> to vector<4x1x128xf32>
    %c7_341 = arith.constant 7 : index
    %c64_342 = arith.constant 64 : index
    %c0_343 = arith.constant 0 : index
    %733 = vector.load %arg4[%c7_341, %c64_342, %c0_343] : memref<8x128x128xf32, #tpu.memory_space<vmem>>, vector<1x64x128xf32>
    %734 = vector.shape_cast %733 : vector<1x64x128xf32> to vector<64x128xf32>
    %735 = vector.shape_cast %734 : vector<64x128xf32> to vector<4x16x128xf32>
    %736 = vector.broadcast %732 : vector<4x1x128xf32> to vector<4x16x128xf32>
    %737 = arith.mulf %736, %735 : vector<4x16x128xf32>
    %738 = arith.addf %729, %737 : vector<4x16x128xf32>
    %739 = arith.mulf %738, %738 : vector<4x16x128xf32>
    %cst_344 = arith.constant dense<0.000000e+00> : vector<4x128xf32>
    %740 = vector.multi_reduction <add>, %739, %cst_344 [1] : vector<4x16x128xf32> to vector<4x128xf32>
    %741 = vector.shape_cast %740 : vector<4x128xf32> to vector<4x1x128xf32>
    %cst_345 = arith.constant 1.000000e-07 : f32
    %742 = vector.broadcast %cst_345 : f32 to vector<4x1x128xf32>
    %743 = arith.addf %741, %742 : vector<4x1x128xf32>
    %744 = math.rsqrt %743 : vector<4x1x128xf32>
    %cst_346 = arith.constant 1.000000e+00 : f32
    %745 = vector.broadcast %cst_346 : f32 to vector<4x1x128xf32>
    %746 = arith.addf %745, %741 : vector<4x1x128xf32>
    %747 = tpu.reciprocal %746 {approx = true} : vector<4x1x128xf32> -> vector<4x1x128xf32>
    %748 = arith.mulf %741, %747 : vector<4x1x128xf32>
    %749 = arith.mulf %748, %744 : vector<4x1x128xf32>
    %750 = vector.broadcast %749 : vector<4x1x128xf32> to vector<4x16x128xf32>
    %751 = arith.mulf %750, %738 : vector<4x16x128xf32>
    %c0_347 = arith.constant 0 : index
    %c0_348 = arith.constant 0 : index
    %c0_349 = arith.constant 0 : index
    %752 = vector.load %arg3[%c0_347, %c0_348, %c0_349] : memref<4x16x128xf32, #tpu.memory_space<vmem>>, vector<4x16x128xf32>
    tpu.vector_store %arg3[%c0_347, %c0_348, %c0_349], %751 {strides = array<i32>} : memref<4x16x128xf32, #tpu.memory_space<vmem>>, vector<4x16x128xf32>,
    return
  }
  func.func @transform_0(%arg0: i32) -> (i32, i32, i32, i32) {
    %c0_i32 = arith.constant 0 : i32
    %c0_i32_0 = arith.constant 0 : i32
    %c0_i32_1 = arith.constant 0 : i32
    %c0_i32_2 = arith.constant 0 : i32
    return %arg0, %c0_i32, %c0_i32_0, %c0_i32_1 : i32, i32, i32, i32
  }
  func.func @transform_1(%arg0: i32) -> (i32, i32) {
    %c0_i32 = arith.constant 0 : i32
    %c0_i32_0 = arith.constant 0 : i32
    %c0_i32_1 = arith.constant 0 : i32
    return %c0_i32, %c0_i32_0 : i32, i32
  }
  func.func @transform_2(%arg0: i32) -> (i32, i32, i32) {
    %c0_i32 = arith.constant 0 : i32
    %c0_i32_0 = arith.constant 0 : i32
    %c0_i32_1 = arith.constant 0 : i32
    return %c0_i32, %c0_i32_0, %arg0 : i32, i32, i32
  }
}

</mosaic_0001>

<llo_original>
// kernel: tpu_custom_call.1
$region0: #{tpu_custom_call.1}
  #allocation0 [shape = 'u32[]', space=smem, size = 0x4, offset = 0x4, fixed_abs, tag = 'smem constant byte address 0x4 - core index']
  #allocation1 [shape = 'u32[144,128]{1,0:T(1,128)}', space=vmem, size = 0x12000, scoped, tag = 'internal scratch']
  #allocation2 [shape = 'f32[8,128,128]{2,1,0:T(8,128)}', space=vmem, size = 0x80000, scoped, tag = 'scratch operand']
  %s0 = inlined_call_operand.vmem [shape: f32[1,8,16,128], index: 0, kind: input, shape index: {}]
  %s1 = inlined_call_operand.vmem [shape: f32[128,16], index: 1, kind: input, shape index: {}]
  %s2 = inlined_call_operand.hbm [shape: f32[4,16,128], index: 2, kind: output, shape index: {}]
  %s3 = sld [smem:[#allocation0]]
  $region18: #{tpu_custom_call.1} parent=0
    _
  %s5 = ssub.s32 1, %s3
  %s6 = scalar_select 0, %s5, %s3
  $region1: #{tpu_custom_call.1} parent=0
    #allocation3 [shape = 'u8[32768]{0}', space=vmem, size = 0x8000, scoped, tag = 'output window, operand 0, single buffered']
    #allocation4 [shape = 's32[1]{0}', space=sflag, size = 0x4, scoped, tag = 'scoped memory for tpu_custom_call.1']
    %7 = vsyncpa [#allocation4], 0
    // Predicated region
    $region2: #{tpu_custom_call.1} parent=1 // pred_check
      _
    $region3: #{tpu_custom_call.1} parent=1 // pred_check_branch
      %9 = sbr.rel (0) target = $region5
    $region4: #{tpu_custom_call.1} parent=1 // pred_region
      _
    $region5: #{tpu_custom_call.1} parent=1 // pred_fallthru
      _
    // Predicated region
    $region6: #{tpu_custom_call.1} parent=1 // pred_check
      _
    $region7: #{tpu_custom_call.1} parent=1 // pred_check_branch
      %11 = sbr.rel (0) target = $region9
    $region8: #{tpu_custom_call.1} parent=1 // pred_region
      _
    $region9: #{tpu_custom_call.1} parent=1 // pred_fallthru
      _
    %v12 = vld [vmem:[%s1] sm:$0xff]
    %v13 = vld [vmem:[%s1 + $0x8] sm:$0xff]
    %v14 = vld [vmem:[%s1 + $0x10] sm:$0xff]
    %v15 = vld [vmem:[%s1 + $0x18] sm:$0xff]
    %v16 = vld [vmem:[%s1 + $0x20] sm:$0xff]
    %v17 = vld [vmem:[%s1 + $0x28] sm:$0xff]
    %v18 = vld [vmem:[%s1 + $0x30] sm:$0xff]
    %v19 = vld [vmem:[%s1 + $0x38] sm:$0xff]
    %v20 = vld [vmem:[%s1 + $0x40] sm:$0xff]
    %v21 = vld [vmem:[%s1 + $0x48] sm:$0xff]
    %v22 = vld [vmem:[%s1 + $0x50] sm:$0xff]
    %v23 = vld [vmem:[%s1 + $0x58] sm:$0xff]
    %v24 = vld [vmem:[%s1 + $0x60] sm:$0xff]
    %v25 = vld [vmem:[%s1 + $0x68] sm:$0xff]
    %v26 = vld [vmem:[%s1 + $0x70] sm:$0xff]
    %v27 = vld [vmem:[%s1 + $0x78] sm:$0xff]
    %v28 = vld [vmem:[%s0] sm:$0xff]
    %v29 = vld [vmem:[%s0 + $0x8] sm:$0xff]
    %vm30 = vcmask 130048
    %v32 = vsel %vm30, %v12, 0
    %v35 = vsel %vm30, %v13, 0
    %v38 = vsel %vm30, %v14, 0
    %v41 = vsel %vm30, %v15, 0
    %v44 = vsel %vm30, %v16, 0
    %v47 = vsel %vm30, %v17, 0
    %v50 = vsel %vm30, %v18, 0
    %v53 = vsel %vm30, %v19, 0
    %v56 = vsel %vm30, %v20, 0
    %v59 = vsel %vm30, %v21, 0
    %v62 = vsel %vm30, %v22, 0
    %v65 = vsel %vm30, %v23, 0
    %v68 = vsel %vm30, %v24, 0
    %v71 = vsel %vm30, %v25, 0
    %v74 = vsel %vm30, %v26, 0
    %v77 = vsel %vm30, %v27, 0
    %79 = vmatprep.subr.mxu0 0.0
    %80 = vmatpush1.msra.mxu0 %v28
    %81 = vmatprep.subr.mxu0 0.0
    %82 = vmatpush1.msra.mxu0 %v29
    %83 = vmatprep.subr.mxu0 0.0
    %84 = vmatpush1.msra.mxu0 0.0
    %85 = vmatprep.subr.mxu0 0.0
    %86 = vmatpush1.msra.mxu0 0.0
    %87 = vmatprep.subr.mxu0 0.0
    %88 = vmatpush1.msra.mxu0 0.0
    %89 = vmatprep.subr.mxu0 0.0
    %90 = vmatpush1.msra.mxu0 0.0
    %91 = vmatprep.subr.mxu0 0.0
    %92 = vmatpush1.msra.mxu0 0.0
    %93 = vmatprep.subr.mxu0 0.0
    %94 = vmatpush1.msra.mxu0 0.0
    %95 = vmatprep.subr.mxu0 0.0
    %96 = vmatpush1.msra.mxu0 0.0
    %97 = vmatprep.subr.mxu0 0.0
    %98 = vmatpush1.msra.mxu0 0.0
    %99 = vmatprep.subr.mxu0 0.0
    %100 = vmatpush1.msra.mxu0 0.0
    %101 = vmatprep.subr.mxu0 0.0
    %102 = vmatpush1.msra.mxu0 0.0
    %103 = vmatprep.subr.mxu0 0.0
    %104 = vmatpush1.msra.mxu0 0.0
    %105 = vmatprep.subr.mxu0 0.0
    %106 = vmatpush1.msra.mxu0 0.0
    %107 = vmatprep.subr.mxu0 0.0
    %108 = vmatpush1.msra.mxu0 0.0
    %109 = vmatprep.subr.mxu0 0.0
    %110 = vmatpush1.msra.mxu0 0.0
    %111 = vmatprep.subr.mxu0 0.0
    %112 = vmatpush1.msra.mxu0 0.0
    %113 = vmatprep.subr.mxu0 0.0
    %114 = vmatpush1.msra.mxu0 0.0
    %115 = vmatprep.subr.mxu0 0.0
    %116 = vmatpush1.msra.mxu0 0.0
    %117 = vmatprep.subr.mxu0 0.0
    %118 = vmatpush1.msra.mxu0 0.0
    %119 = vmatprep.subr.mxu0 0.0
    %120 = vmatpush1.msra.mxu0 0.0
    %121 = vmatprep.subr.mxu0 0.0
    %122 = vmatpush1.msra.mxu0 0.0
    %123 = vmatprep.subr.mxu0 0.0
    %124 = vmatpush1.msra.mxu0 0.0
    %125 = vmatprep.subr.mxu0 0.0
    %126 = vmatpush1.msra.mxu0 0.0
    %127 = vmatprep.subr.mxu0 0.0
    %128 = vmatpush1.msra.mxu0 0.0
    %129 = vmatprep.subr.mxu0 0.0
    %130 = vmatpush1.msra.mxu0 0.0
    %131 = vmatprep.subr.mxu0 0.0
    %132 = vmatpush1.msra.mxu0 0.0
    %133 = vmatprep.subr.mxu0 0.0
    %134 = vmatpush1.msra.mxu0 0.0
    %135 = vmatprep.subr.mxu0 0.0
    %136 = vmatpush1.msra.mxu0 0.0
    %137 = vmatprep.subr.mxu0 0.0
    %138 = vmatpush1.msra.mxu0 0.0
    %139 = vmatprep.subr.mxu0 0.0
    %140 = vmatpush1.msra.mxu0 0.0
    %141 = vmatprep.subr.mxu0 0.0
    %142 = vmatpush1.msra.mxu0 0.0
    %143 = vmatprep.mubr.f32.mxu0 0.0
    %144 = vmatmul.mubr.f32.gmra.mrb[0].mxu0 %v32
    %v145 = vpop.f32.mrb[0].mxu0
    %v146 = vadd.f32 0.0, %v145
    %v147 = vpop.f32.mrb[0].mxu0
    %148 = vmatprep.mubr.f32.mxu0 0.0
    %149 = vmatmul.mubr.f32.gmra.mrb[0].mxu0 %v35
    %v150 = vpop.f32.mrb[0].mxu0
    %v151 = vadd.f32 0.0, %v150
    %v152 = vpop.f32.mrb[0].mxu0
    %153 = vmatprep.mubr.f32.mxu0 0.0
    %154 = vmatmul.mubr.f32.gmra.mrb[0].mxu0 %v38
    %v155 = vpop.f32.mrb[0].mxu0
    %v156 = vadd.f32 0.0, %v155
    %v157 = vpop.f32.mrb[0].mxu0
    %158 = vmatprep.mubr.f32.mxu0 0.0
    %159 = vmatmul.mubr.f32.gmra.mrb[0].mxu0 %v41
    %v160 = vpop.f32.mrb[0].mxu0
    %v161 = vadd.f32 0.0, %v160
    %v162 = vpop.f32.mrb[0].mxu0
    %163 = vmatprep.mubr.f32.mxu0 0.0
    %164 = vmatmul.mubr.f32.gmra.mrb[0].mxu0 %v44
    %v165 = vpop.f32.mrb[0].mxu0
    %v166 = vadd.f32 0.0, %v165
    %v167 = vpop.f32.mrb[0].mxu0
    %168 = vmatprep.mubr.f32.mxu0 0.0
    %169 = vmatmul.mubr.f32.gmra.mrb[0].mxu0 %v47
    %v170 = vpop.f32.mrb[0].mxu0
    %v171 = vadd.f32 0.0, %v170
    %v172 = vpop.f32.mrb[0].mxu0
    %173 = vmatprep.mubr.f32.mxu0 0.0
    %174 = vmatmul.mubr.f32.gmra.mrb[0].mxu0 %v50
    %v175 = vpop.f32.mrb[0].mxu0
    %v176 = vadd.f32 0.0, %v175
    %v177 = vpop.f32.mrb[0].mxu0
    %178 = vmatprep.mubr.f32.mxu0 0.0
    %179 = vmatmul.mubr.f32.gmra.mrb[0].mxu0 %v53
    %v180 = vpop.f32.mrb[0].mxu0
    %v181 = vadd.f32 0.0, %v180
    %v182 = vpop.f32.mrb[0].mxu0
    %183 = vmatprep.mubr.f32.mxu0 0.0
    %184 = vmatmul.mubr.f32.gmra.mrb[0].mxu0 %v56
    %v185 = vpop.f32.mrb[0].mxu0
    %v186 = vadd.f32 0.0, %v185
    %v187 = vpop.f32.mrb[0].mxu0
    %188 = vmatprep.mubr.f32.mxu0 0.0
    %189 = vmatmul.mubr.f32.gmra.mrb[0].mxu0 %v59
    %v190 = vpop.f32.mrb[0].mxu0
    %v191 = vadd.f32 0.0, %v190
    %v192 = vpop.f32.mrb[0].mxu0
    %193 = vmatprep.mubr.f32.mxu0 0.0
    %194 = vmatmul.mubr.f32.gmra.mrb[0].mxu0 %v62
    %v195 = vpop.f32.mrb[0].mxu0
    %v196 = vadd.f32 0.0, %v195
    %v197 = vpop.f32.mrb[0].mxu0
    %198 = vmatprep.mubr.f32.mxu0 0.0
    %199 = vmatmul.mubr.f32.gmra.mrb[0].mxu0 %v65
    %v200 = vpop.f32.mrb[0].mxu0
    %v201 = vadd.f32 0.0, %v200
    %v202 = vpop.f32.mrb[0].mxu0
    %203 = vmatprep.mubr.f32.mxu0 0.0
    %204 = vmatmul.mubr.f32.gmra.mrb[0].mxu0 %v68
    %v205 = vpop.f32.mrb[0].mxu0
    %v206 = vadd.f32 0.0, %v205
    %v207 = vpop.f32.mrb[0].mxu0
    %208 = vmatprep.mubr.f32.mxu0 0.0
    %209 = vmatmul.mubr.f32.gmra.mrb[0].mxu0 %v71
    %v210 = vpop.f32.mrb[0].mxu0
    %v211 = vadd.f32 0.0, %v210
    %v212 = vpop.f32.mrb[0].mxu0
    %213 = vmatprep.mubr.f32.mxu0 0.0
    %214 = vmatmul.mubr.f32.gmra.mrb[0].mxu0 %v74
    %v215 = vpop.f32.mrb[0].mxu0
    %v216 = vadd.f32 0.0, %v215
    %v217 = vpop.f32.mrb[0].mxu0
    %218 = vmatprep.mubr.f32.mxu0 0.0
    %219 = vmatmul.mubr.f32.gmra.mrb[0].mxu0 %v77
    %v220 = vpop.f32.mrb[0].mxu0
    %v221 = vadd.f32 0.0, %v220
    %v222 = vpop.f32.mrb[0].mxu0
    %223 = vdwg.mxu0
    %224 = vst [vmem:[#allocation2] sm:$0xff] %v146
    %225 = vst [vmem:[#allocation2 + $0x8] sm:$0xff] %v151
    %226 = vst [vmem:[#allocation2 + $0x10] sm:$0xff] %v156
    %227 = vst [vmem:[#allocation2 + $0x18] sm:$0xff] %v161
    %228 = vst [vmem:[#allocation2 + $0x20] sm:$0xff] %v166
    %229 = vst [vmem:[#allocation2 + $0x28] sm:$0xff] %v171
    %230 = vst [vmem:[#allocation2 + $0x30] sm:$0xff] %v176
    %231 = vst [vmem:[#allocation2 + $0x38] sm:$0xff] %v181
    %232 = vst [vmem:[#allocation2 + $0x40] sm:$0xff] %v186
    %233 = vst [vmem:[#allocation2 + $0x48] sm:$0xff] %v191
    %234 = vst [vmem:[#allocation2 + $0x50] sm:$0xff] %v196
    %235 = vst [vmem:[#allocation2 + $0x58] sm:$0xff] %v201
    %236 = vst [vmem:[#allocation2 + $0x60] sm:$0xff] %v206
    %237 = vst [vmem:[#allocation2 + $0x68] sm:$0xff] %v211
    %238 = vst [vmem:[#allocation2 + $0x70] sm:$0xff] %v216
    %239 = vst [vmem:[#allocation2 + $0x78] sm:$0xff] %v221
    %s240 = scalar_lea.vmem %s0, 16
    %v241 = vld [vmem:[%s240] sm:$0xff]
    %v242 = vld [vmem:[%s240 + $0x8] sm:$0xff]
    %243 = vmatprep.subr.mxu0 0.0
    %244 = vmatpush1.msra.mxu0 %v241
    %245 = vmatprep.subr.mxu0 0.0
    %246 = vmatpush1.msra.mxu0 %v242
    %247 = vmatprep.subr.mxu0 0.0
    %248 = vmatpush1.msra.mxu0 0.0
    %249 = vmatprep.subr.mxu0 0.0
    %250 = vmatpush1.msra.mxu0 0.0
    %251 = vmatprep.subr.mxu0 0.0
    %252 = vmatpush1.msra.mxu0 0.0
    %253 = vmatprep.subr.mxu0 0.0
    %254 = vmatpush1.msra.mxu0 0.0
    %255 = vmatprep.subr.mxu0 0.0
    %256 = vmatpush1.msra.mxu0 0.0
    %257 = vmatprep.subr.mxu0 0.0
    %258 = vmatpush1.msra.mxu0 0.0
    %259 = vmatprep.subr.mxu0 0.0
    %260 = vmatpush1.msra.mxu0 0.0
    %261 = vmatprep.subr.mxu0 0.0
    %262 = vmatpush1.msra.mxu0 0.0
    %263 = vmatprep.subr.mxu0 0.0
    %264 = vmatpush1.msra.mxu0 0.0
    %265 = vmatprep.subr.mxu0 0.0
    %266 = vmatpush1.msra.mxu0 0.0
    %267 = vmatprep.subr.mxu0 0.0
    %268 = vmatpush1.msra.mxu0 0.0
    %269 = vmatprep.subr.mxu0 0.0
    %270 = vmatpush1.msra.mxu0 0.0
    %271 = vmatprep.subr.mxu0 0.0
    %272 = vmatpush1.msra.mxu0 0.0
    %273 = vmatprep.subr.mxu0 0.0
    %274 = vmatpush1.msra.mxu0 0.0
    %275 = vmatprep.subr.mxu0 0.0
    %276 = vmatpush1.msra.mxu0 0.0
    %277 = vmatprep.subr.mxu0 0.0
    %278 = vmatpush1.msra.mxu0 0.0
    %279 = vmatprep.subr.mxu0 0.0
    %280 = vmatpush1.msra.mxu0 0.0
    %281 = vmatprep.subr.mxu0 0.0
    %282 = vmatpush1.msra.mxu0 0.0
    %283 = vmatprep.subr.mxu0 0.0
    %284 = vmatpush1.msra.mxu0 0.0
    %285 = vmatprep.subr.mxu0 0.0
    %286 = vmatpush1.msra.mxu0 0.0
    %287 = vmatprep.subr.mxu0 0.0
    %288 = vmatpush1.msra.mxu0 0.0
    %289 = vmatprep.subr.mxu0 0.0
    %290 = vmatpush1.msra.mxu0 0.0
    %291 = vmatprep.subr.mxu0 0.0
    %292 = vmatpush1.msra.mxu0 0.0
    %293 = vmatprep.subr.mxu0 0.0
    %294 = vmatpush1.msra.mxu0 0.0
    %295 = vmatprep.subr.mxu0 0.0
    %296 = vmatpush1.msra.mxu0 0.0
    %297 = vmatprep.subr.mxu0 0.0
    %298 = vmatpush1.msra.mxu0 0.0
    %299 = vmatprep.subr.mxu0 0.0
    %300 = vmatpush1.msra.mxu0 0.0
    %301 = vmatprep.subr.mxu0 0.0
    %302 = vmatpush1.msra.mxu0 0.0
    %303 = vmatprep.subr.mxu0 0.0
    %304 = vmatpush1.msra.mxu0 0.0
    %305 = vmatprep.subr.mxu0 0.0
    %306 = vmatpush1.msra.mxu0 0.0
    %307 = vmatprep.mubr.f32.mxu0 0.0
    %308 = vmatmul.mubr.f32.gmra.mrb[0].mxu0 %v32
    %v309 = vpop.f32.mrb[0].mxu0
    %v310 = vadd.f32 0.0, %v309
    %v311 = vpop.f32.mrb[0].mxu0
    %312 = vmatprep.mubr.f32.mxu0 0.0
    %313 = vmatmul.mubr.f32.gmra.mrb[0].mxu0 %v35
    %v314 = vpop.f32.mrb[0].mxu0
    %v315 = vadd.f32 0.0, %v314
    %v316 = vpop.f32.mrb[0].mxu0
    %317 = vmatprep.mubr.f32.mxu0 0.0
    %318 = vmatmul.mubr.f32.gmra.mrb[0].mxu0 %v38
    %v319 = vpop.f32.mrb[0].mxu0
    %v320 = vadd.f32 0.0, %v319
    %v321 = vpop.f32.mrb[0].mxu0
    %322 = vmatprep.mubr.f32.mxu0 0.0
    %323 = vmatmul.mubr.f32.gmra.mrb[0].mxu0 %v41
    %v324 = vpop.f32.mrb[0].mxu0
    %v325 = vadd.f32 0.0, %v324
    %v326 = vpop.f32.mrb[0].mxu0
    %327 = vmatprep.mubr.f32.mxu0 0.0
    %328 = vmatmul.mubr.f32.gmra.mrb[0].mxu0 %v44
    %v329 = vpop.f32.mrb[0].mxu0
    %v330 = vadd.f32 0.0, %v329
    %v331 = vpop.f32.mrb[0].mxu0
    %332 = vmatprep.mubr.f32.mxu0 0.0
    %333 = vmatmul.mubr.f32.gmra.mrb[0].mxu0 %v47
    %v334 = vpop.f32.mrb[0].mxu0
    %v335 = vadd.f32 0.0, %v334
    %v336 = vpop.f32.mrb[0].mxu0
    %337 = vmatprep.mubr.f32.mxu0 0.0
    %338 = vmatmul.mubr.f32.gmra.mrb[0].mxu0 %v50
    %v339 = vpop.f32.mrb[0].mxu0
    %v340 = vadd.f32 0.0, %v339
    %v341 = vpop.f32.mrb[0].mxu0
    %342 = vmatprep.mubr.f32.mxu0 0.0
    %343 = vmatmul.mubr.f32.gmra.mrb[0].mxu0 %v53
    %v344 = vpop.f32.mrb[0].mxu0
    %v345 = vadd.f32 0.0, %v344
    %v346 = vpop.f32.mrb[0].mxu0
    %347 = vmatprep.mubr.f32.mxu0 0.0
    %348 = vmatmul.mubr.f32.gmra.mrb[0].mxu0 %v56
    %v349 = vpop.f32.mrb[0].mxu0
    %v350 = vadd.f32 0.0, %v349
    %v351 = vpop.f32.mrb[0].mxu0
    %352 = vmatprep.mubr.f32.mxu0 0.0
    %353 = vmatmul.mubr.f32.gmra.mrb[0].mxu0 %v59
    %v354 = vpop.f32.mrb[0].mxu0
    %v355 = vadd.f32 0.0, %v354
    %v356 = vpop.f32.mrb[0].mxu0
    %357 = vmatprep.mubr.f32.mxu0 0.0
    %358 = vmatmul.mubr.f32.gmra.mrb[0].mxu0 %v62
    %v359 = vpop.f32.mrb[0].mxu0
    %v360 = vadd.f32 0.0, %v359
    %v361 = vpop.f32.mrb[0].mxu0
    %362 = vmatprep.mubr.f32.mxu0 0.0
    %363 = vmatmul.mubr.f32.gmra.mrb[0].mxu0 %v65
    %v364 = vpop.f32.mrb[0].mxu0
    %v365 = vadd.f32 0.0, %v364
    %v366 = vpop.f32.mrb[0].mxu0
    %367 = vmatprep.mubr.f32.mxu0 0.0
    %368 = vmatmul.mubr.f32.gmra.mrb[0].mxu0 %v68
    %v369 = vpop.f32.mrb[0].mxu0
    %v370 = vadd.f32 0.0, %v369
    %v371 = vpop.f32.mrb[0].mxu0
    %372 = vmatprep.mubr.f32.mxu0 0.0
    %373 = vmatmul.mubr.f32.gmra.mrb[0].mxu0 %v71
    %v374 = vpop.f32.mrb[0].mxu0
    %v375 = vadd.f32 0.0, %v374
    %v376 = vpop.f32.mrb[0].mxu0
    %377 = vmatprep.mubr.f32.mxu0 0.0
    %378 = vmatmul.mubr.f32.gmra.mrb[0].mxu0 %v74
    %v379 = vpop.f32.mrb[0].mxu0
    %v380 = vadd.f32 0.0, %v379
    %v381 = vpop.f32.mrb[0].mxu0
    %382 = vmatprep.mubr.f32.mxu0 0.0
    %383 = vmatmul.mubr.f32.gmra.mrb[0].mxu0 %v77
    %v384 = vpop.f32.mrb[0].mxu0
    %v385 = vadd.f32 0.0, %v384
    %v386 = vpop.f32.mrb[0].mxu0
    %387 = vdwg.mxu0
    %s388 = scalar_lea.vmem [#allocation2], 128
    %389 = vst [vmem:[%s388] sm:$0xff] %v310
    %390 = vst [vmem:[%s388 + $0x8] sm:$0xff] %v315
    %391 = vst [vmem:[%s388 + $0x10] sm:$0xff] %v320
    %392 = vst [vmem:[%s388 + $0x18] sm:$0xff] %v325
    %393 = vst [vmem:[%s388 + $0x20] sm:$0xff] %v330
    %394 = vst [vmem:[%s388 + $0x28] sm:$0xff] %v335
    %395 = vst [vmem:[%s388 + $0x30] sm:$0xff] %v340
    %396 = vst [vmem:[%s388 + $0x38] sm:$0xff] %v345
    %397 = vst [vmem:[%s388 + $0x40] sm:$0xff] %v350
    %398 = vst [vmem:[%s388 + $0x48] sm:$0xff] %v355
    %399 = vst [vmem:[%s388 + $0x50] sm:$0xff] %v360
    %400 = vst [vmem:[%s388 + $0x58] sm:$0xff] %v365
    %401 = vst [vmem:[%s388 + $0x60] sm:$0xff] %v370
    %402 = vst [vmem:[%s388 + $0x68] sm:$0xff] %v375
    %403 = vst [vmem:[%s388 + $0x70] sm:$0xff] %v380
    %404 = vst [vmem:[%s388 + $0x78] sm:$0xff] %v385
    %s405 = scalar_lea.vmem %s0, 32
    %v406 = vld [vmem:[%s405] sm:$0xff]
    %v407 = vld [vmem:[%s405 + $0x8] sm:$0xff]
    %408 = vmatprep.subr.mxu0 0.0
    %409 = vmatpush1.msra.mxu0 %v406
    %410 = vmatprep.subr.mxu0 0.0
    %411 = vmatpush1.msra.mxu0 %v407
    %412 = vmatprep.subr.mxu0 0.0
    %413 = vmatpush1.msra.mxu0 0.0
    %414 = vmatprep.subr.mxu0 0.0
    %415 = vmatpush1.msra.mxu0 0.0
    %416 = vmatprep.subr.mxu0 0.0
    %417 = vmatpush1.msra.mxu0 0.0
    %418 = vmatprep.subr.mxu0 0.0
    %419 = vmatpush1.msra.mxu0 0.0
    %420 = vmatprep.subr.mxu0 0.0
    %421 = vmatpush1.msra.mxu0 0.0
    %422 = vmatprep.subr.mxu0 0.0
    %423 = vmatpush1.msra.mxu0 0.0
    %424 = vmatprep.subr.mxu0 0.0
    %425 = vmatpush1.msra.mxu0 0.0
    %426 = vmatprep.subr.mxu0 0.0
    %427 = vmatpush1.msra.mxu0 0.0
    %428 = vmatprep.subr.mxu0 0.0
    %429 = vmatpush1.msra.mxu0 0.0
    %430 = vmatprep.subr.mxu0 0.0
    %431 = vmatpush1.msra.mxu0 0.0
    %432 = vmatprep.subr.mxu0 0.0
    %433 = vmatpush1.msra.mxu0 0.0
    %434 = vmatprep.subr.mxu0 0.0
    %435 = vmatpush1.msra.mxu0 0.0
    %436 = vmatprep.subr.mxu0 0.0
    %437 = vmatpush1.msra.mxu0 0.0
    %438 = vmatprep.subr.mxu0 0.0
    %439 = vmatpush1.msra.mxu0 0.0
    %440 = vmatprep.subr.mxu0 0.0
    %441 = vmatpush1.msra.mxu0 0.0
    %442 = vmatprep.subr.mxu0 0.0
    %443 = vmatpush1.msra.mxu0 0.0
    %444 = vmatprep.subr.mxu0 0.0
    %445 = vmatpush1.msra.mxu0 0.0
    %446 = vmatprep.subr.mxu0 0.0
    %447 = vmatpush1.msra.mxu0 0.0
    %448 = vmatprep.subr.mxu0 0.0
    %449 = vmatpush1.msra.mxu0 0.0
    %450 = vmatprep.subr.mxu0 0.0
    %451 = vmatpush1.msra.mxu0 0.0
    %452 = vmatprep.subr.mxu0 0.0
    %453 = vmatpush1.msra.mxu0 0.0
    %454 = vmatprep.subr.mxu0 0.0
    %455 = vmatpush1.msra.mxu0 0.0
    %456 = vmatprep.subr.mxu0 0.0
    %457 = vmatpush1.msra.mxu0 0.0
    %458 = vmatprep.subr.mxu0 0.0
    %459 = vmatpush1.msra.mxu0 0.0
    %460 = vmatprep.subr.mxu0 0.0
    %461 = vmatpush1.msra.mxu0 0.0
    %462 = vmatprep.subr.mxu0 0.0
    %463 = vmatpush1.msra.mxu0 0.0
    %464 = vmatprep.subr.mxu0 0.0
    %465 = vmatpush1.msra.mxu0 0.0
    %466 = vmatprep.subr.mxu0 0.0
    %467 = vmatpush1.msra.mxu0 0.0
    %468 = vmatprep.subr.mxu0 0.0
    %469 = vmatpush1.msra.mxu0 0.0
    %470 = vmatprep.subr.mxu0 0.0
    %471 = vmatpush1.msra.mxu0 0.0
    %472 = vmatprep.mubr.f32.mxu0 0.0
    %473 = vmatmul.mubr.f32.gmra.mrb[0].mxu0 %v32
    %v474 = vpop.f32.mrb[0].mxu0
    %v475 = vadd.f32 0.0, %v474
    %v476 = vpop.f32.mrb[0].mxu0
    %477 = vmatprep.mubr.f32.mxu0 0.0
    %478 = vmatmul.mubr.f32.gmra.mrb[0].mxu0 %v35
    %v479 = vpop.f32.mrb[0].mxu0
    %v480 = vadd.f32 0.0, %v479
    %v481 = vpop.f32.mrb[0].mxu0
    %482 = vmatprep.mubr.f32.mxu0 0.0
    %483 = vmatmul.mubr.f32.gmra.mrb[0].mxu0 %v38
    %v484 = vpop.f32.mrb[0].mxu0
    %v485 = vadd.f32 0.0, %v484
    %v486 = vpop.f32.mrb[0].mxu0
    %487 = vmatprep.mubr.f32.mxu0 0.0
    %488 = vmatmul.mubr.f32.gmra.mrb[0].mxu0 %v41
    %v489 = vpop.f32.mrb[0].mxu0
    %v490 = vadd.f32 0.0, %v489
    %v491 = vpop.f32.mrb[0].mxu0
    %492 = vmatprep.mubr.f32.mxu0 0.0
    %493 = vmatmul.mubr.f32.gmra.mrb[0].mxu0 %v44
    %v494 = vpop.f32.mrb[0].mxu0
    %v495 = vadd.f32 0.0, %v494
    %v496 = vpop.f32.mrb[0].mxu0
    %497 = vmatprep.mubr.f32.mxu0 0.0
    %498 = vmatmul.mubr.f32.gmra.mrb[0].mxu0 %v47
    %v499 = vpop.f32.mrb[0].mxu0
    %v500 = vadd.f32 0.0, %v499
    %v501 = vpop.f32.mrb[0].mxu0
    %502 = vmatprep.mubr.f32.mxu0 0.0
    %503 = vmatmul.mubr.f32.gmra.mrb[0].mxu0 %v50
    %v504 = vpop.f32.mrb[0].mxu0
    %v505 = vadd.f32 0.0, %v504
    %v506 = vpop.f32.mrb[0].mxu0
    %507 = vmatprep.mubr.f32.mxu0 0.0
    %508 = vmatmul.mubr.f32.gmra.mrb[0].mxu0 %v53
    %v509 = vpop.f32.mrb[0].mxu0
    %v510 = vadd.f32 0.0, %v509
    %v511 = vpop.f32.mrb[0].mxu0
    %512 = vmatprep.mubr.f32.mxu0 0.0
    %513 = vmatmul.mubr.f32.gmra.mrb[0].mxu0 %v56
    %v514 = vpop.f32.mrb[0].mxu0
    %v515 = vadd.f32 0.0, %v514
    %v516 = vpop.f32.mrb[0].mxu0
    %517 = vmatprep.mubr.f32.mxu0 0.0
    %518 = vmatmul.mubr.f32.gmra.mrb[0].mxu0 %v59
    %v519 = vpop.f32.mrb[0].mxu0
    %v520 = vadd.f32 0.0, %v519
    %v521 = vpop.f32.mrb[0].mxu0
    %522 = vmatprep.mubr.f32.mxu0 0.0
    %523 = vmatmul.mubr.f32.gmra.mrb[0].mxu0 %v62
    %v524 = vpop.f32.mrb[0].mxu0
    %v525 = vadd.f32 0.0, %v524
    %v526 = vpop.f32.mrb[0].mxu0
    %527 = vmatprep.mubr.f32.mxu0 0.0
    %528 = vmatmul.mubr.f32.gmra.mrb[0].mxu0 %v65
    %v529 = vpop.f32.mrb[0].mxu0
    %v530 = vadd.f32 0.0, %v529
    %v531 = vpop.f32.mrb[0].mxu0
    %532 = vmatprep.mubr.f32.mxu0 0.0
    %533 = vmatmul.mubr.f32.gmra.mrb[0].mxu0 %v68
    %v534 = vpop.f32.mrb[0].mxu0
    %v535 = vadd.f32 0.0, %v534
    %v536 = vpop.f32.mrb[0].mxu0
    %537 = vmatprep.mubr.f32.mxu0 0.0
    %538 = vmatmul.mubr.f32.gmra.mrb[0].mxu0 %v71
    %v539 = vpop.f32.mrb[0].mxu0
    %v540 = vadd.f32 0.0, %v539
    %v541 = vpop.f32.mrb[0].mxu0
    %542 = vmatprep.mubr.f32.mxu0 0.0
    %543 = vmatmul.mubr.f32.gmra.mrb[0].mxu0 %v74
    %v544 = vpop.f32.mrb[0].mxu0
    %v545 = vadd.f32 0.0, %v544
    %v546 = vpop.f32.mrb[0].mxu0
    %547 = vmatprep.mubr.f32.mxu0 0.0
    %548 = vmatmul.mubr.f32.gmra.mrb[0].mxu0 %v77
    %v549 = vpop.f32.mrb[0].mxu0
    %v550 = vadd.f32 0.0, %v549
    %v551 = vpop.f32.mrb[0].mxu0
    %552 = vdwg.mxu0
    %s553 = scalar_lea.vmem [#allocation2], 256
    %554 = vst [vmem:[%s553] sm:$0xff] %v475
    %555 = vst [vmem:[%s553 + $0x8] sm:$0xff] %v480
    %556 = vst [vmem:[%s553 + $0x10] sm:$0xff] %v485
    %557 = vst [vmem:[%s553 + $0x18] sm:$0xff] %v490
    %558 = vst [vmem:[%s553 + $0x20] sm:$0xff] %v495
    %559 = vst [vmem:[%s553 + $0x28] sm:$0xff] %v500
    %560 = vst [vmem:[%s553 + $0x30] sm:$0xff] %v505
    %561 = vst [vmem:[%s553 + $0x38] sm:$0xff] %v510
    %562 = vst [vmem:[%s553 + $0x40] sm:$0xff] %v515
    %563 = vst [vmem:[%s553 + $0x48] sm:$0xff] %v520
    %564 = vst [vmem:[%s553 + $0x50] sm:$0xff] %v525
    %565 = vst [vmem:[%s553 + $0x58] sm:$0xff] %v530
    %566 = vst [vmem:[%s553 + $0x60] sm:$0xff] %v535
    %567 = vst [vmem:[%s553 + $0x68] sm:$0xff] %v540
    %568 = vst [vmem:[%s553 + $0x70] sm:$0xff] %v545
    %569 = vst [vmem:[%s553 + $0x78] sm:$0xff] %v550
    %s570 = scalar_lea.vmem %s0, 48
    %v571 = vld [vmem:[%s570] sm:$0xff]
    %v572 = vld [vmem:[%s570 + $0x8] sm:$0xff]
    %573 = vmatprep.subr.mxu0 0.0
    %574 = vmatpush1.msra.mxu0 %v571
    %575 = vmatprep.subr.mxu0 0.0
    %576 = vmatpush1.msra.mxu0 %v572
    %577 = vmatprep.subr.mxu0 0.0
    %578 = vmatpush1.msra.mxu0 0.0
    %579 = vmatprep.subr.mxu0 0.0
    %580 = vmatpush1.msra.mxu0 0.0
    %581 = vmatprep.subr.mxu0 0.0
    %582 = vmatpush1.msra.mxu0 0.0
    %583 = vmatprep.subr.mxu0 0.0
    %584 = vmatpush1.msra.mxu0 0.0
    %585 = vmatprep.subr.mxu0 0.0
    %586 = vmatpush1.msra.mxu0 0.0
    %587 = vmatprep.subr.mxu0 0.0
    %588 = vmatpush1.msra.mxu0 0.0
    %589 = vmatprep.subr.mxu0 0.0
    %590 = vmatpush1.msra.mxu0 0.0
    %591 = vmatprep.subr.mxu0 0.0
    %592 = vmatpush1.msra.mxu0 0.0
    %593 = vmatprep.subr.mxu0 0.0
    %594 = vmatpush1.msra.mxu0 0.0
    %595 = vmatprep.subr.mxu0 0.0
    %596 = vmatpush1.msra.mxu0 0.0
    %597 = vmatprep.subr.mxu0 0.0
    %598 = vmatpush1.msra.mxu0 0.0
    %599 = vmatprep.subr.mxu0 0.0
    %600 = vmatpush1.msra.mxu0 0.0
    %601 = vmatprep.subr.mxu0 0.0
    %602 = vmatpush1.msra.mxu0 0.0
    %603 = vmatprep.subr.mxu0 0.0
    %604 = vmatpush1.msra.mxu0 0.0
    %605 = vmatprep.subr.mxu0 0.0
    %606 = vmatpush1.msra.mxu0 0.0
    %607 = vmatprep.subr.mxu0 0.0
    %608 = vmatpush1.msra.mxu0 0.0
    %609 = vmatprep.subr.mxu0 0.0
    %610 = vmatpush1.msra.mxu0 0.0
    %611 = vmatprep.subr.mxu0 0.0
    %612 = vmatpush1.msra.mxu0 0.0
    %613 = vmatprep.subr.mxu0 0.0
    %614 = vmatpush1.msra.mxu0 0.0
    %615 = vmatprep.subr.mxu0 0.0
    %616 = vmatpush1.msra.mxu0 0.0
    %617 = vmatprep.subr.mxu0 0.0
    %618 = vmatpush1.msra.mxu0 0.0
    %619 = vmatprep.subr.mxu0 0.0
    %620 = vmatpush1.msra.mxu0 0.0
    %621 = vmatprep.subr.mxu0 0.0
    %622 = vmatpush1.msra.mxu0 0.0
    %623 = vmatprep.subr.mxu0 0.0
    %624 = vmatpush1.msra.mxu0 0.0
    %625 = vmatprep.subr.mxu0 0.0
    %626 = vmatpush1.msra.mxu0 0.0
    %627 = vmatprep.subr.mxu0 0.0
    %628 = vmatpush1.msra.mxu0 0.0
    %629 = vmatprep.subr.mxu0 0.0
    %630 = vmatpush1.msra.mxu0 0.0
    %631 = vmatprep.subr.mxu0 0.0
    %632 = vmatpush1.msra.mxu0 0.0
    %633 = vmatprep.subr.mxu0 0.0
    %634 = vmatpush1.msra.mxu0 0.0
    %635 = vmatprep.subr.mxu0 0.0
    %636 = vmatpush1.msra.mxu0 0.0
    %637 = vmatprep.mubr.f32.mxu0 0.0
    %638 = vmatmul.mubr.f32.gmra.mrb[0].mxu0 %v32
    %v639 = vpop.f32.mrb[0].mxu0
    %v640 = vadd.f32 0.0, %v639
    %v641 = vpop.f32.mrb[0].mxu0
    %642 = vmatprep.mubr.f32.mxu0 0.0
    %643 = vmatmul.mubr.f32.gmra.mrb[0].mxu0 %v35
    %v644 = vpop.f32.mrb[0].mxu0
    %v645 = vadd.f32 0.0, %v644
    %v646 = vpop.f32.mrb[0].mxu0
    %647 = vmatprep.mubr.f32.mxu0 0.0
    %648 = vmatmul.mubr.f32.gmra.mrb[0].mxu0 %v38
    %v649 = vpop.f32.mrb[0].mxu0
    %v650 = vadd.f32 0.0, %v649
    %v651 = vpop.f32.mrb[0].mxu0
    %652 = vmatprep.mubr.f32.mxu0 0.0
    %653 = vmatmul.mubr.f32.gmra.mrb[0].mxu0 %v41
    %v654 = vpop.f32.mrb[0].mxu0
    %v655 = vadd.f32 0.0, %v654
    %v656 = vpop.f32.mrb[0].mxu0
    %657 = vmatprep.mubr.f32.mxu0 0.0
    %658 = vmatmul.mubr.f32.gmra.mrb[0].mxu0 %v44
    %v659 = vpop.f32.mrb[0].mxu0
    %v660 = vadd.f32 0.0, %v659
    %v661 = vpop.f32.mrb[0].mxu0
    %662 = vmatprep.mubr.f32.mxu0 0.0
    %663 = vmatmul.mubr.f32.gmra.mrb[0].mxu0 %v47
    %v664 = vpop.f32.mrb[0].mxu0
    %v665 = vadd.f32 0.0, %v664
    %v666 = vpop.f32.mrb[0].mxu0
    %667 = vmatprep.mubr.f32.mxu0 0.0
    %668 = vmatmul.mubr.f32.gmra.mrb[0].mxu0 %v50
    %v669 = vpop.f32.mrb[0].mxu0
    %v670 = vadd.f32 0.0, %v669
    %v671 = vpop.f32.mrb[0].mxu0
    %672 = vmatprep.mubr.f32.mxu0 0.0
    %673 = vmatmul.mubr.f32.gmra.mrb[0].mxu0 %v53
    %v674 = vpop.f32.mrb[0].mxu0
    %v675 = vadd.f32 0.0, %v674
    %v676 = vpop.f32.mrb[0].mxu0
    %677 = vmatprep.mubr.f32.mxu0 0.0
    %678 = vmatmul.mubr.f32.gmra.mrb[0].mxu0 %v56
    %v679 = vpop.f32.mrb[0].mxu0
    %v680 = vadd.f32 0.0, %v679
    %v681 = vpop.f32.mrb[0].mxu0
    %682 = vmatprep.mubr.f32.mxu0 0.0
    %683 = vmatmul.mubr.f32.gmra.mrb[0].mxu0 %v59
    %v684 = vpop.f32.mrb[0].mxu0
    %v685 = vadd.f32 0.0, %v684
    %v686 = vpop.f32.mrb[0].mxu0
    %687 = vmatprep.mubr.f32.mxu0 0.0
    %688 = vmatmul.mubr.f32.gmra.mrb[0].mxu0 %v62
    %v689 = vpop.f32.mrb[0].mxu0
    %v690 = vadd.f32 0.0, %v689
    %v691 = vpop.f32.mrb[0].mxu0
    %692 = vmatprep.mubr.f32.mxu0 0.0
    %693 = vmatmul.mubr.f32.gmra.mrb[0].mxu0 %v65
    %v694 = vpop.f32.mrb[0].mxu0
    %v695 = vadd.f32 0.0, %v694
    %v696 = vpop.f32.mrb[0].mxu0
    %697 = vmatprep.mubr.f32.mxu0 0.0
    %698 = vmatmul.mubr.f32.gmra.mrb[0].mxu0 %v68
    %v699 = vpop.f32.mrb[0].mxu0
    %v700 = vadd.f32 0.0, %v699
    %v701 = vpop.f32.mrb[0].mxu0
    %702 = vmatprep.mubr.f32.mxu0 0.0
    %703 = vmatmul.mubr.f32.gmra.mrb[0].mxu0 %v71
    %v704 = vpop.f32.mrb[0].mxu0
    %v705 = vadd.f32 0.0, %v704
    %v706 = vpop.f32.mrb[0].mxu0
    %707 = vmatprep.mubr.f32.mxu0 0.0
    %708 = vmatmul.mubr.f32.gmra.mrb[0].mxu0 %v74
    %v709 = vpop.f32.mrb[0].mxu0
    %v710 = vadd.f32 0.0, %v709
    %v711 = vpop.f32.mrb[0].mxu0
    %712 = vmatprep.mubr.f32.mxu0 0.0
    %713 = vmatmul.mubr.f32.gmra.mrb[0].mxu0 %v77
    %v714 = vpop.f32.mrb[0].mxu0
    %v715 = vadd.f32 0.0, %v714
    %v716 = vpop.f32.mrb[0].mxu0
    %717 = vdwg.mxu0
    %s718 = scalar_lea.vmem [#allocation2], 384
    %719 = vst [vmem:[%s718] sm:$0xff] %v640
    %720 = vst [vmem:[%s718 + $0x8] sm:$0xff] %v645
    %721 = vst [vmem:[%s718 + $0x10] sm:$0xff] %v650
    %722 = vst [vmem:[%s718 + $0x18] sm:$0xff] %v655
    %723 = vst [vmem:[%s718 + $0x20] sm:$0xff] %v660
    %724 = vst [vmem:[%s718 + $0x28] sm:$0xff] %v665
    %725 = vst [vmem:[%s718 + $0x30] sm:$0xff] %v670
    %726 = vst [vmem:[%s718 + $0x38] sm:$0xff] %v675
    %727 = vst [vmem:[%s718 + $0x40] sm:$0xff] %v680
    %728 = vst [vmem:[%s718 + $0x48] sm:$0xff] %v685
    %729 = vst [vmem:[%s718 + $0x50] sm:$0xff] %v690
    %730 = vst [vmem:[%s718 + $0x58] sm:$0xff] %v695
    %731 = vst [vmem:[%s718 + $0x60] sm:$0xff] %v700
    %732 = vst [vmem:[%s718 + $0x68] sm:$0xff] %v705
    %733 = vst [vmem:[%s718 + $0x70] sm:$0xff] %v710
    %734 = vst [vmem:[%s718 + $0x78] sm:$0xff] %v715
    %s735 = scalar_lea.vmem %s0, 64
    %v736 = vld [vmem:[%s735] sm:$0xff]
    %v737 = vld [vmem:[%s735 + $0x8] sm:$0xff]
    %738 = vmatprep.subr.mxu0 0.0
    %739 = vmatpush1.msra.mxu0 %v736
    %740 = vmatprep.subr.mxu0 0.0
    %741 = vmatpush1.msra.mxu0 %v737
    %742 = vmatprep.subr.mxu0 0.0
    %743 = vmatpush1.msra.mxu0 0.0
    %744 = vmatprep.subr.mxu0 0.0
    %745 = vmatpush1.msra.mxu0 0.0
    %746 = vmatprep.subr.mxu0 0.0
    %747 = vmatpush1.msra.mxu0 0.0
    %748 = vmatprep.subr.mxu0 0.0
    %749 = vmatpush1.msra.mxu0 0.0
    %750 = vmatprep.subr.mxu0 0.0
    %751 = vmatpush1.msra.mxu0 0.0
    %752 = vmatprep.subr.mxu0 0.0
    %753 = vmatpush1.msra.mxu0 0.0
    %754 = vmatprep.subr.mxu0 0.0
    %755 = vmatpush1.msra.mxu0 0.0
    %756 = vmatprep.subr.mxu0 0.0
    %757 = vmatpush1.msra.mxu0 0.0
    %758 = vmatprep.subr.mxu0 0.0
    %759 = vmatpush1.msra.mxu0 0.0
    %760 = vmatprep.subr.mxu0 0.0
    %761 = vmatpush1.msra.mxu0 0.0
    %762 = vmatprep.subr.mxu0 0.0
    %763 = vmatpush1.msra.mxu0 0.0
    %764 = vmatprep.subr.mxu0 0.0
    %765 = vmatpush1.msra.mxu0 0.0
    %766 = vmatprep.subr.mxu0 0.0
    %767 = vmatpush1.msra.mxu0 0.0
    %768 = vmatprep.subr.mxu0 0.0
    %769 = vmatpush1.msra.mxu0 0.0
    %770 = vmatprep.subr.mxu0 0.0
    %771 = vmatpush1.msra.mxu0 0.0
    %772 = vmatprep.subr.mxu0 0.0
    %773 = vmatpush1.msra.mxu0 0.0
    %774 = vmatprep.subr.mxu0 0.0
    %775 = vmatpush1.msra.mxu0 0.0
    %776 = vmatprep.subr.mxu0 0.0
    %777 = vmatpush1.msra.mxu0 0.0
    %778 = vmatprep.subr.mxu0 0.0
    %779 = vmatpush1.msra.mxu0 0.0
    %780 = vmatprep.subr.mxu0 0.0
    %781 = vmatpush1.msra.mxu0 0.0
    %782 = vmatprep.subr.mxu0 0.0
    %783 = vmatpush1.msra.mxu0 0.0
    %784 = vmatprep.subr.mxu0 0.0
    %785 = vmatpush1.msra.mxu0 0.0
    %786 = vmatprep.subr.mxu0 0.0
    %787 = vmatpush1.msra.mxu0 0.0
    %788 = vmatprep.subr.mxu0 0.0
    %789 = vmatpush1.msra.mxu0 0.0
    %790 = vmatprep.subr.mxu0 0.0
    %791 = vmatpush1.msra.mxu0 0.0
    %792 = vmatprep.subr.mxu0 0.0
    %793 = vmatpush1.msra.mxu0 0.0
    %794 = vmatprep.subr.mxu0 0.0
    %795 = vmatpush1.msra.mxu0 0.0
    %796 = vmatprep.subr.mxu0 0.0
    %797 = vmatpush1.msra.mxu0 0.0
    %798 = vmatprep.subr.mxu0 0.0
    %799 = vmatpush1.msra.mxu0 0.0
    %800 = vmatprep.subr.mxu0 0.0
    %801 = vmatpush1.msra.mxu0 0.0
    %802 = vmatprep.mubr.f32.mxu0 0.0
    %803 = vmatmul.mubr.f32.gmra.mrb[0].mxu0 %v32
    %v804 = vpop.f32.mrb[0].mxu0
    %v805 = vadd.f32 0.0, %v804
    %v806 = vpop.f32.mrb[0].mxu0
    %807 = vmatprep.mubr.f32.mxu0 0.0
    %808 = vmatmul.mubr.f32.gmra.mrb[0].mxu0 %v35
    %v809 = vpop.f32.mrb[0].mxu0
    %v810 = vadd.f32 0.0, %v809
    %v811 = vpop.f32.mrb[0].mxu0
    %812 = vmatprep.mubr.f32.mxu0 0.0
    %813 = vmatmul.mubr.f32.gmra.mrb[0].mxu0 %v38
    %v814 = vpop.f32.mrb[0].mxu0
    %v815 = vadd.f32 0.0, %v814
    %v816 = vpop.f32.mrb[0].mxu0
    %817 = vmatprep.mubr.f32.mxu0 0.0
    %818 = vmatmul.mubr.f32.gmra.mrb[0].mxu0 %v41
    %v819 = vpop.f32.mrb[0].mxu0
    %v820 = vadd.f32 0.0, %v819
    %v821 = vpop.f32.mrb[0].mxu0
    %822 = vmatprep.mubr.f32.mxu0 0.0
    %823 = vmatmul.mubr.f32.gmra.mrb[0].mxu0 %v44
    %v824 = vpop.f32.mrb[0].mxu0
    %v825 = vadd.f32 0.0, %v824
    %v826 = vpop.f32.mrb[0].mxu0
    %827 = vmatprep.mubr.f32.mxu0 0.0
    %828 = vmatmul.mubr.f32.gmra.mrb[0].mxu0 %v47
    %v829 = vpop.f32.mrb[0].mxu0
    %v830 = vadd.f32 0.0, %v829
    %v831 = vpop.f32.mrb[0].mxu0
    %832 = vmatprep.mubr.f32.mxu0 0.0
    %833 = vmatmul.mubr.f32.gmra.mrb[0].mxu0 %v50
    %v834 = vpop.f32.mrb[0].mxu0
    %v835 = vadd.f32 0.0, %v834
    %v836 = vpop.f32.mrb[0].mxu0
    %837 = vmatprep.mubr.f32.mxu0 0.0
    %838 = vmatmul.mubr.f32.gmra.mrb[0].mxu0 %v53
    %v839 = vpop.f32.mrb[0].mxu0
    %v840 = vadd.f32 0.0, %v839
    %v841 = vpop.f32.mrb[0].mxu0
    %842 = vmatprep.mubr.f32.mxu0 0.0
    %843 = vmatmul.mubr.f32.gmra.mrb[0].mxu0 %v56
    %v844 = vpop.f32.mrb[0].mxu0
    %v845 = vadd.f32 0.0, %v844
    %v846 = vpop.f32.mrb[0].mxu0
    %847 = vmatprep.mubr.f32.mxu0 0.0
    %848 = vmatmul.mubr.f32.gmra.mrb[0].mxu0 %v59
    %v849 = vpop.f32.mrb[0].mxu0
    %v850 = vadd.f32 0.0, %v849
    %v851 = vpop.f32.mrb[0].mxu0
    %852 = vmatprep.mubr.f32.mxu0 0.0
    %853 = vmatmul.mubr.f32.gmra.mrb[0].mxu0 %v62
    %v854 = vpop.f32.mrb[0].mxu0
    %v855 = vadd.f32 0.0, %v854
    %v856 = vpop.f32.mrb[0].mxu0
    %857 = vmatprep.mubr.f32.mxu0 0.0
    %858 = vmatmul.mubr.f32.gmra.mrb[0].mxu0 %v65
    %v859 = vpop.f32.mrb[0].mxu0
    %v860 = vadd.f32 0.0, %v859
    %v861 = vpop.f32.mrb[0].mxu0
    %862 = vmatprep.mubr.f32.mxu0 0.0
    %863 = vmatmul.mubr.f32.gmra.mrb[0].mxu0 %v68
    %v864 = vpop.f32.mrb[0].mxu0
    %v865 = vadd.f32 0.0, %v864
    %v866 = vpop.f32.mrb[0].mxu0
    %867 = vmatprep.mubr.f32.mxu0 0.0
    %868 = vmatmul.mubr.f32.gmra.mrb[0].mxu0 %v71
    %v869 = vpop.f32.mrb[0].mxu0
    %v870 = vadd.f32 0.0, %v869
    %v871 = vpop.f32.mrb[0].mxu0
    %872 = vmatprep.mubr.f32.mxu0 0.0
    %873 = vmatmul.mubr.f32.gmra.mrb[0].mxu0 %v74
    %v874 = vpop.f32.mrb[0].mxu0
    %v875 = vadd.f32 0.0, %v874
    %v876 = vpop.f32.mrb[0].mxu0
    %877 = vmatprep.mubr.f32.mxu0 0.0
    %878 = vmatmul.mubr.f32.gmra.mrb[0].mxu0 %v77
    %v879 = vpop.f32.mrb[0].mxu0
    %v880 = vadd.f32 0.0, %v879
    %v881 = vpop.f32.mrb[0].mxu0
    %882 = vdwg.mxu0
    %s883 = scalar_lea.vmem [#allocation2], 512
    %884 = vst [vmem:[%s883] sm:$0xff] %v805
    %885 = vst [vmem:[%s883 + $0x8] sm:$0xff] %v810
    %886 = vst [vmem:[%s883 + $0x10] sm:$0xff] %v815
    %887 = vst [vmem:[%s883 + $0x18] sm:$0xff] %v820
    %888 = vst [vmem:[%s883 + $0x20] sm:$0xff] %v825
    %889 = vst [vmem:[%s883 + $0x28] sm:$0xff] %v830
    %890 = vst [vmem:[%s883 + $0x30] sm:$0xff] %v835
    %891 = vst [vmem:[%s883 + $0x38] sm:$0xff] %v840
    %892 = vst [vmem:[%s883 + $0x40] sm:$0xff] %v845
    %893 = vst [vmem:[%s883 + $0x48] sm:$0xff] %v850
    %894 = vst [vmem:[%s883 + $0x50] sm:$0xff] %v855
    %895 = vst [vmem:[%s883 + $0x58] sm:$0xff] %v860
    %896 = vst [vmem:[%s883 + $0x60] sm:$0xff] %v865
    %897 = vst [vmem:[%s883 + $0x68] sm:$0xff] %v870
    %898 = vst [vmem:[%s883 + $0x70] sm:$0xff] %v875
    %899 = vst [vmem:[%s883 + $0x78] sm:$0xff] %v880
    %s900 = scalar_lea.vmem %s0, 80
    %v901 = vld [vmem:[%s900] sm:$0xff]
    %v902 = vld [vmem:[%s900 + $0x8] sm:$0xff]
    %903 = vmatprep.subr.mxu0 0.0
    %904 = vmatpush1.msra.mxu0 %v901
    %905 = vmatprep.subr.mxu0 0.0
    %906 = vmatpush1.msra.mxu0 %v902
    %907 = vmatprep.subr.mxu0 0.0
    %908 = vmatpush1.msra.mxu0 0.0
    %909 = vmatprep.subr.mxu0 0.0
    %910 = vmatpush1.msra.mxu0 0.0
    %911 = vmatprep.subr.mxu0 0.0
    %912 = vmatpush1.msra.mxu0 0.0
    %913 = vmatprep.subr.mxu0 0.0
    %914 = vmatpush1.msra.mxu0 0.0
    %915 = vmatprep.subr.mxu0 0.0
    %916 = vmatpush1.msra.mxu0 0.0
    %917 = vmatprep.subr.mxu0 0.0
    %918 = vmatpush1.msra.mxu0 0.0
    %919 = vmatprep.subr.mxu0 0.0
    %920 = vmatpush1.msra.mxu0 0.0
    %921 = vmatprep.subr.mxu0 0.0
    %922 = vmatpush1.msra.mxu0 0.0
    %923 = vmatprep.subr.mxu0 0.0
    %924 = vmatpush1.msra.mxu0 0.0
    %925 = vmatprep.subr.mxu0 0.0
    %926 = vmatpush1.msra.mxu0 0.0
    %927 = vmatprep.subr.mxu0 0.0
    %928 = vmatpush1.msra.mxu0 0.0
    %929 = vmatprep.subr.mxu0 0.0
    %930 = vmatpush1.msra.mxu0 0.0
    %931 = vmatprep.subr.mxu0 0.0
    %932 = vmatpush1.msra.mxu0 0.0
    %933 = vmatprep.subr.mxu0 0.0
    %934 = vmatpush1.msra.mxu0 0.0
    %935 = vmatprep.subr.mxu0 0.0
    %936 = vmatpush1.msra.mxu0 0.0
    %937 = vmatprep.subr.mxu0 0.0
    %938 = vmatpush1.msra.mxu0 0.0
    %939 = vmatprep.subr.mxu0 0.0
    %940 = vmatpush1.msra.mxu0 0.0
    %941 = vmatprep.subr.mxu0 0.0
    %942 = vmatpush1.msra.mxu0 0.0
    %943 = vmatprep.subr.mxu0 0.0
    %944 = vmatpush1.msra.mxu0 0.0
    %945 = vmatprep.subr.mxu0 0.0
    %946 = vmatpush1.msra.mxu0 0.0
    %947 = vmatprep.subr.mxu0 0.0
    %948 = vmatpush1.msra.mxu0 0.0
    %949 = vmatprep.subr.mxu0 0.0
    %950 = vmatpush1.msra.mxu0 0.0
    %951 = vmatprep.subr.mxu0 0.0
    %952 = vmatpush1.msra.mxu0 0.0
    %953 = vmatprep.subr.mxu0 0.0
    %954 = vmatpush1.msra.mxu0 0.0
    %955 = vmatprep.subr.mxu0 0.0
    %956 = vmatpush1.msra.mxu0 0.0
    %957 = vmatprep.subr.mxu0 0.0
    %958 = vmatpush1.msra.mxu0 0.0
    %959 = vmatprep.subr.mxu0 0.0
    %960 = vmatpush1.msra.mxu0 0.0
    %961 = vmatprep.subr.mxu0 0.0
    %962 = vmatpush1.msra.mxu0 0.0
    %963 = vmatprep.subr.mxu0 0.0
    %964 = vmatpush1.msra.mxu0 0.0
    %965 = vmatprep.subr.mxu0 0.0
    %966 = vmatpush1.msra.mxu0 0.0
    %967 = vmatprep.mubr.f32.mxu0 0.0
    %968 = vmatmul.mubr.f32.gmra.mrb[0].mxu0 %v32
    %v969 = vpop.f32.mrb[0].mxu0
    %v970 = vadd.f32 0.0, %v969
    %v971 = vpop.f32.mrb[0].mxu0
    %972 = vmatprep.mubr.f32.mxu0 0.0
    %973 = vmatmul.mubr.f32.gmra.mrb[0].mxu0 %v35
    %v974 = vpop.f32.mrb[0].mxu0
    %v975 = vadd.f32 0.0, %v974
    %v976 = vpop.f32.mrb[0].mxu0
    %977 = vmatprep.mubr.f32.mxu0 0.0
    %978 = vmatmul.mubr.f32.gmra.mrb[0].mxu0 %v38
    %v979 = vpop.f32.mrb[0].mxu0
    %v980 = vadd.f32 0.0, %v979
    %v981 = vpop.f32.mrb[0].mxu0
    %982 = vmatprep.mubr.f32.mxu0 0.0
    %983 = vmatmul.mubr.f32.gmra.mrb[0].mxu0 %v41
    %v984 = vpop.f32.mrb[0].mxu0
    %v985 = vadd.f32 0.0, %v984
    %v986 = vpop.f32.mrb[0].mxu0
    %987 = vmatprep.mubr.f32.mxu0 0.0
    %988 = vmatmul.mubr.f32.gmra.mrb[0].mxu0 %v44
    %v989 = vpop.f32.mrb[0].mxu0
    %v990 = vadd.f32 0.0, %v989
    %v991 = vpop.f32.mrb[0].mxu0
    %992 = vmatprep.mubr.f32.mxu0 0.0
    %993 = vmatmul.mubr.f32.gmra.mrb[0].mxu0 %v47
    %v994 = vpop.f32.mrb[0].mxu0
    %v995 = vadd.f32 0.0, %v994
    %v996 = vpop.f32.mrb[0].mxu0
    %997 = vmatprep.mubr.f32.mxu0 0.0
    %998 = vmatmul.mubr.f32.gmra.mrb[0].mxu0 %v50
    %v999 = vpop.f32.mrb[0].mxu0
    %v1000 = vadd.f32 0.0, %v999
    %v1001 = vpop.f32.mrb[0].mxu0
    %1002 = vmatprep.mubr.f32.mxu0 0.0
    %1003 = vmatmul.mubr.f32.gmra.mrb[0].mxu0 %v53
    %v1004 = vpop.f32.mrb[0].mxu0
    %v1005 = vadd.f32 0.0, %v1004
    %v1006 = vpop.f32.mrb[0].mxu0
    %1007 = vmatprep.mubr.f32.mxu0 0.0
    %1008 = vmatmul.mubr.f32.gmra.mrb[0].mxu0 %v56
    %v1009 = vpop.f32.mrb[0].mxu0
    %v1010 = vadd.f32 0.0, %v1009
    %v1011 = vpop.f32.mrb[0].mxu0
    %1012 = vmatprep.mubr.f32.mxu0 0.0
    %1013 = vmatmul.mubr.f32.gmra.mrb[0].mxu0 %v59
    %v1014 = vpop.f32.mrb[0].mxu0
    %v1015 = vadd.f32 0.0, %v1014
    %v1016 = vpop.f32.mrb[0].mxu0
    %1017 = vmatprep.mubr.f32.mxu0 0.0
    %1018 = vmatmul.mubr.f32.gmra.mrb[0].mxu0 %v62
    %v1019 = vpop.f32.mrb[0].mxu0
    %v1020 = vadd.f32 0.0, %v1019
    %v1021 = vpop.f32.mrb[0].mxu0
    %1022 = vmatprep.mubr.f32.mxu0 0.0
    %1023 = vmatmul.mubr.f32.gmra.mrb[0].mxu0 %v65
    %v1024 = vpop.f32.mrb[0].mxu0
    %v1025 = vadd.f32 0.0, %v1024
    %v1026 = vpop.f32.mrb[0].mxu0
    %1027 = vmatprep.mubr.f32.mxu0 0.0
    %1028 = vmatmul.mubr.f32.gmra.mrb[0].mxu0 %v68
    %v1029 = vpop.f32.mrb[0].mxu0
    %v1030 = vadd.f32 0.0, %v1029
    %v1031 = vpop.f32.mrb[0].mxu0
    %1032 = vmatprep.mubr.f32.mxu0 0.0
    %1033 = vmatmul.mubr.f32.gmra.mrb[0].mxu0 %v71
    %v1034 = vpop.f32.mrb[0].mxu0
    %v1035 = vadd.f32 0.0, %v1034
    %v1036 = vpop.f32.mrb[0].mxu0
    %1037 = vmatprep.mubr.f32.mxu0 0.0
    %1038 = vmatmul.mubr.f32.gmra.mrb[0].mxu0 %v74
    %v1039 = vpop.f32.mrb[0].mxu0
    %v1040 = vadd.f32 0.0, %v1039
    %v1041 = vpop.f32.mrb[0].mxu0
    %1042 = vmatprep.mubr.f32.mxu0 0.0
    %1043 = vmatmul.mubr.f32.gmra.mrb[0].mxu0 %v77
    %v1044 = vpop.f32.mrb[0].mxu0
    %v1045 = vadd.f32 0.0, %v1044
    %v1046 = vpop.f32.mrb[0].mxu0
    %1047 = vdwg.mxu0
    %s1048 = scalar_lea.vmem [#allocation2], 640
    %1049 = vst [vmem:[%s1048] sm:$0xff] %v970
    %1050 = vst [vmem:[%s1048 + $0x8] sm:$0xff] %v975
    %1051 = vst [vmem:[%s1048 + $0x10] sm:$0xff] %v980
    %1052 = vst [vmem:[%s1048 + $0x18] sm:$0xff] %v985
    %1053 = vst [vmem:[%s1048 + $0x20] sm:$0xff] %v990
    %1054 = vst [vmem:[%s1048 + $0x28] sm:$0xff] %v995
    %1055 = vst [vmem:[%s1048 + $0x30] sm:$0xff] %v1000
    %1056 = vst [vmem:[%s1048 + $0x38] sm:$0xff] %v1005
    %1057 = vst [vmem:[%s1048 + $0x40] sm:$0xff] %v1010
    %1058 = vst [vmem:[%s1048 + $0x48] sm:$0xff] %v1015
    %1059 = vst [vmem:[%s1048 + $0x50] sm:$0xff] %v1020
    %1060 = vst [vmem:[%s1048 + $0x58] sm:$0xff] %v1025
    %1061 = vst [vmem:[%s1048 + $0x60] sm:$0xff] %v1030
    %1062 = vst [vmem:[%s1048 + $0x68] sm:$0xff] %v1035
    %1063 = vst [vmem:[%s1048 + $0x70] sm:$0xff] %v1040
    %1064 = vst [vmem:[%s1048 + $0x78] sm:$0xff] %v1045
    %s1065 = scalar_lea.vmem %s0, 96
    %v1066 = vld [vmem:[%s1065] sm:$0xff]
    %v1067 = vld [vmem:[%s1065 + $0x8] sm:$0xff]
    %1068 = vmatprep.subr.mxu0 0.0
    %1069 = vmatpush1.msra.mxu0 %v1066
    %1070 = vmatprep.subr.mxu0 0.0
    %1071 = vmatpush1.msra.mxu0 %v1067
    %1072 = vmatprep.subr.mxu0 0.0
    %1073 = vmatpush1.msra.mxu0 0.0
    %1074 = vmatprep.subr.mxu0 0.0
    %1075 = vmatpush1.msra.mxu0 0.0
    %1076 = vmatprep.subr.mxu0 0.0
    %1077 = vmatpush1.msra.mxu0 0.0
    %1078 = vmatprep.subr.mxu0 0.0
    %1079 = vmatpush1.msra.mxu0 0.0
    %1080 = vmatprep.subr.mxu0 0.0
    %1081 = vmatpush1.msra.mxu0 0.0
    %1082 = vmatprep.subr.mxu0 0.0
    %1083 = vmatpush1.msra.mxu0 0.0
    %1084 = vmatprep.subr.mxu0 0.0
    %1085 = vmatpush1.msra.mxu0 0.0
    %1086 = vmatprep.subr.mxu0 0.0
    %1087 = vmatpush1.msra.mxu0 0.0
    %1088 = vmatprep.subr.mxu0 0.0
    %1089 = vmatpush1.msra.mxu0 0.0
    %1090 = vmatprep.subr.mxu0 0.0
    %1091 = vmatpush1.msra.mxu0 0.0
    %1092 = vmatprep.subr.mxu0 0.0
    %1093 = vmatpush1.msra.mxu0 0.0
    %1094 = vmatprep.subr.mxu0 0.0
    %1095 = vmatpush1.msra.mxu0 0.0
    %1096 = vmatprep.subr.mxu0 0.0
    %1097 = vmatpush1.msra.mxu0 0.0
    %1098 = vmatprep.subr.mxu0 0.0
    %1099 = vmatpush1.msra.mxu0 0.0
    %1100 = vmatprep.subr.mxu0 0.0
    %1101 = vmatpush1.msra.mxu0 0.0
    %1102 = vmatprep.subr.mxu0 0.0
    %1103 = vmatpush1.msra.mxu0 0.0
    %1104 = vmatprep.subr.mxu0 0.0
    %1105 = vmatpush1.msra.mxu0 0.0
    %1106 = vmatprep.subr.mxu0 0.0
    %1107 = vmatpush1.msra.mxu0 0.0
    %1108 = vmatprep.subr.mxu0 0.0
    %1109 = vmatpush1.msra.mxu0 0.0
    %1110 = vmatprep.subr.mxu0 0.0
    %1111 = vmatpush1.msra.mxu0 0.0
    %1112 = vmatprep.subr.mxu0 0.0
    %1113 = vmatpush1.msra.mxu0 0.0
    %1114 = vmatprep.subr.mxu0 0.0
    %1115 = vmatpush1.msra.mxu0 0.0
    %1116 = vmatprep.subr.mxu0 0.0
    %1117 = vmatpush1.msra.mxu0 0.0
    %1118 = vmatprep.subr.mxu0 0.0
    %1119 = vmatpush1.msra.mxu0 0.0
    %1120 = vmatprep.subr.mxu0 0.0
    %1121 = vmatpush1.msra.mxu0 0.0
    %1122 = vmatprep.subr.mxu0 0.0
    %1123 = vmatpush1.msra.mxu0 0.0
    %1124 = vmatprep.subr.mxu0 0.0
    %1125 = vmatpush1.msra.mxu0 0.0
    %1126 = vmatprep.subr.mxu0 0.0
    %1127 = vmatpush1.msra.mxu0 0.0
    %1128 = vmatprep.subr.mxu0 0.0
    %1129 = vmatpush1.msra.mxu0 0.0
    %1130 = vmatprep.subr.mxu0 0.0
    %1131 = vmatpush1.msra.mxu0 0.0
    %1132 = vmatprep.mubr.f32.mxu0 0.0
    %1133 = vmatmul.mubr.f32.gmra.mrb[0].mxu0 %v32
    %v1134 = vpop.f32.mrb[0].mxu0
    %v1135 = vadd.f32 0.0, %v1134
    %v1136 = vpop.f32.mrb[0].mxu0
    %1137 = vmatprep.mubr.f32.mxu0 0.0
    %1138 = vmatmul.mubr.f32.gmra.mrb[0].mxu0 %v35
    %v1139 = vpop.f32.mrb[0].mxu0
    %v1140 = vadd.f32 0.0, %v1139
    %v1141 = vpop.f32.mrb[0].mxu0
    %1142 = vmatprep.mubr.f32.mxu0 0.0
    %1143 = vmatmul.mubr.f32.gmra.mrb[0].mxu0 %v38
    %v1144 = vpop.f32.mrb[0].mxu0
    %v1145 = vadd.f32 0.0, %v1144
    %v1146 = vpop.f32.mrb[0].mxu0
    %1147 = vmatprep.mubr.f32.mxu0 0.0
    %1148 = vmatmul.mubr.f32.gmra.mrb[0].mxu0 %v41
    %v1149 = vpop.f32.mrb[0].mxu0
    %v1150 = vadd.f32 0.0, %v1149
    %v1151 = vpop.f32.mrb[0].mxu0
    %1152 = vmatprep.mubr.f32.mxu0 0.0
    %1153 = vmatmul.mubr.f32.gmra.mrb[0].mxu0 %v44
    %v1154 = vpop.f32.mrb[0].mxu0
    %v1155 = vadd.f32 0.0, %v1154
    %v1156 = vpop.f32.mrb[0].mxu0
    %1157 = vmatprep.mubr.f32.mxu0 0.0
    %1158 = vmatmul.mubr.f32.gmra.mrb[0].mxu0 %v47
    %v1159 = vpop.f32.mrb[0].mxu0
    %v1160 = vadd.f32 0.0, %v1159
    %v1161 = vpop.f32.mrb[0].mxu0
    %1162 = vmatprep.mubr.f32.mxu0 0.0
    %1163 = vmatmul.mubr.f32.gmra.mrb[0].mxu0 %v50
    %v1164 = vpop.f32.mrb[0].mxu0
    %v1165 = vadd.f32 0.0, %v1164
    %v1166 = vpop.f32.mrb[0].mxu0
    %1167 = vmatprep.mubr.f32.mxu0 0.0
    %1168 = vmatmul.mubr.f32.gmra.mrb[0].mxu0 %v53
    %v1169 = vpop.f32.mrb[0].mxu0
    %v1170 = vadd.f32 0.0, %v1169
    %v1171 = vpop.f32.mrb[0].mxu0
    %1172 = vmatprep.mubr.f32.mxu0 0.0
    %1173 = vmatmul.mubr.f32.gmra.mrb[0].mxu0 %v56
    %v1174 = vpop.f32.mrb[0].mxu0
    %v1175 = vadd.f32 0.0, %v1174
    %v1176 = vpop.f32.mrb[0].mxu0
    %1177 = vmatprep.mubr.f32.mxu0 0.0
    %1178 = vmatmul.mubr.f32.gmra.mrb[0].mxu0 %v59
    %v1179 = vpop.f32.mrb[0].mxu0
    %v1180 = vadd.f32 0.0, %v1179
    %v1181 = vpop.f32.mrb[0].mxu0
    %1182 = vmatprep.mubr.f32.mxu0 0.0
    %1183 = vmatmul.mubr.f32.gmra.mrb[0].mxu0 %v62
    %v1184 = vpop.f32.mrb[0].mxu0
    %v1185 = vadd.f32 0.0, %v1184
    %v1186 = vpop.f32.mrb[0].mxu0
    %1187 = vmatprep.mubr.f32.mxu0 0.0
    %1188 = vmatmul.mubr.f32.gmra.mrb[0].mxu0 %v65
    %v1189 = vpop.f32.mrb[0].mxu0
    %v1190 = vadd.f32 0.0, %v1189
    %v1191 = vpop.f32.mrb[0].mxu0
    %1192 = vmatprep.mubr.f32.mxu0 0.0
    %1193 = vmatmul.mubr.f32.gmra.mrb[0].mxu0 %v68
    %v1194 = vpop.f32.mrb[0].mxu0
    %v1195 = vadd.f32 0.0, %v1194
    %v1196 = vpop.f32.mrb[0].mxu0
    %1197 = vmatprep.mubr.f32.mxu0 0.0
    %1198 = vmatmul.mubr.f32.gmra.mrb[0].mxu0 %v71
    %v1199 = vpop.f32.mrb[0].mxu0
    %v1200 = vadd.f32 0.0, %v1199
    %v1201 = vpop.f32.mrb[0].mxu0
    %1202 = vmatprep.mubr.f32.mxu0 0.0
    %1203 = vmatmul.mubr.f32.gmra.mrb[0].mxu0 %v74
    %v1204 = vpop.f32.mrb[0].mxu0
    %v1205 = vadd.f32 0.0, %v1204
    %v1206 = vpop.f32.mrb[0].mxu0
    %1207 = vmatprep.mubr.f32.mxu0 0.0
    %1208 = vmatmul.mubr.f32.gmra.mrb[0].mxu0 %v77
    %v1209 = vpop.f32.mrb[0].mxu0
    %v1210 = vadd.f32 0.0, %v1209
    %v1211 = vpop.f32.mrb[0].mxu0
    %1212 = vdwg.mxu0
    %s1213 = scalar_lea.vmem [#allocation2], 768
    %1214 = vst [vmem:[%s1213] sm:$0xff] %v1135
    %1215 = vst [vmem:[%s1213 + $0x8] sm:$0xff] %v1140
    %1216 = vst [vmem:[%s1213 + $0x10] sm:$0xff] %v1145
    %1217 = vst [vmem:[%s1213 + $0x18] sm:$0xff] %v1150
    %1218 = vst [vmem:[%s1213 + $0x20] sm:$0xff] %v1155
    %1219 = vst [vmem:[%s1213 + $0x28] sm:$0xff] %v1160
    %1220 = vst [vmem:[%s1213 + $0x30] sm:$0xff] %v1165
    %1221 = vst [vmem:[%s1213 + $0x38] sm:$0xff] %v1170
    %1222 = vst [vmem:[%s1213 + $0x40] sm:$0xff] %v1175
    %1223 = vst [vmem:[%s1213 + $0x48] sm:$0xff] %v1180
    %1224 = vst [vmem:[%s1213 + $0x50] sm:$0xff] %v1185
    %1225 = vst [vmem:[%s1213 + $0x58] sm:$0xff] %v1190
    %1226 = vst [vmem:[%s1213 + $0x60] sm:$0xff] %v1195
    %1227 = vst [vmem:[%s1213 + $0x68] sm:$0xff] %v1200
    %1228 = vst [vmem:[%s1213 + $0x70] sm:$0xff] %v1205
    %1229 = vst [vmem:[%s1213 + $0x78] sm:$0xff] %v1210
    %s1230 = scalar_lea.vmem %s0, 112
    %v1231 = vld [vmem:[%s1230] sm:$0xff]
    %v1232 = vld [vmem:[%s1230 + $0x8] sm:$0xff]
    %1233 = vmatprep.subr.mxu0 0.0
    %1234 = vmatpush1.msra.mxu0 %v1231
    %1235 = vmatprep.subr.mxu0 0.0
    %1236 = vmatpush1.msra.mxu0 %v1232
    %1237 = vmatprep.subr.mxu0 0.0
    %1238 = vmatpush1.msra.mxu0 0.0
    %1239 = vmatprep.subr.mxu0 0.0
    %1240 = vmatpush1.msra.mxu0 0.0
    %1241 = vmatprep.subr.mxu0 0.0
    %1242 = vmatpush1.msra.mxu0 0.0
    %1243 = vmatprep.subr.mxu0 0.0
    %1244 = vmatpush1.msra.mxu0 0.0
    %1245 = vmatprep.subr.mxu0 0.0
    %1246 = vmatpush1.msra.mxu0 0.0
    %1247 = vmatprep.subr.mxu0 0.0
    %1248 = vmatpush1.msra.mxu0 0.0
    %1249 = vmatprep.subr.mxu0 0.0
    %1250 = vmatpush1.msra.mxu0 0.0
    %1251 = vmatprep.subr.mxu0 0.0
    %1252 = vmatpush1.msra.mxu0 0.0
    %1253 = vmatprep.subr.mxu0 0.0
    %1254 = vmatpush1.msra.mxu0 0.0
    %1255 = vmatprep.subr.mxu0 0.0
    %1256 = vmatpush1.msra.mxu0 0.0
    %1257 = vmatprep.subr.mxu0 0.0
    %1258 = vmatpush1.msra.mxu0 0.0
    %1259 = vmatprep.subr.mxu0 0.0
    %1260 = vmatpush1.msra.mxu0 0.0
    %1261 = vmatprep.subr.mxu0 0.0
    %1262 = vmatpush1.msra.mxu0 0.0
    %1263 = vmatprep.subr.mxu0 0.0
    %1264 = vmatpush1.msra.mxu0 0.0
    %1265 = vmatprep.subr.mxu0 0.0
    %1266 = vmatpush1.msra.mxu0 0.0
    %1267 = vmatprep.subr.mxu0 0.0
    %1268 = vmatpush1.msra.mxu0 0.0
    %1269 = vmatprep.subr.mxu0 0.0
    %1270 = vmatpush1.msra.mxu0 0.0
    %1271 = vmatprep.subr.mxu0 0.0
    %1272 = vmatpush1.msra.mxu0 0.0
    %1273 = vmatprep.subr.mxu0 0.0
    %1274 = vmatpush1.msra.mxu0 0.0
    %1275 = vmatprep.subr.mxu0 0.0
    %1276 = vmatpush1.msra.mxu0 0.0
    %1277 = vmatprep.subr.mxu0 0.0
    %1278 = vmatpush1.msra.mxu0 0.0
    %1279 = vmatprep.subr.mxu0 0.0
    %1280 = vmatpush1.msra.mxu0 0.0
    %1281 = vmatprep.subr.mxu0 0.0
    %1282 = vmatpush1.msra.mxu0 0.0
    %1283 = vmatprep.subr.mxu0 0.0
    %1284 = vmatpush1.msra.mxu0 0.0
    %1285 = vmatprep.subr.mxu0 0.0
    %1286 = vmatpush1.msra.mxu0 0.0
    %1287 = vmatprep.subr.mxu0 0.0
    %1288 = vmatpush1.msra.mxu0 0.0
    %1289 = vmatprep.subr.mxu0 0.0
    %1290 = vmatpush1.msra.mxu0 0.0
    %1291 = vmatprep.subr.mxu0 0.0
    %1292 = vmatpush1.msra.mxu0 0.0
    %1293 = vmatprep.subr.mxu0 0.0
    %1294 = vmatpush1.msra.mxu0 0.0
    %1295 = vmatprep.subr.mxu0 0.0
    %1296 = vmatpush1.msra.mxu0 0.0
    %1297 = vmatprep.mubr.f32.mxu0 0.0
    %1298 = vmatmul.mubr.f32.gmra.mrb[0].mxu0 %v32
    %v1299 = vpop.f32.mrb[0].mxu0
    %v1300 = vadd.f32 0.0, %v1299
    %v1301 = vpop.f32.mrb[0].mxu0
    %1302 = vmatprep.mubr.f32.mxu0 0.0
    %1303 = vmatmul.mubr.f32.gmra.mrb[0].mxu0 %v35
    %v1304 = vpop.f32.mrb[0].mxu0
    %v1305 = vadd.f32 0.0, %v1304
    %v1306 = vpop.f32.mrb[0].mxu0
    %1307 = vmatprep.mubr.f32.mxu0 0.0
    %1308 = vmatmul.mubr.f32.gmra.mrb[0].mxu0 %v38
    %v1309 = vpop.f32.mrb[0].mxu0
    %v1310 = vadd.f32 0.0, %v1309
    %v1311 = vpop.f32.mrb[0].mxu0
    %1312 = vmatprep.mubr.f32.mxu0 0.0
    %1313 = vmatmul.mubr.f32.gmra.mrb[0].mxu0 %v41
    %v1314 = vpop.f32.mrb[0].mxu0
    %v1315 = vadd.f32 0.0, %v1314
    %v1316 = vpop.f32.mrb[0].mxu0
    %1317 = vmatprep.mubr.f32.mxu0 0.0
    %1318 = vmatmul.mubr.f32.gmra.mrb[0].mxu0 %v44
    %v1319 = vpop.f32.mrb[0].mxu0
    %v1320 = vadd.f32 0.0, %v1319
    %v1321 = vpop.f32.mrb[0].mxu0
    %1322 = vmatprep.mubr.f32.mxu0 0.0
    %1323 = vmatmul.mubr.f32.gmra.mrb[0].mxu0 %v47
    %v1324 = vpop.f32.mrb[0].mxu0
    %v1325 = vadd.f32 0.0, %v1324
    %v1326 = vpop.f32.mrb[0].mxu0
    %1327 = vmatprep.mubr.f32.mxu0 0.0
    %1328 = vmatmul.mubr.f32.gmra.mrb[0].mxu0 %v50
    %v1329 = vpop.f32.mrb[0].mxu0
    %v1330 = vadd.f32 0.0, %v1329
    %v1331 = vpop.f32.mrb[0].mxu0
    %1332 = vmatprep.mubr.f32.mxu0 0.0
    %1333 = vmatmul.mubr.f32.gmra.mrb[0].mxu0 %v53
    %v1334 = vpop.f32.mrb[0].mxu0
    %v1335 = vadd.f32 0.0, %v1334
    %v1336 = vpop.f32.mrb[0].mxu0
    %1337 = vmatprep.mubr.f32.mxu0 0.0
    %1338 = vmatmul.mubr.f32.gmra.mrb[0].mxu0 %v56
    %v1339 = vpop.f32.mrb[0].mxu0
    %v1340 = vadd.f32 0.0, %v1339
    %v1341 = vpop.f32.mrb[0].mxu0
    %1342 = vmatprep.mubr.f32.mxu0 0.0
    %1343 = vmatmul.mubr.f32.gmra.mrb[0].mxu0 %v59
    %v1344 = vpop.f32.mrb[0].mxu0
    %v1345 = vadd.f32 0.0, %v1344
    %v1346 = vpop.f32.mrb[0].mxu0
    %1347 = vmatprep.mubr.f32.mxu0 0.0
    %1348 = vmatmul.mubr.f32.gmra.mrb[0].mxu0 %v62
    %v1349 = vpop.f32.mrb[0].mxu0
    %v1350 = vadd.f32 0.0, %v1349
    %v1351 = vpop.f32.mrb[0].mxu0
    %1352 = vmatprep.mubr.f32.mxu0 0.0
    %1353 = vmatmul.mubr.f32.gmra.mrb[0].mxu0 %v65
    %v1354 = vpop.f32.mrb[0].mxu0
    %v1355 = vadd.f32 0.0, %v1354
    %v1356 = vpop.f32.mrb[0].mxu0
    %1357 = vmatprep.mubr.f32.mxu0 0.0
    %1358 = vmatmul.mubr.f32.gmra.mrb[0].mxu0 %v68
    %v1359 = vpop.f32.mrb[0].mxu0
    %v1360 = vadd.f32 0.0, %v1359
    %v1361 = vpop.f32.mrb[0].mxu0
    %1362 = vmatprep.mubr.f32.mxu0 0.0
    %1363 = vmatmul.mubr.f32.gmra.mrb[0].mxu0 %v71
    %v1364 = vpop.f32.mrb[0].mxu0
    %v1365 = vadd.f32 0.0, %v1364
    %v1366 = vpop.f32.mrb[0].mxu0
    %1367 = vmatprep.mubr.f32.mxu0 0.0
    %1368 = vmatmul.mubr.f32.gmra.mrb[0].mxu0 %v74
    %v1369 = vpop.f32.mrb[0].mxu0
    %v1370 = vadd.f32 0.0, %v1369
    %v1371 = vpop.f32.mrb[0].mxu0
    %1372 = vmatprep.mubr.f32.mxu0 0.0
    %1373 = vmatmul.mubr.f32.gmra.mrb[0].mxu0 %v77
    %v1374 = vpop.f32.mrb[0].mxu0
    %v1375 = vadd.f32 0.0, %v1374
    %v1376 = vpop.f32.mrb[0].mxu0
    %1377 = vdwg.mxu0
    %s1378 = scalar_lea.vmem [#allocation2], 896
    %1379 = vst [vmem:[%s1378] sm:$0xff] %v1300
    %1380 = vst [vmem:[%s1378 + $0x8] sm:$0xff] %v1305
    %1381 = vst [vmem:[%s1378 + $0x10] sm:$0xff] %v1310
    %1382 = vst [vmem:[%s1378 + $0x18] sm:$0xff] %v1315
    %1383 = vst [vmem:[%s1378 + $0x20] sm:$0xff] %v1320
    %1384 = vst [vmem:[%s1378 + $0x28] sm:$0xff] %v1325
    %1385 = vst [vmem:[%s1378 + $0x30] sm:$0xff] %v1330
    %1386 = vst [vmem:[%s1378 + $0x38] sm:$0xff] %v1335
    %1387 = vst [vmem:[%s1378 + $0x40] sm:$0xff] %v1340
    %1388 = vst [vmem:[%s1378 + $0x48] sm:$0xff] %v1345
    %1389 = vst [vmem:[%s1378 + $0x50] sm:$0xff] %v1350
    %1390 = vst [vmem:[%s1378 + $0x58] sm:$0xff] %v1355
    %1391 = vst [vmem:[%s1378 + $0x60] sm:$0xff] %v1360
    %1392 = vst [vmem:[%s1378 + $0x68] sm:$0xff] %v1365
    %1393 = vst [vmem:[%s1378 + $0x70] sm:$0xff] %v1370
    %1394 = vst [vmem:[%s1378 + $0x78] sm:$0xff] %v1375
    %v1395 = vrcp.pop 4.0
    %v1396 = vld [vmem:[#allocation2] sm:$0xff]
    %v1397 = vld [vmem:[#allocation2 + $0x8] sm:$0xff]
    %v1398 = vld [vmem:[#allocation2 + $0x10] sm:$0xff]
    %v1399 = vld [vmem:[#allocation2 + $0x18] sm:$0xff]
    %v1400 = vld [vmem:[#allocation2 + $0x20] sm:$0xff]
    %v1401 = vld [vmem:[#allocation2 + $0x28] sm:$0xff]
    %v1402 = vld [vmem:[#allocation2 + $0x30] sm:$0xff]
    %v1403 = vld [vmem:[#allocation2 + $0x38] sm:$0xff]
    %v1404 = vmul.f32 %v1395, %v1396
    %v1405 = vmul.f32 %v1395, %v1397
    %v1406 = vmul.f32 %v1395, %v1398
    %v1407 = vmul.f32 %v1395, %v1399
    %v1408 = vmul.f32 %v1395, %v1400
    %v1409 = vmul.f32 %v1395, %v1401
    %v1410 = vmul.f32 %v1395, %v1402
    %v1411 = vmul.f32 %v1395, %v1403
    %v1412 = vadd.f32 %v1404, 0.0
    %v1413 = vadd.f32 %v1405, 0.0
    %v1414 = vadd.f32 %v1406, 0.0
    %v1415 = vadd.f32 %v1407, 0.0
    %v1416 = vadd.f32 %v1408, 0.0
    %v1417 = vadd.f32 %v1409, 0.0
    %v1418 = vadd.f32 %v1410, 0.0
    %v1419 = vadd.f32 %v1411, 0.0
    %v1420 = vld [vmem:[%s388] sm:$0xff]
    %v1421 = vld [vmem:[%s388 + $0x8] sm:$0xff]
    %v1422 = vld [vmem:[%s388 + $0x10] sm:$0xff]
    %v1423 = vld [vmem:[%s388 + $0x18] sm:$0xff]
    %v1424 = vld [vmem:[%s388 + $0x20] sm:$0xff]
    %v1425 = vld [vmem:[%s388 + $0x28] sm:$0xff]
    %v1426 = vld [vmem:[%s388 + $0x30] sm:$0xff]
    %v1427 = vld [vmem:[%s388 + $0x38] sm:$0xff]
    %v1428 = vmul.f32 %v1395, %v1420
    %v1429 = vmul.f32 %v1395, %v1421
    %v1430 = vmul.f32 %v1395, %v1422
    %v1431 = vmul.f32 %v1395, %v1423
    %v1432 = vmul.f32 %v1395, %v1424
    %v1433 = vmul.f32 %v1395, %v1425
    %v1434 = vmul.f32 %v1395, %v1426
    %v1435 = vmul.f32 %v1395, %v1427
    %v1436 = vadd.f32 %v1412, %v1428
    %v1437 = vadd.f32 %v1413, %v1429
    %v1438 = vadd.f32 %v1414, %v1430
    %v1439 = vadd.f32 %v1415, %v1431
    %v1440 = vadd.f32 %v1416, %v1432
    %v1441 = vadd.f32 %v1417, %v1433
    %v1442 = vadd.f32 %v1418, %v1434
    %v1443 = vadd.f32 %v1419, %v1435
    %v1444 = vld [vmem:[%s553] sm:$0xff]
    %v1445 = vld [vmem:[%s553 + $0x8] sm:$0xff]
    %v1446 = vld [vmem:[%s553 + $0x10] sm:$0xff]
    %v1447 = vld [vmem:[%s553 + $0x18] sm:$0xff]
    %v1448 = vld [vmem:[%s553 + $0x20] sm:$0xff]
    %v1449 = vld [vmem:[%s553 + $0x28] sm:$0xff]
    %v1450 = vld [vmem:[%s553 + $0x30] sm:$0xff]
    %v1451 = vld [vmem:[%s553 + $0x38] sm:$0xff]
    %v1452 = vmul.f32 %v1395, %v1444
    %v1453 = vmul.f32 %v1395, %v1445
    %v1454 = vmul.f32 %v1395, %v1446
    %v1455 = vmul.f32 %v1395, %v1447
    %v1456 = vmul.f32 %v1395, %v1448
    %v1457 = vmul.f32 %v1395, %v1449
    %v1458 = vmul.f32 %v1395, %v1450
    %v1459 = vmul.f32 %v1395, %v1451
    %v1460 = vadd.f32 %v1436, %v1452
    %v1461 = vadd.f32 %v1437, %v1453
    %v1462 = vadd.f32 %v1438, %v1454
    %v1463 = vadd.f32 %v1439, %v1455
    %v1464 = vadd.f32 %v1440, %v1456
    %v1465 = vadd.f32 %v1441, %v1457
    %v1466 = vadd.f32 %v1442, %v1458
    %v1467 = vadd.f32 %v1443, %v1459
    %v1468 = vld [vmem:[%s718] sm:$0xff]
    %v1469 = vld [vmem:[%s718 + $0x8] sm:$0xff]
    %v1470 = vld [vmem:[%s718 + $0x10] sm:$0xff]
    %v1471 = vld [vmem:[%s718 + $0x18] sm:$0xff]
    %v1472 = vld [vmem:[%s718 + $0x20] sm:$0xff]
    %v1473 = vld [vmem:[%s718 + $0x28] sm:$0xff]
    %v1474 = vld [vmem:[%s718 + $0x30] sm:$0xff]
    %v1475 = vld [vmem:[%s718 + $0x38] sm:$0xff]
    %v1476 = vmul.f32 %v1395, %v1468
    %v1477 = vmul.f32 %v1395, %v1469
    %v1478 = vmul.f32 %v1395, %v1470
    %v1479 = vmul.f32 %v1395, %v1471
    %v1480 = vmul.f32 %v1395, %v1472
    %v1481 = vmul.f32 %v1395, %v1473
    %v1482 = vmul.f32 %v1395, %v1474
    %v1483 = vmul.f32 %v1395, %v1475
    %v1484 = vadd.f32 %v1460, %v1476
    %v1485 = vadd.f32 %v1461, %v1477
    %v1486 = vadd.f32 %v1462, %v1478
    %v1487 = vadd.f32 %v1463, %v1479
    %v1488 = vadd.f32 %v1464, %v1480
    %v1489 = vadd.f32 %v1465, %v1481
    %v1490 = vadd.f32 %v1466, %v1482
    %v1491 = vadd.f32 %v1467, %v1483
    %v1492 = vld [vmem:[%s883] sm:$0xff]
    %v1493 = vld [vmem:[%s883 + $0x8] sm:$0xff]
    %v1494 = vld [vmem:[%s883 + $0x10] sm:$0xff]
    %v1495 = vld [vmem:[%s883 + $0x18] sm:$0xff]
    %v1496 = vld [vmem:[%s883 + $0x20] sm:$0xff]
    %v1497 = vld [vmem:[%s883 + $0x28] sm:$0xff]
    %v1498 = vld [vmem:[%s883 + $0x30] sm:$0xff]
    %v1499 = vld [vmem:[%s883 + $0x38] sm:$0xff]
    %v1500 = vmul.f32 %v1395, %v1492
    %v1501 = vmul.f32 %v1395, %v1493
    %v1502 = vmul.f32 %v1395, %v1494
    %v1503 = vmul.f32 %v1395, %v1495
    %v1504 = vmul.f32 %v1395, %v1496
    %v1505 = vmul.f32 %v1395, %v1497
    %v1506 = vmul.f32 %v1395, %v1498
    %v1507 = vmul.f32 %v1395, %v1499
    %v1508 = vadd.f32 %v1484, %v1500
    %v1509 = vadd.f32 %v1485, %v1501
    %v1510 = vadd.f32 %v1486, %v1502
    %v1511 = vadd.f32 %v1487, %v1503
    %v1512 = vadd.f32 %v1488, %v1504
    %v1513 = vadd.f32 %v1489, %v1505
    %v1514 = vadd.f32 %v1490, %v1506
    %v1515 = vadd.f32 %v1491, %v1507
    %v1516 = vld [vmem:[%s1048] sm:$0xff]
    %v1517 = vld [vmem:[%s1048 + $0x8] sm:$0xff]
    %v1518 = vld [vmem:[%s1048 + $0x10] sm:$0xff]
    %v1519 = vld [vmem:[%s1048 + $0x18] sm:$0xff]
    %v1520 = vld [vmem:[%s1048 + $0x20] sm:$0xff]
    %v1521 = vld [vmem:[%s1048 + $0x28] sm:$0xff]
    %v1522 = vld [vmem:[%s1048 + $0x30] sm:$0xff]
    %v1523 = vld [vmem:[%s1048 + $0x38] sm:$0xff]
    %v1524 = vmul.f32 %v1395, %v1516
    %v1525 = vmul.f32 %v1395, %v1517
    %v1526 = vmul.f32 %v1395, %v1518
    %v1527 = vmul.f32 %v1395, %v1519
    %v1528 = vmul.f32 %v1395, %v1520
    %v1529 = vmul.f32 %v1395, %v1521
    %v1530 = vmul.f32 %v1395, %v1522
    %v1531 = vmul.f32 %v1395, %v1523
    %v1532 = vadd.f32 %v1508, %v1524
    %v1533 = vadd.f32 %v1509, %v1525
    %v1534 = vadd.f32 %v1510, %v1526
    %v1535 = vadd.f32 %v1511, %v1527
    %v1536 = vadd.f32 %v1512, %v1528
    %v1537 = vadd.f32 %v1513, %v1529
    %v1538 = vadd.f32 %v1514, %v1530
    %v1539 = vadd.f32 %v1515, %v1531
    %v1540 = vld [vmem:[%s1213] sm:$0xff]
    %v1541 = vld [vmem:[%s1213 + $0x8] sm:$0xff]
    %v1542 = vld [vmem:[%s1213 + $0x10] sm:$0xff]
    %v1543 = vld [vmem:[%s1213 + $0x18] sm:$0xff]
    %v1544 = vld [vmem:[%s1213 + $0x20] sm:$0xff]
    %v1545 = vld [vmem:[%s1213 + $0x28] sm:$0xff]
    %v1546 = vld [vmem:[%s1213 + $0x30] sm:$0xff]
    %v1547 = vld [vmem:[%s1213 + $0x38] sm:$0xff]
    %v1548 = vmul.f32 %v1395, %v1540
    %v1549 = vmul.f32 %v1395, %v1541
    %v1550 = vmul.f32 %v1395, %v1542
    %v1551 = vmul.f32 %v1395, %v1543
    %v1552 = vmul.f32 %v1395, %v1544
    %v1553 = vmul.f32 %v1395, %v1545
    %v1554 = vmul.f32 %v1395, %v1546
    %v1555 = vmul.f32 %v1395, %v1547
    %v1556 = vadd.f32 %v1532, %v1548
    %v1557 = vadd.f32 %v1533, %v1549
    %v1558 = vadd.f32 %v1534, %v1550
    %v1559 = vadd.f32 %v1535, %v1551
    %v1560 = vadd.f32 %v1536, %v1552
    %v1561 = vadd.f32 %v1537, %v1553
    %v1562 = vadd.f32 %v1538, %v1554
    %v1563 = vadd.f32 %v1539, %v1555
    %v1564 = vld [vmem:[%s1378] sm:$0xff]
    %v1565 = vld [vmem:[%s1378 + $0x8] sm:$0xff]
    %v1566 = vld [vmem:[%s1378 + $0x10] sm:$0xff]
    %v1567 = vld [vmem:[%s1378 + $0x18] sm:$0xff]
    %v1568 = vld [vmem:[%s1378 + $0x20] sm:$0xff]
    %v1569 = vld [vmem:[%s1378 + $0x28] sm:$0xff]
    %v1570 = vld [vmem:[%s1378 + $0x30] sm:$0xff]
    %v1571 = vld [vmem:[%s1378 + $0x38] sm:$0xff]
    %v1572 = vmul.f32 %v1395, %v1564
    %v1573 = vmul.f32 %v1395, %v1565
    %v1574 = vmul.f32 %v1395, %v1566
    %v1575 = vmul.f32 %v1395, %v1567
    %v1576 = vmul.f32 %v1395, %v1568
    %v1577 = vmul.f32 %v1395, %v1569
    %v1578 = vmul.f32 %v1395, %v1570
    %v1579 = vmul.f32 %v1395, %v1571
    %v1580 = vadd.f32 %v1556, %v1572
    %v1581 = vadd.f32 %v1557, %v1573
    %v1582 = vadd.f32 %v1558, %v1574
    %v1583 = vadd.f32 %v1559, %v1575
    %v1584 = vadd.f32 %v1560, %v1576
    %v1585 = vadd.f32 %v1561, %v1577
    %v1586 = vadd.f32 %v1562, %v1578
    %v1587 = vadd.f32 %v1563, %v1579
    %v1588 = vld [vmem:[#allocation2 + $0x40] sm:$0xff]
    %v1589 = vld [vmem:[#allocation2 + $0x48] sm:$0xff]
    %v1590 = vld [vmem:[#allocation2 + $0x50] sm:$0xff]
    %v1591 = vld [vmem:[#allocation2 + $0x58] sm:$0xff]
    %v1592 = vld [vmem:[#allocation2 + $0x60] sm:$0xff]
    %v1593 = vld [vmem:[#allocation2 + $0x68] sm:$0xff]
    %v1594 = vld [vmem:[#allocation2 + $0x70] sm:$0xff]
    %v1595 = vld [vmem:[#allocation2 + $0x78] sm:$0xff]
    %v1596 = vmul.f32 %v1395, %v1588
    %v1597 = vmul.f32 %v1395, %v1589
    %v1598 = vmul.f32 %v1395, %v1590
    %v1599 = vmul.f32 %v1395, %v1591
    %v1600 = vmul.f32 %v1395, %v1592
    %v1601 = vmul.f32 %v1395, %v1593
    %v1602 = vmul.f32 %v1395, %v1594
    %v1603 = vmul.f32 %v1395, %v1595
    %v1604 = vadd.f32 %v1580, %v1596
    %v1605 = vadd.f32 %v1581, %v1597
    %v1606 = vadd.f32 %v1582, %v1598
    %v1607 = vadd.f32 %v1583, %v1599
    %v1608 = vadd.f32 %v1584, %v1600
    %v1609 = vadd.f32 %v1585, %v1601
    %v1610 = vadd.f32 %v1586, %v1602
    %v1611 = vadd.f32 %v1587, %v1603
    %v1612 = vld [vmem:[%s388 + $0x40] sm:$0xff]
    %v1613 = vld [vmem:[%s388 + $0x48] sm:$0xff]
    %v1614 = vld [vmem:[%s388 + $0x50] sm:$0xff]
    %v1615 = vld [vmem:[%s388 + $0x58] sm:$0xff]
    %v1616 = vld [vmem:[%s388 + $0x60] sm:$0xff]
    %v1617 = vld [vmem:[%s388 + $0x68] sm:$0xff]
    %v1618 = vld [vmem:[%s388 + $0x70] sm:$0xff]
    %v1619 = vld [vmem:[%s388 + $0x78] sm:$0xff]
    %v1620 = vmul.f32 %v1395, %v1612
    %v1621 = vmul.f32 %v1395, %v1613
    %v1622 = vmul.f32 %v1395, %v1614
    %v1623 = vmul.f32 %v1395, %v1615
    %v1624 = vmul.f32 %v1395, %v1616
    %v1625 = vmul.f32 %v1395, %v1617
    %v1626 = vmul.f32 %v1395, %v1618
    %v1627 = vmul.f32 %v1395, %v1619
    %v1628 = vadd.f32 %v1604, %v1620
    %v1629 = vadd.f32 %v1605, %v1621
    %v1630 = vadd.f32 %v1606, %v1622
    %v1631 = vadd.f32 %v1607, %v1623
    %v1632 = vadd.f32 %v1608, %v1624
    %v1633 = vadd.f32 %v1609, %v1625
    %v1634 = vadd.f32 %v1610, %v1626
    %v1635 = vadd.f32 %v1611, %v1627
    %v1636 = vld [vmem:[%s553 + $0x40] sm:$0xff]
    %v1637 = vld [vmem:[%s553 + $0x48] sm:$0xff]
    %v1638 = vld [vmem:[%s553 + $0x50] sm:$0xff]
    %v1639 = vld [vmem:[%s553 + $0x58] sm:$0xff]
    %v1640 = vld [vmem:[%s553 + $0x60] sm:$0xff]
    %v1641 = vld [vmem:[%s553 + $0x68] sm:$0xff]
    %v1642 = vld [vmem:[%s553 + $0x70] sm:$0xff]
    %v1643 = vld [vmem:[%s553 + $0x78] sm:$0xff]
    %v1644 = vmul.f32 %v1395, %v1636
    %v1645 = vmul.f32 %v1395, %v1637
    %v1646 = vmul.f32 %v1395, %v1638
    %v1647 = vmul.f32 %v1395, %v1639
    %v1648 = vmul.f32 %v1395, %v1640
    %v1649 = vmul.f32 %v1395, %v1641
    %v1650 = vmul.f32 %v1395, %v1642
    %v1651 = vmul.f32 %v1395, %v1643
    %v1652 = vadd.f32 %v1628, %v1644
    %v1653 = vadd.f32 %v1629, %v1645
    %v1654 = vadd.f32 %v1630, %v1646
    %v1655 = vadd.f32 %v1631, %v1647
    %v1656 = vadd.f32 %v1632, %v1648
    %v1657 = vadd.f32 %v1633, %v1649
    %v1658 = vadd.f32 %v1634, %v1650
    %v1659 = vadd.f32 %v1635, %v1651
    %v1660 = vld [vmem:[%s718 + $0x40] sm:$0xff]
    %v1661 = vld [vmem:[%s718 + $0x48] sm:$0xff]
    %v1662 = vld [vmem:[%s718 + $0x50] sm:$0xff]
    %v1663 = vld [vmem:[%s718 + $0x58] sm:$0xff]
    %v1664 = vld [vmem:[%s718 + $0x60] sm:$0xff]
    %v1665 = vld [vmem:[%s718 + $0x68] sm:$0xff]
    %v1666 = vld [vmem:[%s718 + $0x70] sm:$0xff]
    %v1667 = vld [vmem:[%s718 + $0x78] sm:$0xff]
    %v1668 = vmul.f32 %v1395, %v1660
    %v1669 = vmul.f32 %v1395, %v1661
    %v1670 = vmul.f32 %v1395, %v1662
    %v1671 = vmul.f32 %v1395, %v1663
    %v1672 = vmul.f32 %v1395, %v1664
    %v1673 = vmul.f32 %v1395, %v1665
    %v1674 = vmul.f32 %v1395, %v1666
    %v1675 = vmul.f32 %v1395, %v1667
    %v1676 = vadd.f32 %v1652, %v1668
    %v1677 = vadd.f32 %v1653, %v1669
    %v1678 = vadd.f32 %v1654, %v1670
    %v1679 = vadd.f32 %v1655, %v1671
    %v1680 = vadd.f32 %v1656, %v1672
    %v1681 = vadd.f32 %v1657, %v1673
    %v1682 = vadd.f32 %v1658, %v1674
    %v1683 = vadd.f32 %v1659, %v1675
    %v1684 = vld [vmem:[%s883 + $0x40] sm:$0xff]
    %v1685 = vld [vmem:[%s883 + $0x48] sm:$0xff]
    %v1686 = vld [vmem:[%s883 + $0x50] sm:$0xff]
    %v1687 = vld [vmem:[%s883 + $0x58] sm:$0xff]
    %v1688 = vld [vmem:[%s883 + $0x60] sm:$0xff]
    %v1689 = vld [vmem:[%s883 + $0x68] sm:$0xff]
    %v1690 = vld [vmem:[%s883 + $0x70] sm:$0xff]
    %v1691 = vld [vmem:[%s883 + $0x78] sm:$0xff]
    %v1692 = vmul.f32 %v1395, %v1684
    %v1693 = vmul.f32 %v1395, %v1685
    %v1694 = vmul.f32 %v1395, %v1686
    %v1695 = vmul.f32 %v1395, %v1687
    %v1696 = vmul.f32 %v1395, %v1688
    %v1697 = vmul.f32 %v1395, %v1689
    %v1698 = vmul.f32 %v1395, %v1690
    %v1699 = vmul.f32 %v1395, %v1691
    %v1700 = vadd.f32 %v1676, %v1692
    %v1701 = vadd.f32 %v1677, %v1693
    %v1702 = vadd.f32 %v1678, %v1694
    %v1703 = vadd.f32 %v1679, %v1695
    %v1704 = vadd.f32 %v1680, %v1696
    %v1705 = vadd.f32 %v1681, %v1697
    %v1706 = vadd.f32 %v1682, %v1698
    %v1707 = vadd.f32 %v1683, %v1699
    %v1708 = vld [vmem:[%s1048 + $0x40] sm:$0xff]
    %v1709 = vld [vmem:[%s1048 + $0x48] sm:$0xff]
    %v1710 = vld [vmem:[%s1048 + $0x50] sm:$0xff]
    %v1711 = vld [vmem:[%s1048 + $0x58] sm:$0xff]
    %v1712 = vld [vmem:[%s1048 + $0x60] sm:$0xff]
    %v1713 = vld [vmem:[%s1048 + $0x68] sm:$0xff]
    %v1714 = vld [vmem:[%s1048 + $0x70] sm:$0xff]
    %v1715 = vld [vmem:[%s1048 + $0x78] sm:$0xff]
    %v1716 = vmul.f32 %v1395, %v1708
    %v1717 = vmul.f32 %v1395, %v1709
    %v1718 = vmul.f32 %v1395, %v1710
    %v1719 = vmul.f32 %v1395, %v1711
    %v1720 = vmul.f32 %v1395, %v1712
    %v1721 = vmul.f32 %v1395, %v1713
    %v1722 = vmul.f32 %v1395, %v1714
    %v1723 = vmul.f32 %v1395, %v1715
    %v1724 = vadd.f32 %v1700, %v1716
    %v1725 = vadd.f32 %v1701, %v1717
    %v1726 = vadd.f32 %v1702, %v1718
    %v1727 = vadd.f32 %v1703, %v1719
    %v1728 = vadd.f32 %v1704, %v1720
    %v1729 = vadd.f32 %v1705, %v1721
    %v1730 = vadd.f32 %v1706, %v1722
    %v1731 = vadd.f32 %v1707, %v1723
    %v1732 = vld [vmem:[%s1213 + $0x40] sm:$0xff]
    %v1733 = vld [vmem:[%s1213 + $0x48] sm:$0xff]
    %v1734 = vld [vmem:[%s1213 + $0x50] sm:$0xff]
    %v1735 = vld [vmem:[%s1213 + $0x58] sm:$0xff]
    %v1736 = vld [vmem:[%s1213 + $0x60] sm:$0xff]
    %v1737 = vld [vmem:[%s1213 + $0x68] sm:$0xff]
    %v1738 = vld [vmem:[%s1213 + $0x70] sm:$0xff]
    %v1739 = vld [vmem:[%s1213 + $0x78] sm:$0xff]
    %v1740 = vmul.f32 %v1395, %v1732
    %v1741 = vmul.f32 %v1395, %v1733
    %v1742 = vmul.f32 %v1395, %v1734
    %v1743 = vmul.f32 %v1395, %v1735
    %v1744 = vmul.f32 %v1395, %v1736
    %v1745 = vmul.f32 %v1395, %v1737
    %v1746 = vmul.f32 %v1395, %v1738
    %v1747 = vmul.f32 %v1395, %v1739
    %v1748 = vadd.f32 %v1724, %v1740
    %v1749 = vadd.f32 %v1725, %v1741
    %v1750 = vadd.f32 %v1726, %v1742
    %v1751 = vadd.f32 %v1727, %v1743
    %v1752 = vadd.f32 %v1728, %v1744
    %v1753 = vadd.f32 %v1729, %v1745
    %v1754 = vadd.f32 %v1730, %v1746
    %v1755 = vadd.f32 %v1731, %v1747
    %v1756 = vld [vmem:[%s1378 + $0x40] sm:$0xff]
    %v1757 = vld [vmem:[%s1378 + $0x48] sm:$0xff]
    %v1758 = vld [vmem:[%s1378 + $0x50] sm:$0xff]
    %v1759 = vld [vmem:[%s1378 + $0x58] sm:$0xff]
    %v1760 = vld [vmem:[%s1378 + $0x60] sm:$0xff]
    %v1761 = vld [vmem:[%s1378 + $0x68] sm:$0xff]
    %v1762 = vld [vmem:[%s1378 + $0x70] sm:$0xff]
    %v1763 = vld [vmem:[%s1378 + $0x78] sm:$0xff]
    %v1764 = vmul.f32 %v1395, %v1756
    %v1765 = vmul.f32 %v1395, %v1757
    %v1766 = vmul.f32 %v1395, %v1758
    %v1767 = vmul.f32 %v1395, %v1759
    %v1768 = vmul.f32 %v1395, %v1760
    %v1769 = vmul.f32 %v1395, %v1761
    %v1770 = vmul.f32 %v1395, %v1762
    %v1771 = vmul.f32 %v1395, %v1763
    %v1772 = vadd.f32 %v1748, %v1764
    %v1773 = vadd.f32 %v1749, %v1765
    %v1774 = vadd.f32 %v1750, %v1766
    %v1775 = vadd.f32 %v1751, %v1767
    %v1776 = vadd.f32 %v1752, %v1768
    %v1777 = vadd.f32 %v1753, %v1769
    %v1778 = vadd.f32 %v1754, %v1770
    %v1779 = vadd.f32 %v1755, %v1771
    %v1780 = vmul.f32 %v1772, %v1772
    %v1781 = vmul.f32 %v1773, %v1773
    %v1782 = vmul.f32 %v1774, %v1774
    %v1783 = vmul.f32 %v1775, %v1775
    %v1784 = vmul.f32 %v1776, %v1776
    %v1785 = vmul.f32 %v1777, %v1777
    %v1786 = vmul.f32 %v1778, %v1778
    %v1787 = vmul.f32 %v1779, %v1779
    %v1788 = vadd.f32 %v1780, %v1781
    %v1789 = vrot.slane %v1788, 4
    %v1790 = vadd.f32 %v1788, %v1789
    %v1791 = vrot.slane %v1790, 2
    %v1792 = vadd.f32 %v1790, %v1791
    %v1793 = vrot.slane %v1792, 1
    %v1794 = vadd.f32 %v1792, %v1793
    %v1795 = vadd.f32 %v1782, %v1783
    %v1796 = vrot.slane %v1795, 4
    %v1797 = vadd.f32 %v1795, %v1796
    %v1798 = vrot.slane %v1797, 2
    %v1799 = vadd.f32 %v1797, %v1798
    %v1800 = vrot.slane %v1799, 1
    %v1801 = vadd.f32 %v1799, %v1800
    %v1802 = vadd.f32 %v1784, %v1785
    %v1803 = vrot.slane %v1802, 4
    %v1804 = vadd.f32 %v1802, %v1803
    %v1805 = vrot.slane %v1804, 2
    %v1806 = vadd.f32 %v1804, %v1805
    %v1807 = vrot.slane %v1806, 1
    %v1808 = vadd.f32 %v1806, %v1807
    %v1809 = vadd.f32 %v1786, %v1787
    %v1810 = vrot.slane %v1809, 4
    %v1811 = vadd.f32 %v1809, %v1810
    %v1812 = vrot.slane %v1811, 2
    %v1813 = vadd.f32 %v1811, %v1812
    %v1814 = vrot.slane %v1813, 1
    %v1815 = vadd.f32 %v1813, %v1814
    %v1816 = vadd.f32 %v1794, 1e-07
    %v1817 = vadd.f32 %v1801, 1e-07
    %v1818 = vadd.f32 %v1808, 1e-07
    %v1819 = vadd.f32 %v1815, 1e-07
    %v1820 = vrsqrt.pop %v1816
    %v1821 = vrsqrt.pop %v1817
    %v1822 = vrsqrt.pop %v1818
    %v1823 = vrsqrt.pop %v1819
    %v1824 = vadd.f32 %v1794, 1.0
    %v1825 = vadd.f32 %v1801, 1.0
    %v1826 = vadd.f32 %v1808, 1.0
    %v1827 = vadd.f32 %v1815, 1.0
    %v1828 = vrcp.pop %v1824
    %v1829 = vrcp.pop %v1825
    %v1830 = vrcp.pop %v1826
    %v1831 = vrcp.pop %v1827
    %v1832 = vmul.f32 %v1794, %v1828
    %v1833 = vmul.f32 %v1801, %v1829
    %v1834 = vmul.f32 %v1808, %v1830
    %v1835 = vmul.f32 %v1815, %v1831
    %v1836 = vmul.f32 %v1832, %v1820
    %v1837 = vmul.f32 %v1833, %v1821
    %v1838 = vmul.f32 %v1834, %v1822
    %v1839 = vmul.f32 %v1835, %v1823
    %v1840 = vmul.f32 %v1836, %v1772
    %v1841 = vmul.f32 %v1836, %v1773
    %v1842 = vmul.f32 %v1837, %v1774
    %v1843 = vmul.f32 %v1837, %v1775
    %v1844 = vmul.f32 %v1838, %v1776
    %v1845 = vmul.f32 %v1838, %v1777
    %v1846 = vmul.f32 %v1839, %v1778
    %v1847 = vmul.f32 %v1839, %v1779
    %v1848 = vmul.f32 %v1396, %v1840
    %v1849 = vmul.f32 %v1397, %v1841
    %v1850 = vmul.f32 %v1398, %v1842
    %v1851 = vmul.f32 %v1399, %v1843
    %v1852 = vmul.f32 %v1400, %v1844
    %v1853 = vmul.f32 %v1401, %v1845
    %v1854 = vmul.f32 %v1402, %v1846
    %v1855 = vmul.f32 %v1403, %v1847
    %v1856 = vadd.f32 %v1848, %v1849
    %v1857 = vrot.slane %v1856, 4
    %v1858 = vadd.f32 %v1856, %v1857
    %v1859 = vrot.slane %v1858, 2
    %v1860 = vadd.f32 %v1858, %v1859
    %v1861 = vrot.slane %v1860, 1
    %v1862 = vadd.f32 %v1860, %v1861
    %v1863 = vadd.f32 %v1850, %v1851
    %v1864 = vrot.slane %v1863, 4
    %v1865 = vadd.f32 %v1863, %v1864
    %v1866 = vrot.slane %v1865, 2
    %v1867 = vadd.f32 %v1865, %v1866
    %v1868 = vrot.slane %v1867, 1
    %v1869 = vadd.f32 %v1867, %v1868
    %v1870 = vadd.f32 %v1852, %v1853
    %v1871 = vrot.slane %v1870, 4
    %v1872 = vadd.f32 %v1870, %v1871
    %v1873 = vrot.slane %v1872, 2
    %v1874 = vadd.f32 %v1872, %v1873
    %v1875 = vrot.slane %v1874, 1
    %v1876 = vadd.f32 %v1874, %v1875
    %v1877 = vadd.f32 %v1854, %v1855
    %v1878 = vrot.slane %v1877, 4
    %v1879 = vadd.f32 %v1877, %v1878
    %v1880 = vrot.slane %v1879, 2
    %v1881 = vadd.f32 %v1879, %v1880
    %v1882 = vrot.slane %v1881, 1
    %v1883 = vadd.f32 %v1881, %v1882
    %v1884 = vmul.f32 %v1420, %v1840
    %v1885 = vmul.f32 %v1421, %v1841
    %v1886 = vmul.f32 %v1422, %v1842
    %v1887 = vmul.f32 %v1423, %v1843
    %v1888 = vmul.f32 %v1424, %v1844
    %v1889 = vmul.f32 %v1425, %v1845
    %v1890 = vmul.f32 %v1426, %v1846
    %v1891 = vmul.f32 %v1427, %v1847
    %v1892 = vadd.f32 %v1884, %v1885
    %v1893 = vrot.slane %v1892, 4
    %v1894 = vadd.f32 %v1892, %v1893
    %v1895 = vrot.slane %v1894, 2
    %v1896 = vadd.f32 %v1894, %v1895
    %v1897 = vrot.slane %v1896, 1
    %v1898 = vadd.f32 %v1896, %v1897
    %v1899 = vadd.f32 %v1886, %v1887
    %v1900 = vrot.slane %v1899, 4
    %v1901 = vadd.f32 %v1899, %v1900
    %v1902 = vrot.slane %v1901, 2
    %v1903 = vadd.f32 %v1901, %v1902
    %v1904 = vrot.slane %v1903, 1
    %v1905 = vadd.f32 %v1903, %v1904
    %v1906 = vadd.f32 %v1888, %v1889
    %v1907 = vrot.slane %v1906, 4
    %v1908 = vadd.f32 %v1906, %v1907
    %v1909 = vrot.slane %v1908, 2
    %v1910 = vadd.f32 %v1908, %v1909
    %v1911 = vrot.slane %v1910, 1
    %v1912 = vadd.f32 %v1910, %v1911
    %v1913 = vadd.f32 %v1890, %v1891
    %v1914 = vrot.slane %v1913, 4
    %v1915 = vadd.f32 %v1913, %v1914
    %v1916 = vrot.slane %v1915, 2
    %v1917 = vadd.f32 %v1915, %v1916
    %v1918 = vrot.slane %v1917, 1
    %v1919 = vadd.f32 %v1917, %v1918
    %v1920 = vmul.f32 %v1444, %v1840
    %v1921 = vmul.f32 %v1445, %v1841
    %v1922 = vmul.f32 %v1446, %v1842
    %v1923 = vmul.f32 %v1447, %v1843
    %v1924 = vmul.f32 %v1448, %v1844
    %v1925 = vmul.f32 %v1449, %v1845
    %v1926 = vmul.f32 %v1450, %v1846
    %v1927 = vmul.f32 %v1451, %v1847
    %v1928 = vadd.f32 %v1920, %v1921
    %v1929 = vrot.slane %v1928, 4
    %v1930 = vadd.f32 %v1928, %v1929
    %v1931 = vrot.slane %v1930, 2
    %v1932 = vadd.f32 %v1930, %v1931
    %v1933 = vrot.slane %v1932, 1
    %v1934 = vadd.f32 %v1932, %v1933
    %v1935 = vadd.f32 %v1922, %v1923
    %v1936 = vrot.slane %v1935, 4
    %v1937 = vadd.f32 %v1935, %v1936
    %v1938 = vrot.slane %v1937, 2
    %v1939 = vadd.f32 %v1937, %v1938
    %v1940 = vrot.slane %v1939, 1
    %v1941 = vadd.f32 %v1939, %v1940
    %v1942 = vadd.f32 %v1924, %v1925
    %v1943 = vrot.slane %v1942, 4
    %v1944 = vadd.f32 %v1942, %v1943
    %v1945 = vrot.slane %v1944, 2
    %v1946 = vadd.f32 %v1944, %v1945
    %v1947 = vrot.slane %v1946, 1
    %v1948 = vadd.f32 %v1946, %v1947
    %v1949 = vadd.f32 %v1926, %v1927
    %v1950 = vrot.slane %v1949, 4
    %v1951 = vadd.f32 %v1949, %v1950
    %v1952 = vrot.slane %v1951, 2
    %v1953 = vadd.f32 %v1951, %v1952
    %v1954 = vrot.slane %v1953, 1
    %v1955 = vadd.f32 %v1953, %v1954
    %v1956 = vmul.f32 %v1468, %v1840
    %v1957 = vmul.f32 %v1469, %v1841
    %v1958 = vmul.f32 %v1470, %v1842
    %v1959 = vmul.f32 %v1471, %v1843
    %v1960 = vmul.f32 %v1472, %v1844
    %v1961 = vmul.f32 %v1473, %v1845
    %v1962 = vmul.f32 %v1474, %v1846
    %v1963 = vmul.f32 %v1475, %v1847
    %v1964 = vadd.f32 %v1956, %v1957
    %v1965 = vrot.slane %v1964, 4
    %v1966 = vadd.f32 %v1964, %v1965
    %v1967 = vrot.slane %v1966, 2
    %v1968 = vadd.f32 %v1966, %v1967
    %v1969 = vrot.slane %v1968, 1
    %v1970 = vadd.f32 %v1968, %v1969
    %v1971 = vadd.f32 %v1958, %v1959
    %v1972 = vrot.slane %v1971, 4
    %v1973 = vadd.f32 %v1971, %v1972
    %v1974 = vrot.slane %v1973, 2
    %v1975 = vadd.f32 %v1973, %v1974
    %v1976 = vrot.slane %v1975, 1
    %v1977 = vadd.f32 %v1975, %v1976
    %v1978 = vadd.f32 %v1960, %v1961
    %v1979 = vrot.slane %v1978, 4
    %v1980 = vadd.f32 %v1978, %v1979
    %v1981 = vrot.slane %v1980, 2
    %v1982 = vadd.f32 %v1980, %v1981
    %v1983 = vrot.slane %v1982, 1
    %v1984 = vadd.f32 %v1982, %v1983
    %v1985 = vadd.f32 %v1962, %v1963
    %v1986 = vrot.slane %v1985, 4
    %v1987 = vadd.f32 %v1985, %v1986
    %v1988 = vrot.slane %v1987, 2
    %v1989 = vadd.f32 %v1987, %v1988
    %v1990 = vrot.slane %v1989, 1
    %v1991 = vadd.f32 %v1989, %v1990
    %v1992 = vmul.f32 %v1492, %v1840
    %v1993 = vmul.f32 %v1493, %v1841
    %v1994 = vmul.f32 %v1494, %v1842
    %v1995 = vmul.f32 %v1495, %v1843
    %v1996 = vmul.f32 %v1496, %v1844
    %v1997 = vmul.f32 %v1497, %v1845
    %v1998 = vmul.f32 %v1498, %v1846
    %v1999 = vmul.f32 %v1499, %v1847
    %v2000 = vadd.f32 %v1992, %v1993
    %v2001 = vrot.slane %v2000, 4
    %v2002 = vadd.f32 %v2000, %v2001
    %v2003 = vrot.slane %v2002, 2
    %v2004 = vadd.f32 %v2002, %v2003
    %v2005 = vrot.slane %v2004, 1
    %v2006 = vadd.f32 %v2004, %v2005
    %v2007 = vadd.f32 %v1994, %v1995
    %v2008 = vrot.slane %v2007, 4
    %v2009 = vadd.f32 %v2007, %v2008
    %v2010 = vrot.slane %v2009, 2
    %v2011 = vadd.f32 %v2009, %v2010
    %v2012 = vrot.slane %v2011, 1
    %v2013 = vadd.f32 %v2011, %v2012
    %v2014 = vadd.f32 %v1996, %v1997
    %v2015 = vrot.slane %v2014, 4
    %v2016 = vadd.f32 %v2014, %v2015
    %v2017 = vrot.slane %v2016, 2
    %v2018 = vadd.f32 %v2016, %v2017
    %v2019 = vrot.slane %v2018, 1
    %v2020 = vadd.f32 %v2018, %v2019
    %v2021 = vadd.f32 %v1998, %v1999
    %v2022 = vrot.slane %v2021, 4
    %v2023 = vadd.f32 %v2021, %v2022
    %v2024 = vrot.slane %v2023, 2
    %v2025 = vadd.f32 %v2023, %v2024
    %v2026 = vrot.slane %v2025, 1
    %v2027 = vadd.f32 %v2025, %v2026
    %v2028 = vmul.f32 %v1516, %v1840
    %v2029 = vmul.f32 %v1517, %v1841
    %v2030 = vmul.f32 %v1518, %v1842
    %v2031 = vmul.f32 %v1519, %v1843
    %v2032 = vmul.f32 %v1520, %v1844
    %v2033 = vmul.f32 %v1521, %v1845
    %v2034 = vmul.f32 %v1522, %v1846
    %v2035 = vmul.f32 %v1523, %v1847
    %v2036 = vadd.f32 %v2028, %v2029
    %v2037 = vrot.slane %v2036, 4
    %v2038 = vadd.f32 %v2036, %v2037
    %v2039 = vrot.slane %v2038, 2
    %v2040 = vadd.f32 %v2038, %v2039
    %v2041 = vrot.slane %v2040, 1
    %v2042 = vadd.f32 %v2040, %v2041
    %v2043 = vadd.f32 %v2030, %v2031
    %v2044 = vrot.slane %v2043, 4
    %v2045 = vadd.f32 %v2043, %v2044
    %v2046 = vrot.slane %v2045, 2
    %v2047 = vadd.f32 %v2045, %v2046
    %v2048 = vrot.slane %v2047, 1
    %v2049 = vadd.f32 %v2047, %v2048
    %v2050 = vadd.f32 %v2032, %v2033
    %v2051 = vrot.slane %v2050, 4
    %v2052 = vadd.f32 %v2050, %v2051
    %v2053 = vrot.slane %v2052, 2
    %v2054 = vadd.f32 %v2052, %v2053
    %v2055 = vrot.slane %v2054, 1
    %v2056 = vadd.f32 %v2054, %v2055
    %v2057 = vadd.f32 %v2034, %v2035
    %v2058 = vrot.slane %v2057, 4
    %v2059 = vadd.f32 %v2057, %v2058
    %v2060 = vrot.slane %v2059, 2
    %v2061 = vadd.f32 %v2059, %v2060
    %v2062 = vrot.slane %v2061, 1
    %v2063 = vadd.f32 %v2061, %v2062
    %v2064 = vmul.f32 %v1540, %v1840
    %v2065 = vmul.f32 %v1541, %v1841
    %v2066 = vmul.f32 %v1542, %v1842
    %v2067 = vmul.f32 %v1543, %v1843
    %v2068 = vmul.f32 %v1544, %v1844
    %v2069 = vmul.f32 %v1545, %v1845
    %v2070 = vmul.f32 %v1546, %v1846
    %v2071 = vmul.f32 %v1547, %v1847
    %v2072 = vadd.f32 %v2064, %v2065
    %v2073 = vrot.slane %v2072, 4
    %v2074 = vadd.f32 %v2072, %v2073
    %v2075 = vrot.slane %v2074, 2
    %v2076 = vadd.f32 %v2074, %v2075
    %v2077 = vrot.slane %v2076, 1
    %v2078 = vadd.f32 %v2076, %v2077
    %v2079 = vadd.f32 %v2066, %v2067
    %v2080 = vrot.slane %v2079, 4
    %v2081 = vadd.f32 %v2079, %v2080
    %v2082 = vrot.slane %v2081, 2
    %v2083 = vadd.f32 %v2081, %v2082
    %v2084 = vrot.slane %v2083, 1
    %v2085 = vadd.f32 %v2083, %v2084
    %v2086 = vadd.f32 %v2068, %v2069
    %v2087 = vrot.slane %v2086, 4
    %v2088 = vadd.f32 %v2086, %v2087
    %v2089 = vrot.slane %v2088, 2
    %v2090 = vadd.f32 %v2088, %v2089
    %v2091 = vrot.slane %v2090, 1
    %v2092 = vadd.f32 %v2090, %v2091
    %v2093 = vadd.f32 %v2070, %v2071
    %v2094 = vrot.slane %v2093, 4
    %v2095 = vadd.f32 %v2093, %v2094
    %v2096 = vrot.slane %v2095, 2
    %v2097 = vadd.f32 %v2095, %v2096
    %v2098 = vrot.slane %v2097, 1
    %v2099 = vadd.f32 %v2097, %v2098
    %v2100 = vmul.f32 %v1564, %v1840
    %v2101 = vmul.f32 %v1565, %v1841
    %v2102 = vmul.f32 %v1566, %v1842
    %v2103 = vmul.f32 %v1567, %v1843
    %v2104 = vmul.f32 %v1568, %v1844
    %v2105 = vmul.f32 %v1569, %v1845
    %v2106 = vmul.f32 %v1570, %v1846
    %v2107 = vmul.f32 %v1571, %v1847
    %v2108 = vadd.f32 %v2100, %v2101
    %v2109 = vrot.slane %v2108, 4
    %v2110 = vadd.f32 %v2108, %v2109
    %v2111 = vrot.slane %v2110, 2
    %v2112 = vadd.f32 %v2110, %v2111
    %v2113 = vrot.slane %v2112, 1
    %v2114 = vadd.f32 %v2112, %v2113
    %v2115 = vadd.f32 %v2102, %v2103
    %v2116 = vrot.slane %v2115, 4
    %v2117 = vadd.f32 %v2115, %v2116
    %v2118 = vrot.slane %v2117, 2
    %v2119 = vadd.f32 %v2117, %v2118
    %v2120 = vrot.slane %v2119, 1
    %v2121 = vadd.f32 %v2119, %v2120
    %v2122 = vadd.f32 %v2104, %v2105
    %v2123 = vrot.slane %v2122, 4
    %v2124 = vadd.f32 %v2122, %v2123
    %v2125 = vrot.slane %v2124, 2
    %v2126 = vadd.f32 %v2124, %v2125
    %v2127 = vrot.slane %v2126, 1
    %v2128 = vadd.f32 %v2126, %v2127
    %v2129 = vadd.f32 %v2106, %v2107
    %v2130 = vrot.slane %v2129, 4
    %v2131 = vadd.f32 %v2129, %v2130
    %v2132 = vrot.slane %v2131, 2
    %v2133 = vadd.f32 %v2131, %v2132
    %v2134 = vrot.slane %v2133, 1
    %v2135 = vadd.f32 %v2133, %v2134
    %v2136 = vmul.f32 %v1588, %v1840
    %v2137 = vmul.f32 %v1589, %v1841
    %v2138 = vmul.f32 %v1590, %v1842
    %v2139 = vmul.f32 %v1591, %v1843
    %v2140 = vmul.f32 %v1592, %v1844
    %v2141 = vmul.f32 %v1593, %v1845
    %v2142 = vmul.f32 %v1594, %v1846
    %v2143 = vmul.f32 %v1595, %v1847
    %v2144 = vadd.f32 %v2136, %v2137
    %v2145 = vrot.slane %v2144, 4
    %v2146 = vadd.f32 %v2144, %v2145
    %v2147 = vrot.slane %v2146, 2
    %v2148 = vadd.f32 %v2146, %v2147
    %v2149 = vrot.slane %v2148, 1
    %v2150 = vadd.f32 %v2148, %v2149
    %v2151 = vadd.f32 %v2138, %v2139
    %v2152 = vrot.slane %v2151, 4
    %v2153 = vadd.f32 %v2151, %v2152
    %v2154 = vrot.slane %v2153, 2
    %v2155 = vadd.f32 %v2153, %v2154
    %v2156 = vrot.slane %v2155, 1
    %v2157 = vadd.f32 %v2155, %v2156
    %v2158 = vadd.f32 %v2140, %v2141
    %v2159 = vrot.slane %v2158, 4
    %v2160 = vadd.f32 %v2158, %v2159
    %v2161 = vrot.slane %v2160, 2
    %v2162 = vadd.f32 %v2160, %v2161
    %v2163 = vrot.slane %v2162, 1
    %v2164 = vadd.f32 %v2162, %v2163
    %v2165 = vadd.f32 %v2142, %v2143
    %v2166 = vrot.slane %v2165, 4
    %v2167 = vadd.f32 %v2165, %v2166
    %v2168 = vrot.slane %v2167, 2
    %v2169 = vadd.f32 %v2167, %v2168
    %v2170 = vrot.slane %v2169, 1
    %v2171 = vadd.f32 %v2169, %v2170
    %v2172 = vmul.f32 %v1612, %v1840
    %v2173 = vmul.f32 %v1613, %v1841
    %v2174 = vmul.f32 %v1614, %v1842
    %v2175 = vmul.f32 %v1615, %v1843
    %v2176 = vmul.f32 %v1616, %v1844
    %v2177 = vmul.f32 %v1617, %v1845
    %v2178 = vmul.f32 %v1618, %v1846
    %v2179 = vmul.f32 %v1619, %v1847
    %v2180 = vadd.f32 %v2172, %v2173
    %v2181 = vrot.slane %v2180, 4
    %v2182 = vadd.f32 %v2180, %v2181
    %v2183 = vrot.slane %v2182, 2
    %v2184 = vadd.f32 %v2182, %v2183
    %v2185 = vrot.slane %v2184, 1
    %v2186 = vadd.f32 %v2184, %v2185
    %v2187 = vadd.f32 %v2174, %v2175
    %v2188 = vrot.slane %v2187, 4
    %v2189 = vadd.f32 %v2187, %v2188
    %v2190 = vrot.slane %v2189, 2
    %v2191 = vadd.f32 %v2189, %v2190
    %v2192 = vrot.slane %v2191, 1
    %v2193 = vadd.f32 %v2191, %v2192
    %v2194 = vadd.f32 %v2176, %v2177
    %v2195 = vrot.slane %v2194, 4
    %v2196 = vadd.f32 %v2194, %v2195
    %v2197 = vrot.slane %v2196, 2
    %v2198 = vadd.f32 %v2196, %v2197
    %v2199 = vrot.slane %v2198, 1
    %v2200 = vadd.f32 %v2198, %v2199
    %v2201 = vadd.f32 %v2178, %v2179
    %v2202 = vrot.slane %v2201, 4
    %v2203 = vadd.f32 %v2201, %v2202
    %v2204 = vrot.slane %v2203, 2
    %v2205 = vadd.f32 %v2203, %v2204
    %v2206 = vrot.slane %v2205, 1
    %v2207 = vadd.f32 %v2205, %v2206
    %v2208 = vmul.f32 %v1636, %v1840
    %v2209 = vmul.f32 %v1637, %v1841
    %v2210 = vmul.f32 %v1638, %v1842
    %v2211 = vmul.f32 %v1639, %v1843
    %v2212 = vmul.f32 %v1640, %v1844
    %v2213 = vmul.f32 %v1641, %v1845
    %v2214 = vmul.f32 %v1642, %v1846
    %v2215 = vmul.f32 %v1643, %v1847
    %v2216 = vadd.f32 %v2208, %v2209
    %v2217 = vrot.slane %v2216, 4
    %v2218 = vadd.f32 %v2216, %v2217
    %v2219 = vrot.slane %v2218, 2
    %v2220 = vadd.f32 %v2218, %v2219
    %v2221 = vrot.slane %v2220, 1
    %v2222 = vadd.f32 %v2220, %v2221
    %v2223 = vadd.f32 %v2210, %v2211
    %v2224 = vrot.slane %v2223, 4
    %v2225 = vadd.f32 %v2223, %v2224
    %v2226 = vrot.slane %v2225, 2
    %v2227 = vadd.f32 %v2225, %v2226
    %v2228 = vrot.slane %v2227, 1
    %v2229 = vadd.f32 %v2227, %v2228
    %v2230 = vadd.f32 %v2212, %v2213
    %v2231 = vrot.slane %v2230, 4
    %v2232 = vadd.f32 %v2230, %v2231
    %v2233 = vrot.slane %v2232, 2
    %v2234 = vadd.f32 %v2232, %v2233
    %v2235 = vrot.slane %v2234, 1
    %v2236 = vadd.f32 %v2234, %v2235
    %v2237 = vadd.f32 %v2214, %v2215
    %v2238 = vrot.slane %v2237, 4
    %v2239 = vadd.f32 %v2237, %v2238
    %v2240 = vrot.slane %v2239, 2
    %v2241 = vadd.f32 %v2239, %v2240
    %v2242 = vrot.slane %v2241, 1
    %v2243 = vadd.f32 %v2241, %v2242
    %v2244 = vmul.f32 %v1660, %v1840
    %v2245 = vmul.f32 %v1661, %v1841
    %v2246 = vmul.f32 %v1662, %v1842
    %v2247 = vmul.f32 %v1663, %v1843
    %v2248 = vmul.f32 %v1664, %v1844
    %v2249 = vmul.f32 %v1665, %v1845
    %v2250 = vmul.f32 %v1666, %v1846
    %v2251 = vmul.f32 %v1667, %v1847
    %v2252 = vadd.f32 %v2244, %v2245
    %v2253 = vrot.slane %v2252, 4
    %v2254 = vadd.f32 %v2252, %v2253
    %v2255 = vrot.slane %v2254, 2
    %v2256 = vadd.f32 %v2254, %v2255
    %v2257 = vrot.slane %v2256, 1
    %v2258 = vadd.f32 %v2256, %v2257
    %v2259 = vadd.f32 %v2246, %v2247
    %v2260 = vrot.slane %v2259, 4
    %v2261 = vadd.f32 %v2259, %v2260
    %v2262 = vrot.slane %v2261, 2
    %v2263 = vadd.f32 %v2261, %v2262
    %v2264 = vrot.slane %v2263, 1
    %v2265 = vadd.f32 %v2263, %v2264
    %v2266 = vadd.f32 %v2248, %v2249
    %v2267 = vrot.slane %v2266, 4
    %v2268 = vadd.f32 %v2266, %v2267
    %v2269 = vrot.slane %v2268, 2
    %v2270 = vadd.f32 %v2268, %v2269
    %v2271 = vrot.slane %v2270, 1
    %v2272 = vadd.f32 %v2270, %v2271
    %v2273 = vadd.f32 %v2250, %v2251
    %v2274 = vrot.slane %v2273, 4
    %v2275 = vadd.f32 %v2273, %v2274
    %v2276 = vrot.slane %v2275, 2
    %v2277 = vadd.f32 %v2275, %v2276
    %v2278 = vrot.slane %v2277, 1
    %v2279 = vadd.f32 %v2277, %v2278
    %v2280 = vmul.f32 %v1684, %v1840
    %v2281 = vmul.f32 %v1685, %v1841
    %v2282 = vmul.f32 %v1686, %v1842
    %v2283 = vmul.f32 %v1687, %v1843
    %v2284 = vmul.f32 %v1688, %v1844
    %v2285 = vmul.f32 %v1689, %v1845
    %v2286 = vmul.f32 %v1690, %v1846
    %v2287 = vmul.f32 %v1691, %v1847
    %v2288 = vadd.f32 %v2280, %v2281
    %v2289 = vrot.slane %v2288, 4
    %v2290 = vadd.f32 %v2288, %v2289
    %v2291 = vrot.slane %v2290, 2
    %v2292 = vadd.f32 %v2290, %v2291
    %v2293 = vrot.slane %v2292, 1
    %v2294 = vadd.f32 %v2292, %v2293
    %v2295 = vadd.f32 %v2282, %v2283
    %v2296 = vrot.slane %v2295, 4
    %v2297 = vadd.f32 %v2295, %v2296
    %v2298 = vrot.slane %v2297, 2
    %v2299 = vadd.f32 %v2297, %v2298
    %v2300 = vrot.slane %v2299, 1
    %v2301 = vadd.f32 %v2299, %v2300
    %v2302 = vadd.f32 %v2284, %v2285
    %v2303 = vrot.slane %v2302, 4
    %v2304 = vadd.f32 %v2302, %v2303
    %v2305 = vrot.slane %v2304, 2
    %v2306 = vadd.f32 %v2304, %v2305
    %v2307 = vrot.slane %v2306, 1
    %v2308 = vadd.f32 %v2306, %v2307
    %v2309 = vadd.f32 %v2286, %v2287
    %v2310 = vrot.slane %v2309, 4
    %v2311 = vadd.f32 %v2309, %v2310
    %v2312 = vrot.slane %v2311, 2
    %v2313 = vadd.f32 %v2311, %v2312
    %v2314 = vrot.slane %v2313, 1
    %v2315 = vadd.f32 %v2313, %v2314
    %v2316 = vmul.f32 %v1708, %v1840
    %v2317 = vmul.f32 %v1709, %v1841
    %v2318 = vmul.f32 %v1710, %v1842
    %v2319 = vmul.f32 %v1711, %v1843
    %v2320 = vmul.f32 %v1712, %v1844
    %v2321 = vmul.f32 %v1713, %v1845
    %v2322 = vmul.f32 %v1714, %v1846
    %v2323 = vmul.f32 %v1715, %v1847
    %v2324 = vadd.f32 %v2316, %v2317
    %v2325 = vrot.slane %v2324, 4
    %v2326 = vadd.f32 %v2324, %v2325
    %v2327 = vrot.slane %v2326, 2
    %v2328 = vadd.f32 %v2326, %v2327
    %v2329 = vrot.slane %v2328, 1
    %v2330 = vadd.f32 %v2328, %v2329
    %v2331 = vadd.f32 %v2318, %v2319
    %v2332 = vrot.slane %v2331, 4
    %v2333 = vadd.f32 %v2331, %v2332
    %v2334 = vrot.slane %v2333, 2
    %v2335 = vadd.f32 %v2333, %v2334
    %v2336 = vrot.slane %v2335, 1
    %v2337 = vadd.f32 %v2335, %v2336
    %v2338 = vadd.f32 %v2320, %v2321
    %v2339 = vrot.slane %v2338, 4
    %v2340 = vadd.f32 %v2338, %v2339
    %v2341 = vrot.slane %v2340, 2
    %v2342 = vadd.f32 %v2340, %v2341
    %v2343 = vrot.slane %v2342, 1
    %v2344 = vadd.f32 %v2342, %v2343
    %v2345 = vadd.f32 %v2322, %v2323
    %v2346 = vrot.slane %v2345, 4
    %v2347 = vadd.f32 %v2345, %v2346
    %v2348 = vrot.slane %v2347, 2
    %v2349 = vadd.f32 %v2347, %v2348
    %v2350 = vrot.slane %v2349, 1
    %v2351 = vadd.f32 %v2349, %v2350
    %v2352 = vmul.f32 %v1732, %v1840
    %v2353 = vmul.f32 %v1733, %v1841
    %v2354 = vmul.f32 %v1734, %v1842
    %v2355 = vmul.f32 %v1735, %v1843
    %v2356 = vmul.f32 %v1736, %v1844
    %v2357 = vmul.f32 %v1737, %v1845
    %v2358 = vmul.f32 %v1738, %v1846
    %v2359 = vmul.f32 %v1739, %v1847
    %v2360 = vadd.f32 %v2352, %v2353
    %v2361 = vrot.slane %v2360, 4
    %v2362 = vadd.f32 %v2360, %v2361
    %v2363 = vrot.slane %v2362, 2
    %v2364 = vadd.f32 %v2362, %v2363
    %v2365 = vrot.slane %v2364, 1
    %v2366 = vadd.f32 %v2364, %v2365
    %v2367 = vadd.f32 %v2354, %v2355
    %v2368 = vrot.slane %v2367, 4
    %v2369 = vadd.f32 %v2367, %v2368
    %v2370 = vrot.slane %v2369, 2
    %v2371 = vadd.f32 %v2369, %v2370
    %v2372 = vrot.slane %v2371, 1
    %v2373 = vadd.f32 %v2371, %v2372
    %v2374 = vadd.f32 %v2356, %v2357
    %v2375 = vrot.slane %v2374, 4
    %v2376 = vadd.f32 %v2374, %v2375
    %v2377 = vrot.slane %v2376, 2
    %v2378 = vadd.f32 %v2376, %v2377
    %v2379 = vrot.slane %v2378, 1
    %v2380 = vadd.f32 %v2378, %v2379
    %v2381 = vadd.f32 %v2358, %v2359
    %v2382 = vrot.slane %v2381, 4
    %v2383 = vadd.f32 %v2381, %v2382
    %v2384 = vrot.slane %v2383, 2
    %v2385 = vadd.f32 %v2383, %v2384
    %v2386 = vrot.slane %v2385, 1
    %v2387 = vadd.f32 %v2385, %v2386
    %v2388 = vmul.f32 %v1756, %v1840
    %v2389 = vmul.f32 %v1757, %v1841
    %v2390 = vmul.f32 %v1758, %v1842
    %v2391 = vmul.f32 %v1759, %v1843
    %v2392 = vmul.f32 %v1760, %v1844
    %v2393 = vmul.f32 %v1761, %v1845
    %v2394 = vmul.f32 %v1762, %v1846
    %v2395 = vmul.f32 %v1763, %v1847
    %v2396 = vadd.f32 %v2388, %v2389
    %v2397 = vrot.slane %v2396, 4
    %v2398 = vadd.f32 %v2396, %v2397
    %v2399 = vrot.slane %v2398, 2
    %v2400 = vadd.f32 %v2398, %v2399
    %v2401 = vrot.slane %v2400, 1
    %v2402 = vadd.f32 %v2400, %v2401
    %v2403 = vadd.f32 %v2390, %v2391
    %v2404 = vrot.slane %v2403, 4
    %v2405 = vadd.f32 %v2403, %v2404
    %v2406 = vrot.slane %v2405, 2
    %v2407 = vadd.f32 %v2405, %v2406
    %v2408 = vrot.slane %v2407, 1
    %v2409 = vadd.f32 %v2407, %v2408
    %v2410 = vadd.f32 %v2392, %v2393
    %v2411 = vrot.slane %v2410, 4
    %v2412 = vadd.f32 %v2410, %v2411
    %v2413 = vrot.slane %v2412, 2
    %v2414 = vadd.f32 %v2412, %v2413
    %v2415 = vrot.slane %v2414, 1
    %v2416 = vadd.f32 %v2414, %v2415
    %v2417 = vadd.f32 %v2394, %v2395
    %v2418 = vrot.slane %v2417, 4
    %v2419 = vadd.f32 %v2417, %v2418
    %v2420 = vrot.slane %v2419, 2
    %v2421 = vadd.f32 %v2419, %v2420
    %v2422 = vrot.slane %v2421, 1
    %v2423 = vadd.f32 %v2421, %v2422
    %vm2424 = vcmask 1040384
    %v2425 = vsel %vm2424, %v1862, %v1898
    %v2426 = vsel %vm2424, %v1869, %v1905
    %v2427 = vsel %vm2424, %v1876, %v1912
    %v2428 = vsel %vm2424, %v1883, %v1919
    %vm2429 = vcmask 1041408
    %v2430 = vsel %vm2429, %v2425, %v1934
    %v2431 = vsel %vm2429, %v2426, %v1941
    %v2432 = vsel %vm2429, %v2427, %v1948
    %v2433 = vsel %vm2429, %v2428, %v1955
    %vm2434 = vcmask 1042432
    %v2435 = vsel %vm2434, %v2430, %v1970
    %v2436 = vsel %vm2434, %v2431, %v1977
    %v2437 = vsel %vm2434, %v2432, %v1984
    %v2438 = vsel %vm2434, %v2433, %v1991
    %vm2439 = vcmask 1043456
    %v2440 = vsel %vm2439, %v2435, %v2006
    %v2441 = vsel %vm2439, %v2436, %v2013
    %v2442 = vsel %vm2439, %v2437, %v2020
    %v2443 = vsel %vm2439, %v2438, %v2027
    %vm2444 = vcmask 1044480
    %v2445 = vsel %vm2444, %v2440, %v2042
    %v2446 = vsel %vm2444, %v2441, %v2049
    %v2447 = vsel %vm2444, %v2442, %v2056
    %v2448 = vsel %vm2444, %v2443, %v2063
    %vm2449 = vcmask 1045504
    %v2450 = vsel %vm2449, %v2445, %v2078
    %v2451 = vsel %vm2449, %v2446, %v2085
    %v2452 = vsel %vm2449, %v2447, %v2092
    %v2453 = vsel %vm2449, %v2448, %v2099
    %vm2454 = vcmask 1046528
    %v2455 = vsel %vm2454, %v2450, %v2114
    %v2456 = vsel %vm2454, %v2451, %v2121
    %v2457 = vsel %vm2454, %v2452, %v2128
    %v2458 = vsel %vm2454, %v2453, %v2135
    %v2459 = vsel %vm2424, %v2150, %v2186
    %v2460 = vsel %vm2424, %v2157, %v2193
    %v2461 = vsel %vm2424, %v2164, %v2200
    %v2462 = vsel %vm2424, %v2171, %v2207
    %v2463 = vsel %vm2429, %v2459, %v2222
    %v2464 = vsel %vm2429, %v2460, %v2229
    %v2465 = vsel %vm2429, %v2461, %v2236
    %v2466 = vsel %vm2429, %v2462, %v2243
    %v2467 = vsel %vm2434, %v2463, %v2258
    %v2468 = vsel %vm2434, %v2464, %v2265
    %v2469 = vsel %vm2434, %v2465, %v2272
    %v2470 = vsel %vm2434, %v2466, %v2279
    %v2471 = vsel %vm2439, %v2467, %v2294
    %v2472 = vsel %vm2439, %v2468, %v2301
    %v2473 = vsel %vm2439, %v2469, %v2308
    %v2474 = vsel %vm2439, %v2470, %v2315
    %v2475 = vsel %vm2444, %v2471, %v2330
    %v2476 = vsel %vm2444, %v2472, %v2337
    %v2477 = vsel %vm2444, %v2473, %v2344
    %v2478 = vsel %vm2444, %v2474, %v2351
    %v2479 = vsel %vm2449, %v2475, %v2366
    %v2480 = vsel %vm2449, %v2476, %v2373
    %v2481 = vsel %vm2449, %v2477, %v2380
    %v2482 = vsel %vm2449, %v2478, %v2387
    %v2483 = vsel %vm2454, %v2479, %v2402
    %v2484 = vsel %vm2454, %v2480, %v2409
    %v2485 = vsel %vm2454, %v2481, %v2416
    %v2486 = vsel %vm2454, %v2482, %v2423
    %v2487 = vadd.f32 %v2455, 0.0
    %v2488 = vadd.f32 %v2483, 0.0
    %v2489 = vadd.f32 %v2456, 0.0
    %v2490 = vadd.f32 %v2484, 0.0
    %v2491 = vadd.f32 %v2457, 0.0
    %v2492 = vadd.f32 %v2485, 0.0
    %v2493 = vadd.f32 %v2458, 0.0
    %v2494 = vadd.f32 %v2486, 0.0
    %v2495 = vmax.f32 %v2487, %v2491
    %v2496 = vmax.f32 %v2489, %v2493
    %v2497 = vmax.f32 %v2495, %v2496
    %v2498 = vmax.f32 %v2488, %v2492
    %v2499 = vmax.f32 %v2490, %v2494
    %v2500 = vmax.f32 %v2498, %v2499
    %v2501 = vsub.f32 %v2487, %v2497
    %v2502 = vsub.f32 %v2488, %v2500
    %v2503 = vsub.f32 %v2489, %v2497
    %v2504 = vsub.f32 %v2490, %v2500
    %v2505 = vsub.f32 %v2491, %v2497
    %v2506 = vsub.f32 %v2492, %v2500
    %v2507 = vsub.f32 %v2493, %v2497
    %v2508 = vsub.f32 %v2494, %v2500
    %v2509 = vmul.f32 %v2501, 1.442695
    %v2510 = vpow.pop %v2509
    %v2511 = vmul.f32 %v2502, 1.442695
    %v2512 = vpow.pop %v2511
    %v2513 = vmul.f32 %v2503, 1.442695
    %v2514 = vpow.pop %v2513
    %v2515 = vmul.f32 %v2504, 1.442695
    %v2516 = vpow.pop %v2515
    %v2517 = vmul.f32 %v2505, 1.442695
    %v2518 = vpow.pop %v2517
    %v2519 = vmul.f32 %v2506, 1.442695
    %v2520 = vpow.pop %v2519
    %v2521 = vmul.f32 %v2507, 1.442695
    %v2522 = vpow.pop %v2521
    %v2523 = vmul.f32 %v2508, 1.442695
    %v2524 = vpow.pop %v2523
    %v2525 = vadd.f32 %v2510, %v2514
    %v2526 = vadd.f32 %v2525, %v2518
    %v2527 = vadd.f32 %v2526, %v2522
    %v2528 = vadd.f32 %v2512, %v2516
    %v2529 = vadd.f32 %v2528, %v2520
    %v2530 = vadd.f32 %v2529, %v2524
    %v2531 = vrcp.pop %v2527
    %v2532 = vrcp.pop %v2530
    %v2533 = vmul.f32 %v2510, %v2531
    %v2534 = vmul.f32 %v2512, %v2532
    %v2535 = vmul.f32 %v2514, %v2531
    %v2536 = vmul.f32 %v2516, %v2532
    %v2537 = vmul.f32 %v2518, %v2531
    %v2538 = vmul.f32 %v2520, %v2532
    %v2539 = vmul.f32 %v2522, %v2531
    %v2540 = vmul.f32 %v2524, %v2532
    %v2541 = vlaneseq
    %v2542 = vshrl.u32 %v2541, 7
    %v2543 = vsub.s32 0, %v2542
    %v2544 = vrot.slane %v2533, %v2543
    %v2545 = vlaneseq
    %v2546 = vshrl.u32 %v2545, 7
    %v2547 = vsub.s32 0, %v2546
    %v2548 = vrot.slane %v2535, %v2547
    %v2549 = vlaneseq
    %v2550 = vshrl.u32 %v2549, 7
    %v2551 = vsub.s32 0, %v2550
    %v2552 = vrot.slane %v2537, %v2551
    %v2553 = vlaneseq
    %v2554 = vshrl.u32 %v2553, 7
    %v2555 = vsub.s32 0, %v2554
    %v2556 = vrot.slane %v2539, %v2555
    %v2557 = vmul.f32 %v2544, %v1396
    %v2558 = vmul.f32 %v2544, %v1397
    %v2559 = vmul.f32 %v2548, %v1398
    %v2560 = vmul.f32 %v2548, %v1399
    %v2561 = vmul.f32 %v2552, %v1400
    %v2562 = vmul.f32 %v2552, %v1401
    %v2563 = vmul.f32 %v2556, %v1402
    %v2564 = vmul.f32 %v2556, %v1403
    %v2565 = vadd.f32 %v2557, 0.0
    %v2566 = vadd.f32 %v2558, 0.0
    %v2567 = vadd.f32 %v2559, 0.0
    %v2568 = vadd.f32 %v2560, 0.0
    %v2569 = vadd.f32 %v2561, 0.0
    %v2570 = vadd.f32 %v2562, 0.0
    %v2571 = vadd.f32 %v2563, 0.0
    %v2572 = vadd.f32 %v2564, 0.0
    %v2573 = vlaneseq
    %v2574 = vshrl.u32 %v2573, 7
    %v2575 = vsub.s32 1, %v2574
    %v2576 = vrot.slane %v2533, %v2575
    %v2577 = vlaneseq
    %v2578 = vshrl.u32 %v2577, 7
    %v2579 = vsub.s32 1, %v2578
    %v2580 = vrot.slane %v2535, %v2579
    %v2581 = vlaneseq
    %v2582 = vshrl.u32 %v2581, 7
    %v2583 = vsub.s32 1, %v2582
    %v2584 = vrot.slane %v2537, %v2583
    %v2585 = vlaneseq
    %v2586 = vshrl.u32 %v2585, 7
    %v2587 = vsub.s32 1, %v2586
    %v2588 = vrot.slane %v2539, %v2587
    %v2589 = vmul.f32 %v2576, %v1420
    %v2590 = vmul.f32 %v2576, %v1421
    %v2591 = vmul.f32 %v2580, %v1422
    %v2592 = vmul.f32 %v2580, %v1423
    %v2593 = vmul.f32 %v2584, %v1424
    %v2594 = vmul.f32 %v2584, %v1425
    %v2595 = vmul.f32 %v2588, %v1426
    %v2596 = vmul.f32 %v2588, %v1427
    %v2597 = vadd.f32 %v2565, %v2589
    %v2598 = vadd.f32 %v2566, %v2590
    %v2599 = vadd.f32 %v2567, %v2591
    %v2600 = vadd.f32 %v2568, %v2592
    %v2601 = vadd.f32 %v2569, %v2593
    %v2602 = vadd.f32 %v2570, %v2594
    %v2603 = vadd.f32 %v2571, %v2595
    %v2604 = vadd.f32 %v2572, %v2596
    %v2605 = vlaneseq
    %v2606 = vshrl.u32 %v2605, 7
    %v2607 = vsub.s32 2, %v2606
    %v2608 = vrot.slane %v2533, %v2607
    %v2609 = vlaneseq
    %v2610 = vshrl.u32 %v2609, 7
    %v2611 = vsub.s32 2, %v2610
    %v2612 = vrot.slane %v2535, %v2611
    %v2613 = vlaneseq
    %v2614 = vshrl.u32 %v2613, 7
    %v2615 = vsub.s32 2, %v2614
    %v2616 = vrot.slane %v2537, %v2615
    %v2617 = vlaneseq
    %v2618 = vshrl.u32 %v2617, 7
    %v2619 = vsub.s32 2, %v2618
    %v2620 = vrot.slane %v2539, %v2619
    %v2621 = vmul.f32 %v2608, %v1444
    %v2622 = vmul.f32 %v2608, %v1445
    %v2623 = vmul.f32 %v2612, %v1446
    %v2624 = vmul.f32 %v2612, %v1447
    %v2625 = vmul.f32 %v2616, %v1448
    %v2626 = vmul.f32 %v2616, %v1449
    %v2627 = vmul.f32 %v2620, %v1450
    %v2628 = vmul.f32 %v2620, %v1451
    %v2629 = vadd.f32 %v2597, %v2621
    %v2630 = vadd.f32 %v2598, %v2622
    %v2631 = vadd.f32 %v2599, %v2623
    %v2632 = vadd.f32 %v2600, %v2624
    %v2633 = vadd.f32 %v2601, %v2625
    %v2634 = vadd.f32 %v2602, %v2626
    %v2635 = vadd.f32 %v2603, %v2627
    %v2636 = vadd.f32 %v2604, %v2628
    %v2637 = vlaneseq
    %v2638 = vshrl.u32 %v2637, 7
    %v2639 = vsub.s32 3, %v2638
    %v2640 = vrot.slane %v2533, %v2639
    %v2641 = vlaneseq
    %v2642 = vshrl.u32 %v2641, 7
    %v2643 = vsub.s32 3, %v2642
    %v2644 = vrot.slane %v2535, %v2643
    %v2645 = vlaneseq
    %v2646 = vshrl.u32 %v2645, 7
    %v2647 = vsub.s32 3, %v2646
    %v2648 = vrot.slane %v2537, %v2647
    %v2649 = vlaneseq
    %v2650 = vshrl.u32 %v2649, 7
    %v2651 = vsub.s32 3, %v2650
    %v2652 = vrot.slane %v2539, %v2651
    %v2653 = vmul.f32 %v2640, %v1468
    %v2654 = vmul.f32 %v2640, %v1469
    %v2655 = vmul.f32 %v2644, %v1470
    %v2656 = vmul.f32 %v2644, %v1471
    %v2657 = vmul.f32 %v2648, %v1472
    %v2658 = vmul.f32 %v2648, %v1473
    %v2659 = vmul.f32 %v2652, %v1474
    %v2660 = vmul.f32 %v2652, %v1475
    %v2661 = vadd.f32 %v2629, %v2653
    %v2662 = vadd.f32 %v2630, %v2654
    %v2663 = vadd.f32 %v2631, %v2655
    %v2664 = vadd.f32 %v2632, %v2656
    %v2665 = vadd.f32 %v2633, %v2657
    %v2666 = vadd.f32 %v2634, %v2658
    %v2667 = vadd.f32 %v2635, %v2659
    %v2668 = vadd.f32 %v2636, %v2660
    %v2669 = vlaneseq
    %v2670 = vshrl.u32 %v2669, 7
    %v2671 = vsub.s32 4, %v2670
    %v2672 = vrot.slane %v2533, %v2671
    %v2673 = vlaneseq
    %v2674 = vshrl.u32 %v2673, 7
    %v2675 = vsub.s32 4, %v2674
    %v2676 = vrot.slane %v2535, %v2675
    %v2677 = vlaneseq
    %v2678 = vshrl.u32 %v2677, 7
    %v2679 = vsub.s32 4, %v2678
    %v2680 = vrot.slane %v2537, %v2679
    %v2681 = vlaneseq
    %v2682 = vshrl.u32 %v2681, 7
    %v2683 = vsub.s32 4, %v2682
    %v2684 = vrot.slane %v2539, %v2683
    %v2685 = vmul.f32 %v2672, %v1492
    %v2686 = vmul.f32 %v2672, %v1493
    %v2687 = vmul.f32 %v2676, %v1494
    %v2688 = vmul.f32 %v2676, %v1495
    %v2689 = vmul.f32 %v2680, %v1496
    %v2690 = vmul.f32 %v2680, %v1497
    %v2691 = vmul.f32 %v2684, %v1498
    %v2692 = vmul.f32 %v2684, %v1499
    %v2693 = vadd.f32 %v2661, %v2685
    %v2694 = vadd.f32 %v2662, %v2686
    %v2695 = vadd.f32 %v2663, %v2687
    %v2696 = vadd.f32 %v2664, %v2688
    %v2697 = vadd.f32 %v2665, %v2689
    %v2698 = vadd.f32 %v2666, %v2690
    %v2699 = vadd.f32 %v2667, %v2691
    %v2700 = vadd.f32 %v2668, %v2692
    %v2701 = vlaneseq
    %v2702 = vshrl.u32 %v2701, 7
    %v2703 = vsub.s32 5, %v2702
    %v2704 = vrot.slane %v2533, %v2703
    %v2705 = vlaneseq
    %v2706 = vshrl.u32 %v2705, 7
    %v2707 = vsub.s32 5, %v2706
    %v2708 = vrot.slane %v2535, %v2707
    %v2709 = vlaneseq
    %v2710 = vshrl.u32 %v2709, 7
    %v2711 = vsub.s32 5, %v2710
    %v2712 = vrot.slane %v2537, %v2711
    %v2713 = vlaneseq
    %v2714 = vshrl.u32 %v2713, 7
    %v2715 = vsub.s32 5, %v2714
    %v2716 = vrot.slane %v2539, %v2715
    %v2717 = vmul.f32 %v2704, %v1516
    %v2718 = vmul.f32 %v2704, %v1517
    %v2719 = vmul.f32 %v2708, %v1518
    %v2720 = vmul.f32 %v2708, %v1519
    %v2721 = vmul.f32 %v2712, %v1520
    %v2722 = vmul.f32 %v2712, %v1521
    %v2723 = vmul.f32 %v2716, %v1522
    %v2724 = vmul.f32 %v2716, %v1523
    %v2725 = vadd.f32 %v2693, %v2717
    %v2726 = vadd.f32 %v2694, %v2718
    %v2727 = vadd.f32 %v2695, %v2719
    %v2728 = vadd.f32 %v2696, %v2720
    %v2729 = vadd.f32 %v2697, %v2721
    %v2730 = vadd.f32 %v2698, %v2722
    %v2731 = vadd.f32 %v2699, %v2723
    %v2732 = vadd.f32 %v2700, %v2724
    %v2733 = vlaneseq
    %v2734 = vshrl.u32 %v2733, 7
    %v2735 = vsub.s32 6, %v2734
    %v2736 = vrot.slane %v2533, %v2735
    %v2737 = vlaneseq
    %v2738 = vshrl.u32 %v2737, 7
    %v2739 = vsub.s32 6, %v2738
    %v2740 = vrot.slane %v2535, %v2739
    %v2741 = vlaneseq
    %v2742 = vshrl.u32 %v2741, 7
    %v2743 = vsub.s32 6, %v2742
    %v2744 = vrot.slane %v2537, %v2743
    %v2745 = vlaneseq
    %v2746 = vshrl.u32 %v2745, 7
    %v2747 = vsub.s32 6, %v2746
    %v2748 = vrot.slane %v2539, %v2747
    %v2749 = vmul.f32 %v2736, %v1540
    %v2750 = vmul.f32 %v2736, %v1541
    %v2751 = vmul.f32 %v2740, %v1542
    %v2752 = vmul.f32 %v2740, %v1543
    %v2753 = vmul.f32 %v2744, %v1544
    %v2754 = vmul.f32 %v2744, %v1545
    %v2755 = vmul.f32 %v2748, %v1546
    %v2756 = vmul.f32 %v2748, %v1547
    %v2757 = vadd.f32 %v2725, %v2749
    %v2758 = vadd.f32 %v2726, %v2750
    %v2759 = vadd.f32 %v2727, %v2751
    %v2760 = vadd.f32 %v2728, %v2752
    %v2761 = vadd.f32 %v2729, %v2753
    %v2762 = vadd.f32 %v2730, %v2754
    %v2763 = vadd.f32 %v2731, %v2755
    %v2764 = vadd.f32 %v2732, %v2756
    %v2765 = vlaneseq
    %v2766 = vshrl.u32 %v2765, 7
    %v2767 = vsub.s32 7, %v2766
    %v2768 = vrot.slane %v2533, %v2767
    %v2769 = vlaneseq
    %v2770 = vshrl.u32 %v2769, 7
    %v2771 = vsub.s32 7, %v2770
    %v2772 = vrot.slane %v2535, %v2771
    %v2773 = vlaneseq
    %v2774 = vshrl.u32 %v2773, 7
    %v2775 = vsub.s32 7, %v2774
    %v2776 = vrot.slane %v2537, %v2775
    %v2777 = vlaneseq
    %v2778 = vshrl.u32 %v2777, 7
    %v2779 = vsub.s32 7, %v2778
    %v2780 = vrot.slane %v2539, %v2779
    %v2781 = vmul.f32 %v2768, %v1564
    %v2782 = vmul.f32 %v2768, %v1565
    %v2783 = vmul.f32 %v2772, %v1566
    %v2784 = vmul.f32 %v2772, %v1567
    %v2785 = vmul.f32 %v2776, %v1568
    %v2786 = vmul.f32 %v2776, %v1569
    %v2787 = vmul.f32 %v2780, %v1570
    %v2788 = vmul.f32 %v2780, %v1571
    %v2789 = vadd.f32 %v2757, %v2781
    %v2790 = vadd.f32 %v2758, %v2782
    %v2791 = vadd.f32 %v2759, %v2783
    %v2792 = vadd.f32 %v2760, %v2784
    %v2793 = vadd.f32 %v2761, %v2785
    %v2794 = vadd.f32 %v2762, %v2786
    %v2795 = vadd.f32 %v2763, %v2787
    %v2796 = vadd.f32 %v2764, %v2788
    %v2797 = vlaneseq
    %v2798 = vshrl.u32 %v2797, 7
    %v2799 = vsub.s32 0, %v2798
    %v2800 = vrot.slane %v2534, %v2799
    %v2801 = vlaneseq
    %v2802 = vshrl.u32 %v2801, 7
    %v2803 = vsub.s32 0, %v2802
    %v2804 = vrot.slane %v2536, %v2803
    %v2805 = vlaneseq
    %v2806 = vshrl.u32 %v2805, 7
    %v2807 = vsub.s32 0, %v2806
    %v2808 = vrot.slane %v2538, %v2807
    %v2809 = vlaneseq
    %v2810 = vshrl.u32 %v2809, 7
    %v2811 = vsub.s32 0, %v2810
    %v2812 = vrot.slane %v2540, %v2811
    %v2813 = vmul.f32 %v2800, %v1588
    %v2814 = vmul.f32 %v2800, %v1589
    %v2815 = vmul.f32 %v2804, %v1590
    %v2816 = vmul.f32 %v2804, %v1591
    %v2817 = vmul.f32 %v2808, %v1592
    %v2818 = vmul.f32 %v2808, %v1593
    %v2819 = vmul.f32 %v2812, %v1594
    %v2820 = vmul.f32 %v2812, %v1595
    %v2821 = vadd.f32 %v2789, %v2813
    %v2822 = vadd.f32 %v2790, %v2814
    %v2823 = vadd.f32 %v2791, %v2815
    %v2824 = vadd.f32 %v2792, %v2816
    %v2825 = vadd.f32 %v2793, %v2817
    %v2826 = vadd.f32 %v2794, %v2818
    %v2827 = vadd.f32 %v2795, %v2819
    %v2828 = vadd.f32 %v2796, %v2820
    %v2829 = vlaneseq
    %v2830 = vshrl.u32 %v2829, 7
    %v2831 = vsub.s32 1, %v2830
    %v2832 = vrot.slane %v2534, %v2831
    %v2833 = vlaneseq
    %v2834 = vshrl.u32 %v2833, 7
    %v2835 = vsub.s32 1, %v2834
    %v2836 = vrot.slane %v2536, %v2835
    %v2837 = vlaneseq
    %v2838 = vshrl.u32 %v2837, 7
    %v2839 = vsub.s32 1, %v2838
    %v2840 = vrot.slane %v2538, %v2839
    %v2841 = vlaneseq
    %v2842 = vshrl.u32 %v2841, 7
    %v2843 = vsub.s32 1, %v2842
    %v2844 = vrot.slane %v2540, %v2843
    %v2845 = vmul.f32 %v2832, %v1612
    %v2846 = vmul.f32 %v2832, %v1613
    %v2847 = vmul.f32 %v2836, %v1614
    %v2848 = vmul.f32 %v2836, %v1615
    %v2849 = vmul.f32 %v2840, %v1616
    %v2850 = vmul.f32 %v2840, %v1617
    %v2851 = vmul.f32 %v2844, %v1618
    %v2852 = vmul.f32 %v2844, %v1619
    %v2853 = vadd.f32 %v2821, %v2845
    %v2854 = vadd.f32 %v2822, %v2846
    %v2855 = vadd.f32 %v2823, %v2847
    %v2856 = vadd.f32 %v2824, %v2848
    %v2857 = vadd.f32 %v2825, %v2849
    %v2858 = vadd.f32 %v2826, %v2850
    %v2859 = vadd.f32 %v2827, %v2851
    %v2860 = vadd.f32 %v2828, %v2852
    %v2861 = vlaneseq
    %v2862 = vshrl.u32 %v2861, 7
    %v2863 = vsub.s32 2, %v2862
    %v2864 = vrot.slane %v2534, %v2863
    %v2865 = vlaneseq
    %v2866 = vshrl.u32 %v2865, 7
    %v2867 = vsub.s32 2, %v2866
    %v2868 = vrot.slane %v2536, %v2867
    %v2869 = vlaneseq
    %v2870 = vshrl.u32 %v2869, 7
    %v2871 = vsub.s32 2, %v2870
    %v2872 = vrot.slane %v2538, %v2871
    %v2873 = vlaneseq
    %v2874 = vshrl.u32 %v2873, 7
    %v2875 = vsub.s32 2, %v2874
    %v2876 = vrot.slane %v2540, %v2875
    %v2877 = vmul.f32 %v2864, %v1636
    %v2878 = vmul.f32 %v2864, %v1637
    %v2879 = vmul.f32 %v2868, %v1638
    %v2880 = vmul.f32 %v2868, %v1639
    %v2881 = vmul.f32 %v2872, %v1640
    %v2882 = vmul.f32 %v2872, %v1641
    %v2883 = vmul.f32 %v2876, %v1642
    %v2884 = vmul.f32 %v2876, %v1643
    %v2885 = vadd.f32 %v2853, %v2877
    %v2886 = vadd.f32 %v2854, %v2878
    %v2887 = vadd.f32 %v2855, %v2879
    %v2888 = vadd.f32 %v2856, %v2880
    %v2889 = vadd.f32 %v2857, %v2881
    %v2890 = vadd.f32 %v2858, %v2882
    %v2891 = vadd.f32 %v2859, %v2883
    %v2892 = vadd.f32 %v2860, %v2884
    %v2893 = vlaneseq
    %v2894 = vshrl.u32 %v2893, 7
    %v2895 = vsub.s32 3, %v2894
    %v2896 = vrot.slane %v2534, %v2895
    %v2897 = vlaneseq
    %v2898 = vshrl.u32 %v2897, 7
    %v2899 = vsub.s32 3, %v2898
    %v2900 = vrot.slane %v2536, %v2899
    %v2901 = vlaneseq
    %v2902 = vshrl.u32 %v2901, 7
    %v2903 = vsub.s32 3, %v2902
    %v2904 = vrot.slane %v2538, %v2903
    %v2905 = vlaneseq
    %v2906 = vshrl.u32 %v2905, 7
    %v2907 = vsub.s32 3, %v2906
    %v2908 = vrot.slane %v2540, %v2907
    %v2909 = vmul.f32 %v2896, %v1660
    %v2910 = vmul.f32 %v2896, %v1661
    %v2911 = vmul.f32 %v2900, %v1662
    %v2912 = vmul.f32 %v2900, %v1663
    %v2913 = vmul.f32 %v2904, %v1664
    %v2914 = vmul.f32 %v2904, %v1665
    %v2915 = vmul.f32 %v2908, %v1666
    %v2916 = vmul.f32 %v2908, %v1667
    %v2917 = vadd.f32 %v2885, %v2909
    %v2918 = vadd.f32 %v2886, %v2910
    %v2919 = vadd.f32 %v2887, %v2911
    %v2920 = vadd.f32 %v2888, %v2912
    %v2921 = vadd.f32 %v2889, %v2913
    %v2922 = vadd.f32 %v2890, %v2914
    %v2923 = vadd.f32 %v2891, %v2915
    %v2924 = vadd.f32 %v2892, %v2916
    %v2925 = vlaneseq
    %v2926 = vshrl.u32 %v2925, 7
    %v2927 = vsub.s32 4, %v2926
    %v2928 = vrot.slane %v2534, %v2927
    %v2929 = vlaneseq
    %v2930 = vshrl.u32 %v2929, 7
    %v2931 = vsub.s32 4, %v2930
    %v2932 = vrot.slane %v2536, %v2931
    %v2933 = vlaneseq
    %v2934 = vshrl.u32 %v2933, 7
    %v2935 = vsub.s32 4, %v2934
    %v2936 = vrot.slane %v2538, %v2935
    %v2937 = vlaneseq
    %v2938 = vshrl.u32 %v2937, 7
    %v2939 = vsub.s32 4, %v2938
    %v2940 = vrot.slane %v2540, %v2939
    %v2941 = vmul.f32 %v2928, %v1684
    %v2942 = vmul.f32 %v2928, %v1685
    %v2943 = vmul.f32 %v2932, %v1686
    %v2944 = vmul.f32 %v2932, %v1687
    %v2945 = vmul.f32 %v2936, %v1688
    %v2946 = vmul.f32 %v2936, %v1689
    %v2947 = vmul.f32 %v2940, %v1690
    %v2948 = vmul.f32 %v2940, %v1691
    %v2949 = vadd.f32 %v2917, %v2941
    %v2950 = vadd.f32 %v2918, %v2942
    %v2951 = vadd.f32 %v2919, %v2943
    %v2952 = vadd.f32 %v2920, %v2944
    %v2953 = vadd.f32 %v2921, %v2945
    %v2954 = vadd.f32 %v2922, %v2946
    %v2955 = vadd.f32 %v2923, %v2947
    %v2956 = vadd.f32 %v2924, %v2948
    %v2957 = vlaneseq
    %v2958 = vshrl.u32 %v2957, 7
    %v2959 = vsub.s32 5, %v2958
    %v2960 = vrot.slane %v2534, %v2959
    %v2961 = vlaneseq
    %v2962 = vshrl.u32 %v2961, 7
    %v2963 = vsub.s32 5, %v2962
    %v2964 = vrot.slane %v2536, %v2963
    %v2965 = vlaneseq
    %v2966 = vshrl.u32 %v2965, 7
    %v2967 = vsub.s32 5, %v2966
    %v2968 = vrot.slane %v2538, %v2967
    %v2969 = vlaneseq
    %v2970 = vshrl.u32 %v2969, 7
    %v2971 = vsub.s32 5, %v2970
    %v2972 = vrot.slane %v2540, %v2971
    %v2973 = vmul.f32 %v2960, %v1708
    %v2974 = vmul.f32 %v2960, %v1709
    %v2975 = vmul.f32 %v2964, %v1710
    %v2976 = vmul.f32 %v2964, %v1711
    %v2977 = vmul.f32 %v2968, %v1712
    %v2978 = vmul.f32 %v2968, %v1713
    %v2979 = vmul.f32 %v2972, %v1714
    %v2980 = vmul.f32 %v2972, %v1715
    %v2981 = vadd.f32 %v2949, %v2973
    %v2982 = vadd.f32 %v2950, %v2974
    %v2983 = vadd.f32 %v2951, %v2975
    %v2984 = vadd.f32 %v2952, %v2976
    %v2985 = vadd.f32 %v2953, %v2977
    %v2986 = vadd.f32 %v2954, %v2978
    %v2987 = vadd.f32 %v2955, %v2979
    %v2988 = vadd.f32 %v2956, %v2980
    %v2989 = vlaneseq
    %v2990 = vshrl.u32 %v2989, 7
    %v2991 = vsub.s32 6, %v2990
    %v2992 = vrot.slane %v2534, %v2991
    %v2993 = vlaneseq
    %v2994 = vshrl.u32 %v2993, 7
    %v2995 = vsub.s32 6, %v2994
    %v2996 = vrot.slane %v2536, %v2995
    %v2997 = vlaneseq
    %v2998 = vshrl.u32 %v2997, 7
    %v2999 = vsub.s32 6, %v2998
    %v3000 = vrot.slane %v2538, %v2999
    %v3001 = vlaneseq
    %v3002 = vshrl.u32 %v3001, 7
    %v3003 = vsub.s32 6, %v3002
    %v3004 = vrot.slane %v2540, %v3003
    %v3005 = vmul.f32 %v2992, %v1732
    %v3006 = vmul.f32 %v2992, %v1733
    %v3007 = vmul.f32 %v2996, %v1734
    %v3008 = vmul.f32 %v2996, %v1735
    %v3009 = vmul.f32 %v3000, %v1736
    %v3010 = vmul.f32 %v3000, %v1737
    %v3011 = vmul.f32 %v3004, %v1738
    %v3012 = vmul.f32 %v3004, %v1739
    %v3013 = vadd.f32 %v2981, %v3005
    %v3014 = vadd.f32 %v2982, %v3006
    %v3015 = vadd.f32 %v2983, %v3007
    %v3016 = vadd.f32 %v2984, %v3008
    %v3017 = vadd.f32 %v2985, %v3009
    %v3018 = vadd.f32 %v2986, %v3010
    %v3019 = vadd.f32 %v2987, %v3011
    %v3020 = vadd.f32 %v2988, %v3012
    %v3021 = vlaneseq
    %v3022 = vshrl.u32 %v3021, 7
    %v3023 = vsub.s32 7, %v3022
    %v3024 = vrot.slane %v2534, %v3023
    %v3025 = vlaneseq
    %v3026 = vshrl.u32 %v3025, 7
    %v3027 = vsub.s32 7, %v3026
    %v3028 = vrot.slane %v2536, %v3027
    %v3029 = vlaneseq
    %v3030 = vshrl.u32 %v3029, 7
    %v3031 = vsub.s32 7, %v3030
    %v3032 = vrot.slane %v2538, %v3031
    %v3033 = vlaneseq
    %v3034 = vshrl.u32 %v3033, 7
    %v3035 = vsub.s32 7, %v3034
    %v3036 = vrot.slane %v2540, %v3035
    %v3037 = vmul.f32 %v3024, %v1756
    %v3038 = vmul.f32 %v3024, %v1757
    %v3039 = vmul.f32 %v3028, %v1758
    %v3040 = vmul.f32 %v3028, %v1759
    %v3041 = vmul.f32 %v3032, %v1760
    %v3042 = vmul.f32 %v3032, %v1761
    %v3043 = vmul.f32 %v3036, %v1762
    %v3044 = vmul.f32 %v3036, %v1763
    %v3045 = vadd.f32 %v3013, %v3037
    %v3046 = vadd.f32 %v3014, %v3038
    %v3047 = vadd.f32 %v3015, %v3039
    %v3048 = vadd.f32 %v3016, %v3040
    %v3049 = vadd.f32 %v3017, %v3041
    %v3050 = vadd.f32 %v3018, %v3042
    %v3051 = vadd.f32 %v3019, %v3043
    %v3052 = vadd.f32 %v3020, %v3044
    %v3053 = vmul.f32 %v3045, %v3045
    %v3054 = vmul.f32 %v3046, %v3046
    %v3055 = vmul.f32 %v3047, %v3047
    %v3056 = vmul.f32 %v3048, %v3048
    %v3057 = vmul.f32 %v3049, %v3049
    %v3058 = vmul.f32 %v3050, %v3050
    %v3059 = vmul.f32 %v3051, %v3051
    %v3060 = vmul.f32 %v3052, %v3052
    %v3061 = vadd.f32 %v3053, %v3054
    %v3062 = vrot.slane %v3061, 4
    %v3063 = vadd.f32 %v3061, %v3062
    %v3064 = vrot.slane %v3063, 2
    %v3065 = vadd.f32 %v3063, %v3064
    %v3066 = vrot.slane %v3065, 1
    %v3067 = vadd.f32 %v3065, %v3066
    %v3068 = vadd.f32 %v3055, %v3056
    %v3069 = vrot.slane %v3068, 4
    %v3070 = vadd.f32 %v3068, %v3069
    %v3071 = vrot.slane %v3070, 2
    %v3072 = vadd.f32 %v3070, %v3071
    %v3073 = vrot.slane %v3072, 1
    %v3074 = vadd.f32 %v3072, %v3073
    %v3075 = vadd.f32 %v3057, %v3058
    %v3076 = vrot.slane %v3075, 4
    %v3077 = vadd.f32 %v3075, %v3076
    %v3078 = vrot.slane %v3077, 2
    %v3079 = vadd.f32 %v3077, %v3078
    %v3080 = vrot.slane %v3079, 1
    %v3081 = vadd.f32 %v3079, %v3080
    %v3082 = vadd.f32 %v3059, %v3060
    %v3083 = vrot.slane %v3082, 4
    %v3084 = vadd.f32 %v3082, %v3083
    %v3085 = vrot.slane %v3084, 2
    %v3086 = vadd.f32 %v3084, %v3085
    %v3087 = vrot.slane %v3086, 1
    %v3088 = vadd.f32 %v3086, %v3087
    %v3089 = vadd.f32 %v3067, 1e-07
    %v3090 = vadd.f32 %v3074, 1e-07
    %v3091 = vadd.f32 %v3081, 1e-07
    %v3092 = vadd.f32 %v3088, 1e-07
    %v3093 = vrsqrt.pop %v3089
    %v3094 = vrsqrt.pop %v3090
    %v3095 = vrsqrt.pop %v3091
    %v3096 = vrsqrt.pop %v3092
    %v3097 = vadd.f32 %v3067, 1.0
    %v3098 = vadd.f32 %v3074, 1.0
    %v3099 = vadd.f32 %v3081, 1.0
    %v3100 = vadd.f32 %v3088, 1.0
    %v3101 = vrcp.pop %v3097
    %v3102 = vrcp.pop %v3098
    %v3103 = vrcp.pop %v3099
    %v3104 = vrcp.pop %v3100
    %v3105 = vmul.f32 %v3067, %v3101
    %v3106 = vmul.f32 %v3074, %v3102
    %v3107 = vmul.f32 %v3081, %v3103
    %v3108 = vmul.f32 %v3088, %v3104
    %v3109 = vmul.f32 %v3105, %v3093
    %v3110 = vmul.f32 %v3106, %v3094
    %v3111 = vmul.f32 %v3107, %v3095
    %v3112 = vmul.f32 %v3108, %v3096
    %v3113 = vmul.f32 %v3109, %v3045
    %v3114 = vmul.f32 %v3109, %v3046
    %v3115 = vmul.f32 %v3110, %v3047
    %v3116 = vmul.f32 %v3110, %v3048
    %v3117 = vmul.f32 %v3111, %v3049
    %v3118 = vmul.f32 %v3111, %v3050
    %v3119 = vmul.f32 %v3112, %v3051
    %v3120 = vmul.f32 %v3112, %v3052
    %v3121 = vmul.f32 %v1396, %v3113
    %v3122 = vmul.f32 %v1397, %v3114
    %v3123 = vmul.f32 %v1398, %v3115
    %v3124 = vmul.f32 %v1399, %v3116
    %v3125 = vmul.f32 %v1400, %v3117
    %v3126 = vmul.f32 %v1401, %v3118
    %v3127 = vmul.f32 %v1402, %v3119
    %v3128 = vmul.f32 %v1403, %v3120
    %v3129 = vadd.f32 %v3121, %v3122
    %v3130 = vrot.slane %v3129, 4
    %v3131 = vadd.f32 %v3129, %v3130
    %v3132 = vrot.slane %v3131, 2
    %v3133 = vadd.f32 %v3131, %v3132
    %v3134 = vrot.slane %v3133, 1
    %v3135 = vadd.f32 %v3133, %v3134
    %v3136 = vadd.f32 %v3123, %v3124
    %v3137 = vrot.slane %v3136, 4
    %v3138 = vadd.f32 %v3136, %v3137
    %v3139 = vrot.slane %v3138, 2
    %v3140 = vadd.f32 %v3138, %v3139
    %v3141 = vrot.slane %v3140, 1
    %v3142 = vadd.f32 %v3140, %v3141
    %v3143 = vadd.f32 %v3125, %v3126
    %v3144 = vrot.slane %v3143, 4
    %v3145 = vadd.f32 %v3143, %v3144
    %v3146 = vrot.slane %v3145, 2
    %v3147 = vadd.f32 %v3145, %v3146
    %v3148 = vrot.slane %v3147, 1
    %v3149 = vadd.f32 %v3147, %v3148
    %v3150 = vadd.f32 %v3127, %v3128
    %v3151 = vrot.slane %v3150, 4
    %v3152 = vadd.f32 %v3150, %v3151
    %v3153 = vrot.slane %v3152, 2
    %v3154 = vadd.f32 %v3152, %v3153
    %v3155 = vrot.slane %v3154, 1
    %v3156 = vadd.f32 %v3154, %v3155
    %v3157 = vmul.f32 %v1420, %v3113
    %v3158 = vmul.f32 %v1421, %v3114
    %v3159 = vmul.f32 %v1422, %v3115
    %v3160 = vmul.f32 %v1423, %v3116
    %v3161 = vmul.f32 %v1424, %v3117
    %v3162 = vmul.f32 %v1425, %v3118
    %v3163 = vmul.f32 %v1426, %v3119
    %v3164 = vmul.f32 %v1427, %v3120
    %v3165 = vadd.f32 %v3157, %v3158
    %v3166 = vrot.slane %v3165, 4
    %v3167 = vadd.f32 %v3165, %v3166
    %v3168 = vrot.slane %v3167, 2
    %v3169 = vadd.f32 %v3167, %v3168
    %v3170 = vrot.slane %v3169, 1
    %v3171 = vadd.f32 %v3169, %v3170
    %v3172 = vadd.f32 %v3159, %v3160
    %v3173 = vrot.slane %v3172, 4
    %v3174 = vadd.f32 %v3172, %v3173
    %v3175 = vrot.slane %v3174, 2
    %v3176 = vadd.f32 %v3174, %v3175
    %v3177 = vrot.slane %v3176, 1
    %v3178 = vadd.f32 %v3176, %v3177
    %v3179 = vadd.f32 %v3161, %v3162
    %v3180 = vrot.slane %v3179, 4
    %v3181 = vadd.f32 %v3179, %v3180
    %v3182 = vrot.slane %v3181, 2
    %v3183 = vadd.f32 %v3181, %v3182
    %v3184 = vrot.slane %v3183, 1
    %v3185 = vadd.f32 %v3183, %v3184
    %v3186 = vadd.f32 %v3163, %v3164
    %v3187 = vrot.slane %v3186, 4
    %v3188 = vadd.f32 %v3186, %v3187
    %v3189 = vrot.slane %v3188, 2
    %v3190 = vadd.f32 %v3188, %v3189
    %v3191 = vrot.slane %v3190, 1
    %v3192 = vadd.f32 %v3190, %v3191
    %v3193 = vmul.f32 %v1444, %v3113
    %v3194 = vmul.f32 %v1445, %v3114
    %v3195 = vmul.f32 %v1446, %v3115
    %v3196 = vmul.f32 %v1447, %v3116
    %v3197 = vmul.f32 %v1448, %v3117
    %v3198 = vmul.f32 %v1449, %v3118
    %v3199 = vmul.f32 %v1450, %v3119
    %v3200 = vmul.f32 %v1451, %v3120
    %v3201 = vadd.f32 %v3193, %v3194
    %v3202 = vrot.slane %v3201, 4
    %v3203 = vadd.f32 %v3201, %v3202
    %v3204 = vrot.slane %v3203, 2
    %v3205 = vadd.f32 %v3203, %v3204
    %v3206 = vrot.slane %v3205, 1
    %v3207 = vadd.f32 %v3205, %v3206
    %v3208 = vadd.f32 %v3195, %v3196
    %v3209 = vrot.slane %v3208, 4
    %v3210 = vadd.f32 %v3208, %v3209
    %v3211 = vrot.slane %v3210, 2
    %v3212 = vadd.f32 %v3210, %v3211
    %v3213 = vrot.slane %v3212, 1
    %v3214 = vadd.f32 %v3212, %v3213
    %v3215 = vadd.f32 %v3197, %v3198
    %v3216 = vrot.slane %v3215, 4
    %v3217 = vadd.f32 %v3215, %v3216
    %v3218 = vrot.slane %v3217, 2
    %v3219 = vadd.f32 %v3217, %v3218
    %v3220 = vrot.slane %v3219, 1
    %v3221 = vadd.f32 %v3219, %v3220
    %v3222 = vadd.f32 %v3199, %v3200
    %v3223 = vrot.slane %v3222, 4
    %v3224 = vadd.f32 %v3222, %v3223
    %v3225 = vrot.slane %v3224, 2
    %v3226 = vadd.f32 %v3224, %v3225
    %v3227 = vrot.slane %v3226, 1
    %v3228 = vadd.f32 %v3226, %v3227
    %v3229 = vmul.f32 %v1468, %v3113
    %v3230 = vmul.f32 %v1469, %v3114
    %v3231 = vmul.f32 %v1470, %v3115
    %v3232 = vmul.f32 %v1471, %v3116
    %v3233 = vmul.f32 %v1472, %v3117
    %v3234 = vmul.f32 %v1473, %v3118
    %v3235 = vmul.f32 %v1474, %v3119
    %v3236 = vmul.f32 %v1475, %v3120
    %v3237 = vadd.f32 %v3229, %v3230
    %v3238 = vrot.slane %v3237, 4
    %v3239 = vadd.f32 %v3237, %v3238
    %v3240 = vrot.slane %v3239, 2
    %v3241 = vadd.f32 %v3239, %v3240
    %v3242 = vrot.slane %v3241, 1
    %v3243 = vadd.f32 %v3241, %v3242
    %v3244 = vadd.f32 %v3231, %v3232
    %v3245 = vrot.slane %v3244, 4
    %v3246 = vadd.f32 %v3244, %v3245
    %v3247 = vrot.slane %v3246, 2
    %v3248 = vadd.f32 %v3246, %v3247
    %v3249 = vrot.slane %v3248, 1
    %v3250 = vadd.f32 %v3248, %v3249
    %v3251 = vadd.f32 %v3233, %v3234
    %v3252 = vrot.slane %v3251, 4
    %v3253 = vadd.f32 %v3251, %v3252
    %v3254 = vrot.slane %v3253, 2
    %v3255 = vadd.f32 %v3253, %v3254
    %v3256 = vrot.slane %v3255, 1
    %v3257 = vadd.f32 %v3255, %v3256
    %v3258 = vadd.f32 %v3235, %v3236
    %v3259 = vrot.slane %v3258, 4
    %v3260 = vadd.f32 %v3258, %v3259
    %v3261 = vrot.slane %v3260, 2
    %v3262 = vadd.f32 %v3260, %v3261
    %v3263 = vrot.slane %v3262, 1
    %v3264 = vadd.f32 %v3262, %v3263
    %v3265 = vmul.f32 %v1492, %v3113
    %v3266 = vmul.f32 %v1493, %v3114
    %v3267 = vmul.f32 %v1494, %v3115
    %v3268 = vmul.f32 %v1495, %v3116
    %v3269 = vmul.f32 %v1496, %v3117
    %v3270 = vmul.f32 %v1497, %v3118
    %v3271 = vmul.f32 %v1498, %v3119
    %v3272 = vmul.f32 %v1499, %v3120
    %v3273 = vadd.f32 %v3265, %v3266
    %v3274 = vrot.slane %v3273, 4
    %v3275 = vadd.f32 %v3273, %v3274
    %v3276 = vrot.slane %v3275, 2
    %v3277 = vadd.f32 %v3275, %v3276
    %v3278 = vrot.slane %v3277, 1
    %v3279 = vadd.f32 %v3277, %v3278
    %v3280 = vadd.f32 %v3267, %v3268
    %v3281 = vrot.slane %v3280, 4
    %v3282 = vadd.f32 %v3280, %v3281
    %v3283 = vrot.slane %v3282, 2
    %v3284 = vadd.f32 %v3282, %v3283
    %v3285 = vrot.slane %v3284, 1
    %v3286 = vadd.f32 %v3284, %v3285
    %v3287 = vadd.f32 %v3269, %v3270
    %v3288 = vrot.slane %v3287, 4
    %v3289 = vadd.f32 %v3287, %v3288
    %v3290 = vrot.slane %v3289, 2
    %v3291 = vadd.f32 %v3289, %v3290
    %v3292 = vrot.slane %v3291, 1
    %v3293 = vadd.f32 %v3291, %v3292
    %v3294 = vadd.f32 %v3271, %v3272
    %v3295 = vrot.slane %v3294, 4
    %v3296 = vadd.f32 %v3294, %v3295
    %v3297 = vrot.slane %v3296, 2
    %v3298 = vadd.f32 %v3296, %v3297
    %v3299 = vrot.slane %v3298, 1
    %v3300 = vadd.f32 %v3298, %v3299
    %v3301 = vmul.f32 %v1516, %v3113
    %v3302 = vmul.f32 %v1517, %v3114
    %v3303 = vmul.f32 %v1518, %v3115
    %v3304 = vmul.f32 %v1519, %v3116
    %v3305 = vmul.f32 %v1520, %v3117
    %v3306 = vmul.f32 %v1521, %v3118
    %v3307 = vmul.f32 %v1522, %v3119
    %v3308 = vmul.f32 %v1523, %v3120
    %v3309 = vadd.f32 %v3301, %v3302
    %v3310 = vrot.slane %v3309, 4
    %v3311 = vadd.f32 %v3309, %v3310
    %v3312 = vrot.slane %v3311, 2
    %v3313 = vadd.f32 %v3311, %v3312
    %v3314 = vrot.slane %v3313, 1
    %v3315 = vadd.f32 %v3313, %v3314
    %v3316 = vadd.f32 %v3303, %v3304
    %v3317 = vrot.slane %v3316, 4
    %v3318 = vadd.f32 %v3316, %v3317
    %v3319 = vrot.slane %v3318, 2
    %v3320 = vadd.f32 %v3318, %v3319
    %v3321 = vrot.slane %v3320, 1
    %v3322 = vadd.f32 %v3320, %v3321
    %v3323 = vadd.f32 %v3305, %v3306
    %v3324 = vrot.slane %v3323, 4
    %v3325 = vadd.f32 %v3323, %v3324
    %v3326 = vrot.slane %v3325, 2
    %v3327 = vadd.f32 %v3325, %v3326
    %v3328 = vrot.slane %v3327, 1
    %v3329 = vadd.f32 %v3327, %v3328
    %v3330 = vadd.f32 %v3307, %v3308
    %v3331 = vrot.slane %v3330, 4
    %v3332 = vadd.f32 %v3330, %v3331
    %v3333 = vrot.slane %v3332, 2
    %v3334 = vadd.f32 %v3332, %v3333
    %v3335 = vrot.slane %v3334, 1
    %v3336 = vadd.f32 %v3334, %v3335
    %v3337 = vmul.f32 %v1540, %v3113
    %v3338 = vmul.f32 %v1541, %v3114
    %v3339 = vmul.f32 %v1542, %v3115
    %v3340 = vmul.f32 %v1543, %v3116
    %v3341 = vmul.f32 %v1544, %v3117
    %v3342 = vmul.f32 %v1545, %v3118
    %v3343 = vmul.f32 %v1546, %v3119
    %v3344 = vmul.f32 %v1547, %v3120
    %v3345 = vadd.f32 %v3337, %v3338
    %v3346 = vrot.slane %v3345, 4
    %v3347 = vadd.f32 %v3345, %v3346
    %v3348 = vrot.slane %v3347, 2
    %v3349 = vadd.f32 %v3347, %v3348
    %v3350 = vrot.slane %v3349, 1
    %v3351 = vadd.f32 %v3349, %v3350
    %v3352 = vadd.f32 %v3339, %v3340
    %v3353 = vrot.slane %v3352, 4
    %v3354 = vadd.f32 %v3352, %v3353
    %v3355 = vrot.slane %v3354, 2
    %v3356 = vadd.f32 %v3354, %v3355
    %v3357 = vrot.slane %v3356, 1
    %v3358 = vadd.f32 %v3356, %v3357
    %v3359 = vadd.f32 %v3341, %v3342
    %v3360 = vrot.slane %v3359, 4
    %v3361 = vadd.f32 %v3359, %v3360
    %v3362 = vrot.slane %v3361, 2
    %v3363 = vadd.f32 %v3361, %v3362
    %v3364 = vrot.slane %v3363, 1
    %v3365 = vadd.f32 %v3363, %v3364
    %v3366 = vadd.f32 %v3343, %v3344
    %v3367 = vrot.slane %v3366, 4
    %v3368 = vadd.f32 %v3366, %v3367
    %v3369 = vrot.slane %v3368, 2
    %v3370 = vadd.f32 %v3368, %v3369
    %v3371 = vrot.slane %v3370, 1
    %v3372 = vadd.f32 %v3370, %v3371
    %v3373 = vmul.f32 %v1564, %v3113
    %v3374 = vmul.f32 %v1565, %v3114
    %v3375 = vmul.f32 %v1566, %v3115
    %v3376 = vmul.f32 %v1567, %v3116
    %v3377 = vmul.f32 %v1568, %v3117
    %v3378 = vmul.f32 %v1569, %v3118
    %v3379 = vmul.f32 %v1570, %v3119
    %v3380 = vmul.f32 %v1571, %v3120
    %v3381 = vadd.f32 %v3373, %v3374
    %v3382 = vrot.slane %v3381, 4
    %v3383 = vadd.f32 %v3381, %v3382
    %v3384 = vrot.slane %v3383, 2
    %v3385 = vadd.f32 %v3383, %v3384
    %v3386 = vrot.slane %v3385, 1
    %v3387 = vadd.f32 %v3385, %v3386
    %v3388 = vadd.f32 %v3375, %v3376
    %v3389 = vrot.slane %v3388, 4
    %v3390 = vadd.f32 %v3388, %v3389
    %v3391 = vrot.slane %v3390, 2
    %v3392 = vadd.f32 %v3390, %v3391
    %v3393 = vrot.slane %v3392, 1
    %v3394 = vadd.f32 %v3392, %v3393
    %v3395 = vadd.f32 %v3377, %v3378
    %v3396 = vrot.slane %v3395, 4
    %v3397 = vadd.f32 %v3395, %v3396
    %v3398 = vrot.slane %v3397, 2
    %v3399 = vadd.f32 %v3397, %v3398
    %v3400 = vrot.slane %v3399, 1
    %v3401 = vadd.f32 %v3399, %v3400
    %v3402 = vadd.f32 %v3379, %v3380
    %v3403 = vrot.slane %v3402, 4
    %v3404 = vadd.f32 %v3402, %v3403
    %v3405 = vrot.slane %v3404, 2
    %v3406 = vadd.f32 %v3404, %v3405
    %v3407 = vrot.slane %v3406, 1
    %v3408 = vadd.f32 %v3406, %v3407
    %v3409 = vmul.f32 %v1588, %v3113
    %v3410 = vmul.f32 %v1589, %v3114
    %v3411 = vmul.f32 %v1590, %v3115
    %v3412 = vmul.f32 %v1591, %v3116
    %v3413 = vmul.f32 %v1592, %v3117
    %v3414 = vmul.f32 %v1593, %v3118
    %v3415 = vmul.f32 %v1594, %v3119
    %v3416 = vmul.f32 %v1595, %v3120
    %v3417 = vadd.f32 %v3409, %v3410
    %v3418 = vrot.slane %v3417, 4
    %v3419 = vadd.f32 %v3417, %v3418
    %v3420 = vrot.slane %v3419, 2
    %v3421 = vadd.f32 %v3419, %v3420
    %v3422 = vrot.slane %v3421, 1
    %v3423 = vadd.f32 %v3421, %v3422
    %v3424 = vadd.f32 %v3411, %v3412
    %v3425 = vrot.slane %v3424, 4
    %v3426 = vadd.f32 %v3424, %v3425
    %v3427 = vrot.slane %v3426, 2
    %v3428 = vadd.f32 %v3426, %v3427
    %v3429 = vrot.slane %v3428, 1
    %v3430 = vadd.f32 %v3428, %v3429
    %v3431 = vadd.f32 %v3413, %v3414
    %v3432 = vrot.slane %v3431, 4
    %v3433 = vadd.f32 %v3431, %v3432
    %v3434 = vrot.slane %v3433, 2
    %v3435 = vadd.f32 %v3433, %v3434
    %v3436 = vrot.slane %v3435, 1
    %v3437 = vadd.f32 %v3435, %v3436
    %v3438 = vadd.f32 %v3415, %v3416
    %v3439 = vrot.slane %v3438, 4
    %v3440 = vadd.f32 %v3438, %v3439
    %v3441 = vrot.slane %v3440, 2
    %v3442 = vadd.f32 %v3440, %v3441
    %v3443 = vrot.slane %v3442, 1
    %v3444 = vadd.f32 %v3442, %v3443
    %v3445 = vmul.f32 %v1612, %v3113
    %v3446 = vmul.f32 %v1613, %v3114
    %v3447 = vmul.f32 %v1614, %v3115
    %v3448 = vmul.f32 %v1615, %v3116
    %v3449 = vmul.f32 %v1616, %v3117
    %v3450 = vmul.f32 %v1617, %v3118
    %v3451 = vmul.f32 %v1618, %v3119
    %v3452 = vmul.f32 %v1619, %v3120
    %v3453 = vadd.f32 %v3445, %v3446
    %v3454 = vrot.slane %v3453, 4
    %v3455 = vadd.f32 %v3453, %v3454
    %v3456 = vrot.slane %v3455, 2
    %v3457 = vadd.f32 %v3455, %v3456
    %v3458 = vrot.slane %v3457, 1
    %v3459 = vadd.f32 %v3457, %v3458
    %v3460 = vadd.f32 %v3447, %v3448
    %v3461 = vrot.slane %v3460, 4
    %v3462 = vadd.f32 %v3460, %v3461
    %v3463 = vrot.slane %v3462, 2
    %v3464 = vadd.f32 %v3462, %v3463
    %v3465 = vrot.slane %v3464, 1
    %v3466 = vadd.f32 %v3464, %v3465
    %v3467 = vadd.f32 %v3449, %v3450
    %v3468 = vrot.slane %v3467, 4
    %v3469 = vadd.f32 %v3467, %v3468
    %v3470 = vrot.slane %v3469, 2
    %v3471 = vadd.f32 %v3469, %v3470
    %v3472 = vrot.slane %v3471, 1
    %v3473 = vadd.f32 %v3471, %v3472
    %v3474 = vadd.f32 %v3451, %v3452
    %v3475 = vrot.slane %v3474, 4
    %v3476 = vadd.f32 %v3474, %v3475
    %v3477 = vrot.slane %v3476, 2
    %v3478 = vadd.f32 %v3476, %v3477
    %v3479 = vrot.slane %v3478, 1
    %v3480 = vadd.f32 %v3478, %v3479
    %v3481 = vmul.f32 %v1636, %v3113
    %v3482 = vmul.f32 %v1637, %v3114
    %v3483 = vmul.f32 %v1638, %v3115
    %v3484 = vmul.f32 %v1639, %v3116
    %v3485 = vmul.f32 %v1640, %v3117
    %v3486 = vmul.f32 %v1641, %v3118
    %v3487 = vmul.f32 %v1642, %v3119
    %v3488 = vmul.f32 %v1643, %v3120
    %v3489 = vadd.f32 %v3481, %v3482
    %v3490 = vrot.slane %v3489, 4
    %v3491 = vadd.f32 %v3489, %v3490
    %v3492 = vrot.slane %v3491, 2
    %v3493 = vadd.f32 %v3491, %v3492
    %v3494 = vrot.slane %v3493, 1
    %v3495 = vadd.f32 %v3493, %v3494
    %v3496 = vadd.f32 %v3483, %v3484
    %v3497 = vrot.slane %v3496, 4
    %v3498 = vadd.f32 %v3496, %v3497
    %v3499 = vrot.slane %v3498, 2
    %v3500 = vadd.f32 %v3498, %v3499
    %v3501 = vrot.slane %v3500, 1
    %v3502 = vadd.f32 %v3500, %v3501
    %v3503 = vadd.f32 %v3485, %v3486
    %v3504 = vrot.slane %v3503, 4
    %v3505 = vadd.f32 %v3503, %v3504
    %v3506 = vrot.slane %v3505, 2
    %v3507 = vadd.f32 %v3505, %v3506
    %v3508 = vrot.slane %v3507, 1
    %v3509 = vadd.f32 %v3507, %v3508
    %v3510 = vadd.f32 %v3487, %v3488
    %v3511 = vrot.slane %v3510, 4
    %v3512 = vadd.f32 %v3510, %v3511
    %v3513 = vrot.slane %v3512, 2
    %v3514 = vadd.f32 %v3512, %v3513
    %v3515 = vrot.slane %v3514, 1
    %v3516 = vadd.f32 %v3514, %v3515
    %v3517 = vmul.f32 %v1660, %v3113
    %v3518 = vmul.f32 %v1661, %v3114
    %v3519 = vmul.f32 %v1662, %v3115
    %v3520 = vmul.f32 %v1663, %v3116
    %v3521 = vmul.f32 %v1664, %v3117
    %v3522 = vmul.f32 %v1665, %v3118
    %v3523 = vmul.f32 %v1666, %v3119
    %v3524 = vmul.f32 %v1667, %v3120
    %v3525 = vadd.f32 %v3517, %v3518
    %v3526 = vrot.slane %v3525, 4
    %v3527 = vadd.f32 %v3525, %v3526
    %v3528 = vrot.slane %v3527, 2
    %v3529 = vadd.f32 %v3527, %v3528
    %v3530 = vrot.slane %v3529, 1
    %v3531 = vadd.f32 %v3529, %v3530
    %v3532 = vadd.f32 %v3519, %v3520
    %v3533 = vrot.slane %v3532, 4
    %v3534 = vadd.f32 %v3532, %v3533
    %v3535 = vrot.slane %v3534, 2
    %v3536 = vadd.f32 %v3534, %v3535
    %v3537 = vrot.slane %v3536, 1
    %v3538 = vadd.f32 %v3536, %v3537
    %v3539 = vadd.f32 %v3521, %v3522
    %v3540 = vrot.slane %v3539, 4
    %v3541 = vadd.f32 %v3539, %v3540
    %v3542 = vrot.slane %v3541, 2
    %v3543 = vadd.f32 %v3541, %v3542
    %v3544 = vrot.slane %v3543, 1
    %v3545 = vadd.f32 %v3543, %v3544
    %v3546 = vadd.f32 %v3523, %v3524
    %v3547 = vrot.slane %v3546, 4
    %v3548 = vadd.f32 %v3546, %v3547
    %v3549 = vrot.slane %v3548, 2
    %v3550 = vadd.f32 %v3548, %v3549
    %v3551 = vrot.slane %v3550, 1
    %v3552 = vadd.f32 %v3550, %v3551
    %v3553 = vmul.f32 %v1684, %v3113
    %v3554 = vmul.f32 %v1685, %v3114
    %v3555 = vmul.f32 %v1686, %v3115
    %v3556 = vmul.f32 %v1687, %v3116
    %v3557 = vmul.f32 %v1688, %v3117
    %v3558 = vmul.f32 %v1689, %v3118
    %v3559 = vmul.f32 %v1690, %v3119
    %v3560 = vmul.f32 %v1691, %v3120
    %v3561 = vadd.f32 %v3553, %v3554
    %v3562 = vrot.slane %v3561, 4
    %v3563 = vadd.f32 %v3561, %v3562
    %v3564 = vrot.slane %v3563, 2
    %v3565 = vadd.f32 %v3563, %v3564
    %v3566 = vrot.slane %v3565, 1
    %v3567 = vadd.f32 %v3565, %v3566
    %v3568 = vadd.f32 %v3555, %v3556
    %v3569 = vrot.slane %v3568, 4
    %v3570 = vadd.f32 %v3568, %v3569
    %v3571 = vrot.slane %v3570, 2
    %v3572 = vadd.f32 %v3570, %v3571
    %v3573 = vrot.slane %v3572, 1
    %v3574 = vadd.f32 %v3572, %v3573
    %v3575 = vadd.f32 %v3557, %v3558
    %v3576 = vrot.slane %v3575, 4
    %v3577 = vadd.f32 %v3575, %v3576
    %v3578 = vrot.slane %v3577, 2
    %v3579 = vadd.f32 %v3577, %v3578
    %v3580 = vrot.slane %v3579, 1
    %v3581 = vadd.f32 %v3579, %v3580
    %v3582 = vadd.f32 %v3559, %v3560
    %v3583 = vrot.slane %v3582, 4
    %v3584 = vadd.f32 %v3582, %v3583
    %v3585 = vrot.slane %v3584, 2
    %v3586 = vadd.f32 %v3584, %v3585
    %v3587 = vrot.slane %v3586, 1
    %v3588 = vadd.f32 %v3586, %v3587
    %v3589 = vmul.f32 %v1708, %v3113
    %v3590 = vmul.f32 %v1709, %v3114
    %v3591 = vmul.f32 %v1710, %v3115
    %v3592 = vmul.f32 %v1711, %v3116
    %v3593 = vmul.f32 %v1712, %v3117
    %v3594 = vmul.f32 %v1713, %v3118
    %v3595 = vmul.f32 %v1714, %v3119
    %v3596 = vmul.f32 %v1715, %v3120
    %v3597 = vadd.f32 %v3589, %v3590
    %v3598 = vrot.slane %v3597, 4
    %v3599 = vadd.f32 %v3597, %v3598
    %v3600 = vrot.slane %v3599, 2
    %v3601 = vadd.f32 %v3599, %v3600
    %v3602 = vrot.slane %v3601, 1
    %v3603 = vadd.f32 %v3601, %v3602
    %v3604 = vadd.f32 %v3591, %v3592
    %v3605 = vrot.slane %v3604, 4
    %v3606 = vadd.f32 %v3604, %v3605
    %v3607 = vrot.slane %v3606, 2
    %v3608 = vadd.f32 %v3606, %v3607
    %v3609 = vrot.slane %v3608, 1
    %v3610 = vadd.f32 %v3608, %v3609
    %v3611 = vadd.f32 %v3593, %v3594
    %v3612 = vrot.slane %v3611, 4
    %v3613 = vadd.f32 %v3611, %v3612
    %v3614 = vrot.slane %v3613, 2
    %v3615 = vadd.f32 %v3613, %v3614
    %v3616 = vrot.slane %v3615, 1
    %v3617 = vadd.f32 %v3615, %v3616
    %v3618 = vadd.f32 %v3595, %v3596
    %v3619 = vrot.slane %v3618, 4
    %v3620 = vadd.f32 %v3618, %v3619
    %v3621 = vrot.slane %v3620, 2
    %v3622 = vadd.f32 %v3620, %v3621
    %v3623 = vrot.slane %v3622, 1
    %v3624 = vadd.f32 %v3622, %v3623
    %v3625 = vmul.f32 %v1732, %v3113
    %v3626 = vmul.f32 %v1733, %v3114
    %v3627 = vmul.f32 %v1734, %v3115
    %v3628 = vmul.f32 %v1735, %v3116
    %v3629 = vmul.f32 %v1736, %v3117
    %v3630 = vmul.f32 %v1737, %v3118
    %v3631 = vmul.f32 %v1738, %v3119
    %v3632 = vmul.f32 %v1739, %v3120
    %v3633 = vadd.f32 %v3625, %v3626
    %v3634 = vrot.slane %v3633, 4
    %v3635 = vadd.f32 %v3633, %v3634
    %v3636 = vrot.slane %v3635, 2
    %v3637 = vadd.f32 %v3635, %v3636
    %v3638 = vrot.slane %v3637, 1
    %v3639 = vadd.f32 %v3637, %v3638
    %v3640 = vadd.f32 %v3627, %v3628
    %v3641 = vrot.slane %v3640, 4
    %v3642 = vadd.f32 %v3640, %v3641
    %v3643 = vrot.slane %v3642, 2
    %v3644 = vadd.f32 %v3642, %v3643
    %v3645 = vrot.slane %v3644, 1
    %v3646 = vadd.f32 %v3644, %v3645
    %v3647 = vadd.f32 %v3629, %v3630
    %v3648 = vrot.slane %v3647, 4
    %v3649 = vadd.f32 %v3647, %v3648
    %v3650 = vrot.slane %v3649, 2
    %v3651 = vadd.f32 %v3649, %v3650
    %v3652 = vrot.slane %v3651, 1
    %v3653 = vadd.f32 %v3651, %v3652
    %v3654 = vadd.f32 %v3631, %v3632
    %v3655 = vrot.slane %v3654, 4
    %v3656 = vadd.f32 %v3654, %v3655
    %v3657 = vrot.slane %v3656, 2
    %v3658 = vadd.f32 %v3656, %v3657
    %v3659 = vrot.slane %v3658, 1
    %v3660 = vadd.f32 %v3658, %v3659
    %v3661 = vmul.f32 %v1756, %v3113
    %v3662 = vmul.f32 %v1757, %v3114
    %v3663 = vmul.f32 %v1758, %v3115
    %v3664 = vmul.f32 %v1759, %v3116
    %v3665 = vmul.f32 %v1760, %v3117
    %v3666 = vmul.f32 %v1761, %v3118
    %v3667 = vmul.f32 %v1762, %v3119
    %v3668 = vmul.f32 %v1763, %v3120
    %v3669 = vadd.f32 %v3661, %v3662
    %v3670 = vrot.slane %v3669, 4
    %v3671 = vadd.f32 %v3669, %v3670
    %v3672 = vrot.slane %v3671, 2
    %v3673 = vadd.f32 %v3671, %v3672
    %v3674 = vrot.slane %v3673, 1
    %v3675 = vadd.f32 %v3673, %v3674
    %v3676 = vadd.f32 %v3663, %v3664
    %v3677 = vrot.slane %v3676, 4
    %v3678 = vadd.f32 %v3676, %v3677
    %v3679 = vrot.slane %v3678, 2
    %v3680 = vadd.f32 %v3678, %v3679
    %v3681 = vrot.slane %v3680, 1
    %v3682 = vadd.f32 %v3680, %v3681
    %v3683 = vadd.f32 %v3665, %v3666
    %v3684 = vrot.slane %v3683, 4
    %v3685 = vadd.f32 %v3683, %v3684
    %v3686 = vrot.slane %v3685, 2
    %v3687 = vadd.f32 %v3685, %v3686
    %v3688 = vrot.slane %v3687, 1
    %v3689 = vadd.f32 %v3687, %v3688
    %v3690 = vadd.f32 %v3667, %v3668
    %v3691 = vrot.slane %v3690, 4
    %v3692 = vadd.f32 %v3690, %v3691
    %v3693 = vrot.slane %v3692, 2
    %v3694 = vadd.f32 %v3692, %v3693
    %v3695 = vrot.slane %v3694, 1
    %v3696 = vadd.f32 %v3694, %v3695
    %v3697 = vsel %vm2424, %v3135, %v3171
    %v3698 = vsel %vm2424, %v3142, %v3178
    %v3699 = vsel %vm2424, %v3149, %v3185
    %v3700 = vsel %vm2424, %v3156, %v3192
    %v3701 = vsel %vm2429, %v3697, %v3207
    %v3702 = vsel %vm2429, %v3698, %v3214
    %v3703 = vsel %vm2429, %v3699, %v3221
    %v3704 = vsel %vm2429, %v3700, %v3228
    %v3705 = vsel %vm2434, %v3701, %v3243
    %v3706 = vsel %vm2434, %v3702, %v3250
    %v3707 = vsel %vm2434, %v3703, %v3257
    %v3708 = vsel %vm2434, %v3704, %v3264
    %v3709 = vsel %vm2439, %v3705, %v3279
    %v3710 = vsel %vm2439, %v3706, %v3286
    %v3711 = vsel %vm2439, %v3707, %v3293
    %v3712 = vsel %vm2439, %v3708, %v3300
    %v3713 = vsel %vm2444, %v3709, %v3315
    %v3714 = vsel %vm2444, %v3710, %v3322
    %v3715 = vsel %vm2444, %v3711, %v3329
    %v3716 = vsel %vm2444, %v3712, %v3336
    %v3717 = vsel %vm2449, %v3713, %v3351
    %v3718 = vsel %vm2449, %v3714, %v3358
    %v3719 = vsel %vm2449, %v3715, %v3365
    %v3720 = vsel %vm2449, %v3716, %v3372
    %v3721 = vsel %vm2454, %v3717, %v3387
    %v3722 = vsel %vm2454, %v3718, %v3394
    %v3723 = vsel %vm2454, %v3719, %v3401
    %v3724 = vsel %vm2454, %v3720, %v3408
    %v3725 = vsel %vm2424, %v3423, %v3459
    %v3726 = vsel %vm2424, %v3430, %v3466
    %v3727 = vsel %vm2424, %v3437, %v3473
    %v3728 = vsel %vm2424, %v3444, %v3480
    %v3729 = vsel %vm2429, %v3725, %v3495
    %v3730 = vsel %vm2429, %v3726, %v3502
    %v3731 = vsel %vm2429, %v3727, %v3509
    %v3732 = vsel %vm2429, %v3728, %v3516
    %v3733 = vsel %vm2434, %v3729, %v3531
    %v3734 = vsel %vm2434, %v3730, %v3538
    %v3735 = vsel %vm2434, %v3731, %v3545
    %v3736 = vsel %vm2434, %v3732, %v3552
    %v3737 = vsel %vm2439, %v3733, %v3567
    %v3738 = vsel %vm2439, %v3734, %v3574
    %v3739 = vsel %vm2439, %v3735, %v3581
    %v3740 = vsel %vm2439, %v3736, %v3588
    %v3741 = vsel %vm2444, %v3737, %v3603
    %v3742 = vsel %vm2444, %v3738, %v3610
    %v3743 = vsel %vm2444, %v3739, %v3617
    %v3744 = vsel %vm2444, %v3740, %v3624
    %v3745 = vsel %vm2449, %v3741, %v3639
    %v3746 = vsel %vm2449, %v3742, %v3646
    %v3747 = vsel %vm2449, %v3743, %v3653
    %v3748 = vsel %vm2449, %v3744, %v3660
    %v3749 = vsel %vm2454, %v3745, %v3675
    %v3750 = vsel %vm2454, %v3746, %v3682
    %v3751 = vsel %vm2454, %v3747, %v3689
    %v3752 = vsel %vm2454, %v3748, %v3696
    %v3753 = vadd.f32 %v2487, %v3721
    %v3754 = vadd.f32 %v2488, %v3749
    %v3755 = vadd.f32 %v2489, %v3722
    %v3756 = vadd.f32 %v2490, %v3750
    %v3757 = vadd.f32 %v2491, %v3723
    %v3758 = vadd.f32 %v2492, %v3751
    %v3759 = vadd.f32 %v2493, %v3724
    %v3760 = vadd.f32 %v2494, %v3752
    %v3761 = vrot.slane %v3753, 4
    %v3762 = vmax.f32 %v3753, %v3761
    %v3763 = vrot.slane %v3762, 2
    %v3764 = vmax.f32 %v3762, %v3763
    %v3765 = vrot.slane %v3764, 1
    %v3766 = vmax.f32 %v3764, %v3765
    %v3767 = vrot.slane %v3754, 4
    %v3768 = vmax.f32 %v3754, %v3767
    %v3769 = vrot.slane %v3768, 2
    %v3770 = vmax.f32 %v3768, %v3769
    %v3771 = vrot.slane %v3770, 1
    %v3772 = vmax.f32 %v3770, %v3771
    %v3773 = vrot.slane %v3755, 4
    %v3774 = vmax.f32 %v3755, %v3773
    %v3775 = vrot.slane %v3774, 2
    %v3776 = vmax.f32 %v3774, %v3775
    %v3777 = vrot.slane %v3776, 1
    %v3778 = vmax.f32 %v3776, %v3777
    %v3779 = vrot.slane %v3756, 4
    %v3780 = vmax.f32 %v3756, %v3779
    %v3781 = vrot.slane %v3780, 2
    %v3782 = vmax.f32 %v3780, %v3781
    %v3783 = vrot.slane %v3782, 1
    %v3784 = vmax.f32 %v3782, %v3783
    %v3785 = vrot.slane %v3757, 4
    %v3786 = vmax.f32 %v3757, %v3785
    %v3787 = vrot.slane %v3786, 2
    %v3788 = vmax.f32 %v3786, %v3787
    %v3789 = vrot.slane %v3788, 1
    %v3790 = vmax.f32 %v3788, %v3789
    %v3791 = vrot.slane %v3758, 4
    %v3792 = vmax.f32 %v3758, %v3791
    %v3793 = vrot.slane %v3792, 2
    %v3794 = vmax.f32 %v3792, %v3793
    %v3795 = vrot.slane %v3794, 1
    %v3796 = vmax.f32 %v3794, %v3795
    %v3797 = vrot.slane %v3759, 4
    %v3798 = vmax.f32 %v3759, %v3797
    %v3799 = vrot.slane %v3798, 2
    %v3800 = vmax.f32 %v3798, %v3799
    %v3801 = vrot.slane %v3800, 1
    %v3802 = vmax.f32 %v3800, %v3801
    %v3803 = vrot.slane %v3760, 4
    %v3804 = vmax.f32 %v3760, %v3803
    %v3805 = vrot.slane %v3804, 2
    %v3806 = vmax.f32 %v3804, %v3805
    %v3807 = vrot.slane %v3806, 1
    %v3808 = vmax.f32 %v3806, %v3807
    %v3809 = vsub.f32 %v3753, %v3766
    %v3810 = vsub.f32 %v3754, %v3772
    %v3811 = vsub.f32 %v3755, %v3778
    %v3812 = vsub.f32 %v3756, %v3784
    %v3813 = vsub.f32 %v3757, %v3790
    %v3814 = vsub.f32 %v3758, %v3796
    %v3815 = vsub.f32 %v3759, %v3802
    %v3816 = vsub.f32 %v3760, %v3808
    %v3817 = vmul.f32 %v3809, 1.442695
    %v3818 = vpow.pop %v3817
    %v3819 = vmul.f32 %v3810, 1.442695
    %v3820 = vpow.pop %v3819
    %v3821 = vmul.f32 %v3811, 1.442695
    %v3822 = vpow.pop %v3821
    %v3823 = vmul.f32 %v3812, 1.442695
    %v3824 = vpow.pop %v3823
    %v3825 = vmul.f32 %v3813, 1.442695
    %v3826 = vpow.pop %v3825
    %v3827 = vmul.f32 %v3814, 1.442695
    %v3828 = vpow.pop %v3827
    %v3829 = vmul.f32 %v3815, 1.442695
    %v3830 = vpow.pop %v3829
    %v3831 = vmul.f32 %v3816, 1.442695
    %v3832 = vpow.pop %v3831
    %v3833 = vrot.slane %v3818, 4
    %v3834 = vadd.f32 %v3818, %v3833
    %v3835 = vrot.slane %v3834, 2
    %v3836 = vadd.f32 %v3834, %v3835
    %v3837 = vrot.slane %v3836, 1
    %v3838 = vadd.f32 %v3836, %v3837
    %v3839 = vrot.slane %v3820, 4
    %v3840 = vadd.f32 %v3820, %v3839
    %v3841 = vrot.slane %v3840, 2
    %v3842 = vadd.f32 %v3840, %v3841
    %v3843 = vrot.slane %v3842, 1
    %v3844 = vadd.f32 %v3842, %v3843
    %v3845 = vrot.slane %v3822, 4
    %v3846 = vadd.f32 %v3822, %v3845
    %v3847 = vrot.slane %v3846, 2
    %v3848 = vadd.f32 %v3846, %v3847
    %v3849 = vrot.slane %v3848, 1
    %v3850 = vadd.f32 %v3848, %v3849
    %v3851 = vrot.slane %v3824, 4
    %v3852 = vadd.f32 %v3824, %v3851
    %v3853 = vrot.slane %v3852, 2
    %v3854 = vadd.f32 %v3852, %v3853
    %v3855 = vrot.slane %v3854, 1
    %v3856 = vadd.f32 %v3854, %v3855
    %v3857 = vrot.slane %v3826, 4
    %v3858 = vadd.f32 %v3826, %v3857
    %v3859 = vrot.slane %v3858, 2
    %v3860 = vadd.f32 %v3858, %v3859
    %v3861 = vrot.slane %v3860, 1
    %v3862 = vadd.f32 %v3860, %v3861
    %v3863 = vrot.slane %v3828, 4
    %v3864 = vadd.f32 %v3828, %v3863
    %v3865 = vrot.slane %v3864, 2
    %v3866 = vadd.f32 %v3864, %v3865
    %v3867 = vrot.slane %v3866, 1
    %v3868 = vadd.f32 %v3866, %v3867
    %v3869 = vrot.slane %v3830, 4
    %v3870 = vadd.f32 %v3830, %v3869
    %v3871 = vrot.slane %v3870, 2
    %v3872 = vadd.f32 %v3870, %v3871
    %v3873 = vrot.slane %v3872, 1
    %v3874 = vadd.f32 %v3872, %v3873
    %v3875 = vrot.slane %v3832, 4
    %v3876 = vadd.f32 %v3832, %v3875
    %v3877 = vrot.slane %v3876, 2
    %v3878 = vadd.f32 %v3876, %v3877
    %v3879 = vrot.slane %v3878, 1
    %v3880 = vadd.f32 %v3878, %v3879
    %v3881 = vrcp.pop %v3838
    %v3882 = vrcp.pop %v3844
    %v3883 = vrcp.pop %v3850
    %v3884 = vrcp.pop %v3856
    %v3885 = vrcp.pop %v3862
    %v3886 = vrcp.pop %v3868
    %v3887 = vrcp.pop %v3874
    %v3888 = vrcp.pop %v3880
    %v3889 = vmul.f32 %v3818, %v3881
    %v3890 = vmul.f32 %v3820, %v3882
    %v3891 = vmul.f32 %v3822, %v3883
    %v3892 = vmul.f32 %v3824, %v3884
    %v3893 = vmul.f32 %v3826, %v3885
    %v3894 = vmul.f32 %v3828, %v3886
    %v3895 = vmul.f32 %v3830, %v3887
    %v3896 = vmul.f32 %v3832, %v3888
    %v3897 = vlaneseq
    %v3898 = vshrl.u32 %v3897, 7
    %v3899 = vsub.s32 0, %v3898
    %v3900 = vrot.slane %v3889, %v3899
    %v3901 = vlaneseq
    %v3902 = vshrl.u32 %v3901, 7
    %v3903 = vsub.s32 0, %v3902
    %v3904 = vrot.slane %v3891, %v3903
    %v3905 = vlaneseq
    %v3906 = vshrl.u32 %v3905, 7
    %v3907 = vsub.s32 0, %v3906
    %v3908 = vrot.slane %v3893, %v3907
    %v3909 = vlaneseq
    %v3910 = vshrl.u32 %v3909, 7
    %v3911 = vsub.s32 0, %v3910
    %v3912 = vrot.slane %v3895, %v3911
    %v3913 = vmul.f32 %v3900, %v1396
    %v3914 = vmul.f32 %v3900, %v1397
    %v3915 = vmul.f32 %v3904, %v1398
    %v3916 = vmul.f32 %v3904, %v1399
    %v3917 = vmul.f32 %v3908, %v1400
    %v3918 = vmul.f32 %v3908, %v1401
    %v3919 = vmul.f32 %v3912, %v1402
    %v3920 = vmul.f32 %v3912, %v1403
    %v3921 = vadd.f32 %v3913, 0.0
    %v3922 = vadd.f32 %v3914, 0.0
    %v3923 = vadd.f32 %v3915, 0.0
    %v3924 = vadd.f32 %v3916, 0.0
    %v3925 = vadd.f32 %v3917, 0.0
    %v3926 = vadd.f32 %v3918, 0.0
    %v3927 = vadd.f32 %v3919, 0.0
    %v3928 = vadd.f32 %v3920, 0.0
    %v3929 = vlaneseq
    %v3930 = vshrl.u32 %v3929, 7
    %v3931 = vsub.s32 1, %v3930
    %v3932 = vrot.slane %v3889, %v3931
    %v3933 = vlaneseq
    %v3934 = vshrl.u32 %v3933, 7
    %v3935 = vsub.s32 1, %v3934
    %v3936 = vrot.slane %v3891, %v3935
    %v3937 = vlaneseq
    %v3938 = vshrl.u32 %v3937, 7
    %v3939 = vsub.s32 1, %v3938
    %v3940 = vrot.slane %v3893, %v3939
    %v3941 = vlaneseq
    %v3942 = vshrl.u32 %v3941, 7
    %v3943 = vsub.s32 1, %v3942
    %v3944 = vrot.slane %v3895, %v3943
    %v3945 = vmul.f32 %v3932, %v1420
    %v3946 = vmul.f32 %v3932, %v1421
    %v3947 = vmul.f32 %v3936, %v1422
    %v3948 = vmul.f32 %v3936, %v1423
    %v3949 = vmul.f32 %v3940, %v1424
    %v3950 = vmul.f32 %v3940, %v1425
    %v3951 = vmul.f32 %v3944, %v1426
    %v3952 = vmul.f32 %v3944, %v1427
    %v3953 = vadd.f32 %v3921, %v3945
    %v3954 = vadd.f32 %v3922, %v3946
    %v3955 = vadd.f32 %v3923, %v3947
    %v3956 = vadd.f32 %v3924, %v3948
    %v3957 = vadd.f32 %v3925, %v3949
    %v3958 = vadd.f32 %v3926, %v3950
    %v3959 = vadd.f32 %v3927, %v3951
    %v3960 = vadd.f32 %v3928, %v3952
    %v3961 = vlaneseq
    %v3962 = vshrl.u32 %v3961, 7
    %v3963 = vsub.s32 2, %v3962
    %v3964 = vrot.slane %v3889, %v3963
    %v3965 = vlaneseq
    %v3966 = vshrl.u32 %v3965, 7
    %v3967 = vsub.s32 2, %v3966
    %v3968 = vrot.slane %v3891, %v3967
    %v3969 = vlaneseq
    %v3970 = vshrl.u32 %v3969, 7
    %v3971 = vsub.s32 2, %v3970
    %v3972 = vrot.slane %v3893, %v3971
    %v3973 = vlaneseq
    %v3974 = vshrl.u32 %v3973, 7
    %v3975 = vsub.s32 2, %v3974
    %v3976 = vrot.slane %v3895, %v3975
    %v3977 = vmul.f32 %v3964, %v1444
    %v3978 = vmul.f32 %v3964, %v1445
    %v3979 = vmul.f32 %v3968, %v1446
    %v3980 = vmul.f32 %v3968, %v1447
    %v3981 = vmul.f32 %v3972, %v1448
    %v3982 = vmul.f32 %v3972, %v1449
    %v3983 = vmul.f32 %v3976, %v1450
    %v3984 = vmul.f32 %v3976, %v1451
    %v3985 = vadd.f32 %v3953, %v3977
    %v3986 = vadd.f32 %v3954, %v3978
    %v3987 = vadd.f32 %v3955, %v3979
    %v3988 = vadd.f32 %v3956, %v3980
    %v3989 = vadd.f32 %v3957, %v3981
    %v3990 = vadd.f32 %v3958, %v3982
    %v3991 = vadd.f32 %v3959, %v3983
    %v3992 = vadd.f32 %v3960, %v3984
    %v3993 = vlaneseq
    %v3994 = vshrl.u32 %v3993, 7
    %v3995 = vsub.s32 3, %v3994
    %v3996 = vrot.slane %v3889, %v3995
    %v3997 = vlaneseq
    %v3998 = vshrl.u32 %v3997, 7
    %v3999 = vsub.s32 3, %v3998
    %v4000 = vrot.slane %v3891, %v3999
    %v4001 = vlaneseq
    %v4002 = vshrl.u32 %v4001, 7
    %v4003 = vsub.s32 3, %v4002
    %v4004 = vrot.slane %v3893, %v4003
    %v4005 = vlaneseq
    %v4006 = vshrl.u32 %v4005, 7
    %v4007 = vsub.s32 3, %v4006
    %v4008 = vrot.slane %v3895, %v4007
    %v4009 = vmul.f32 %v3996, %v1468
    %v4010 = vmul.f32 %v3996, %v1469
    %v4011 = vmul.f32 %v4000, %v1470
    %v4012 = vmul.f32 %v4000, %v1471
    %v4013 = vmul.f32 %v4004, %v1472
    %v4014 = vmul.f32 %v4004, %v1473
    %v4015 = vmul.f32 %v4008, %v1474
    %v4016 = vmul.f32 %v4008, %v1475
    %v4017 = vadd.f32 %v3985, %v4009
    %v4018 = vadd.f32 %v3986, %v4010
    %v4019 = vadd.f32 %v3987, %v4011
    %v4020 = vadd.f32 %v3988, %v4012
    %v4021 = vadd.f32 %v3989, %v4013
    %v4022 = vadd.f32 %v3990, %v4014
    %v4023 = vadd.f32 %v3991, %v4015
    %v4024 = vadd.f32 %v3992, %v4016
    %v4025 = vlaneseq
    %v4026 = vshrl.u32 %v4025, 7
    %v4027 = vsub.s32 4, %v4026
    %v4028 = vrot.slane %v3889, %v4027
    %v4029 = vlaneseq
    %v4030 = vshrl.u32 %v4029, 7
    %v4031 = vsub.s32 4, %v4030
    %v4032 = vrot.slane %v3891, %v4031
    %v4033 = vlaneseq
    %v4034 = vshrl.u32 %v4033, 7
    %v4035 = vsub.s32 4, %v4034
    %v4036 = vrot.slane %v3893, %v4035
    %v4037 = vlaneseq
    %v4038 = vshrl.u32 %v4037, 7
    %v4039 = vsub.s32 4, %v4038
    %v4040 = vrot.slane %v3895, %v4039
    %v4041 = vmul.f32 %v4028, %v1492
    %v4042 = vmul.f32 %v4028, %v1493
    %v4043 = vmul.f32 %v4032, %v1494
    %v4044 = vmul.f32 %v4032, %v1495
    %v4045 = vmul.f32 %v4036, %v1496
    %v4046 = vmul.f32 %v4036, %v1497
    %v4047 = vmul.f32 %v4040, %v1498
    %v4048 = vmul.f32 %v4040, %v1499
    %v4049 = vadd.f32 %v4017, %v4041
    %v4050 = vadd.f32 %v4018, %v4042
    %v4051 = vadd.f32 %v4019, %v4043
    %v4052 = vadd.f32 %v4020, %v4044
    %v4053 = vadd.f32 %v4021, %v4045
    %v4054 = vadd.f32 %v4022, %v4046
    %v4055 = vadd.f32 %v4023, %v4047
    %v4056 = vadd.f32 %v4024, %v4048
    %v4057 = vlaneseq
    %v4058 = vshrl.u32 %v4057, 7
    %v4059 = vsub.s32 5, %v4058
    %v4060 = vrot.slane %v3889, %v4059
    %v4061 = vlaneseq
    %v4062 = vshrl.u32 %v4061, 7
    %v4063 = vsub.s32 5, %v4062
    %v4064 = vrot.slane %v3891, %v4063
    %v4065 = vlaneseq
    %v4066 = vshrl.u32 %v4065, 7
    %v4067 = vsub.s32 5, %v4066
    %v4068 = vrot.slane %v3893, %v4067
    %v4069 = vlaneseq
    %v4070 = vshrl.u32 %v4069, 7
    %v4071 = vsub.s32 5, %v4070
    %v4072 = vrot.slane %v3895, %v4071
    %v4073 = vmul.f32 %v4060, %v1516
    %v4074 = vmul.f32 %v4060, %v1517
    %v4075 = vmul.f32 %v4064, %v1518
    %v4076 = vmul.f32 %v4064, %v1519
    %v4077 = vmul.f32 %v4068, %v1520
    %v4078 = vmul.f32 %v4068, %v1521
    %v4079 = vmul.f32 %v4072, %v1522
    %v4080 = vmul.f32 %v4072, %v1523
    %v4081 = vadd.f32 %v4049, %v4073
    %v4082 = vadd.f32 %v4050, %v4074
    %v4083 = vadd.f32 %v4051, %v4075
    %v4084 = vadd.f32 %v4052, %v4076
    %v4085 = vadd.f32 %v4053, %v4077
    %v4086 = vadd.f32 %v4054, %v4078
    %v4087 = vadd.f32 %v4055, %v4079
    %v4088 = vadd.f32 %v4056, %v4080
    %v4089 = vlaneseq
    %v4090 = vshrl.u32 %v4089, 7
    %v4091 = vsub.s32 6, %v4090
    %v4092 = vrot.slane %v3889, %v4091
    %v4093 = vlaneseq
    %v4094 = vshrl.u32 %v4093, 7
    %v4095 = vsub.s32 6, %v4094
    %v4096 = vrot.slane %v3891, %v4095
    %v4097 = vlaneseq
    %v4098 = vshrl.u32 %v4097, 7
    %v4099 = vsub.s32 6, %v4098
    %v4100 = vrot.slane %v3893, %v4099
    %v4101 = vlaneseq
    %v4102 = vshrl.u32 %v4101, 7
    %v4103 = vsub.s32 6, %v4102
    %v4104 = vrot.slane %v3895, %v4103
    %v4105 = vmul.f32 %v4092, %v1540
    %v4106 = vmul.f32 %v4092, %v1541
    %v4107 = vmul.f32 %v4096, %v1542
    %v4108 = vmul.f32 %v4096, %v1543
    %v4109 = vmul.f32 %v4100, %v1544
    %v4110 = vmul.f32 %v4100, %v1545
    %v4111 = vmul.f32 %v4104, %v1546
    %v4112 = vmul.f32 %v4104, %v1547
    %v4113 = vadd.f32 %v4081, %v4105
    %v4114 = vadd.f32 %v4082, %v4106
    %v4115 = vadd.f32 %v4083, %v4107
    %v4116 = vadd.f32 %v4084, %v4108
    %v4117 = vadd.f32 %v4085, %v4109
    %v4118 = vadd.f32 %v4086, %v4110
    %v4119 = vadd.f32 %v4087, %v4111
    %v4120 = vadd.f32 %v4088, %v4112
    %v4121 = vlaneseq
    %v4122 = vshrl.u32 %v4121, 7
    %v4123 = vsub.s32 7, %v4122
    %v4124 = vrot.slane %v3889, %v4123
    %v4125 = vlaneseq
    %v4126 = vshrl.u32 %v4125, 7
    %v4127 = vsub.s32 7, %v4126
    %v4128 = vrot.slane %v3891, %v4127
    %v4129 = vlaneseq
    %v4130 = vshrl.u32 %v4129, 7
    %v4131 = vsub.s32 7, %v4130
    %v4132 = vrot.slane %v3893, %v4131
    %v4133 = vlaneseq
    %v4134 = vshrl.u32 %v4133, 7
    %v4135 = vsub.s32 7, %v4134
    %v4136 = vrot.slane %v3895, %v4135
    %v4137 = vmul.f32 %v4124, %v1564
    %v4138 = vmul.f32 %v4124, %v1565
    %v4139 = vmul.f32 %v4128, %v1566
    %v4140 = vmul.f32 %v4128, %v1567
    %v4141 = vmul.f32 %v4132, %v1568
    %v4142 = vmul.f32 %v4132, %v1569
    %v4143 = vmul.f32 %v4136, %v1570
    %v4144 = vmul.f32 %v4136, %v1571
    %v4145 = vadd.f32 %v4113, %v4137
    %v4146 = vadd.f32 %v4114, %v4138
    %v4147 = vadd.f32 %v4115, %v4139
    %v4148 = vadd.f32 %v4116, %v4140
    %v4149 = vadd.f32 %v4117, %v4141
    %v4150 = vadd.f32 %v4118, %v4142
    %v4151 = vadd.f32 %v4119, %v4143
    %v4152 = vadd.f32 %v4120, %v4144
    %v4153 = vlaneseq
    %v4154 = vshrl.u32 %v4153, 7
    %v4155 = vsub.s32 0, %v4154
    %v4156 = vrot.slane %v3890, %v4155
    %v4157 = vlaneseq
    %v4158 = vshrl.u32 %v4157, 7
    %v4159 = vsub.s32 0, %v4158
    %v4160 = vrot.slane %v3892, %v4159
    %v4161 = vlaneseq
    %v4162 = vshrl.u32 %v4161, 7
    %v4163 = vsub.s32 0, %v4162
    %v4164 = vrot.slane %v3894, %v4163
    %v4165 = vlaneseq
    %v4166 = vshrl.u32 %v4165, 7
    %v4167 = vsub.s32 0, %v4166
    %v4168 = vrot.slane %v3896, %v4167
    %v4169 = vmul.f32 %v4156, %v1588
    %v4170 = vmul.f32 %v4156, %v1589
    %v4171 = vmul.f32 %v4160, %v1590
    %v4172 = vmul.f32 %v4160, %v1591
    %v4173 = vmul.f32 %v4164, %v1592
    %v4174 = vmul.f32 %v4164, %v1593
    %v4175 = vmul.f32 %v4168, %v1594
    %v4176 = vmul.f32 %v4168, %v1595
    %v4177 = vadd.f32 %v4145, %v4169
    %v4178 = vadd.f32 %v4146, %v4170
    %v4179 = vadd.f32 %v4147, %v4171
    %v4180 = vadd.f32 %v4148, %v4172
    %v4181 = vadd.f32 %v4149, %v4173
    %v4182 = vadd.f32 %v4150, %v4174
    %v4183 = vadd.f32 %v4151, %v4175
    %v4184 = vadd.f32 %v4152, %v4176
    %v4185 = vlaneseq
    %v4186 = vshrl.u32 %v4185, 7
    %v4187 = vsub.s32 1, %v4186
    %v4188 = vrot.slane %v3890, %v4187
    %v4189 = vlaneseq
    %v4190 = vshrl.u32 %v4189, 7
    %v4191 = vsub.s32 1, %v4190
    %v4192 = vrot.slane %v3892, %v4191
    %v4193 = vlaneseq
    %v4194 = vshrl.u32 %v4193, 7
    %v4195 = vsub.s32 1, %v4194
    %v4196 = vrot.slane %v3894, %v4195
    %v4197 = vlaneseq
    %v4198 = vshrl.u32 %v4197, 7
    %v4199 = vsub.s32 1, %v4198
    %v4200 = vrot.slane %v3896, %v4199
    %v4201 = vmul.f32 %v4188, %v1612
    %v4202 = vmul.f32 %v4188, %v1613
    %v4203 = vmul.f32 %v4192, %v1614
    %v4204 = vmul.f32 %v4192, %v1615
    %v4205 = vmul.f32 %v4196, %v1616
    %v4206 = vmul.f32 %v4196, %v1617
    %v4207 = vmul.f32 %v4200, %v1618
    %v4208 = vmul.f32 %v4200, %v1619
    %v4209 = vadd.f32 %v4177, %v4201
    %v4210 = vadd.f32 %v4178, %v4202
    %v4211 = vadd.f32 %v4179, %v4203
    %v4212 = vadd.f32 %v4180, %v4204
    %v4213 = vadd.f32 %v4181, %v4205
    %v4214 = vadd.f32 %v4182, %v4206
    %v4215 = vadd.f32 %v4183, %v4207
    %v4216 = vadd.f32 %v4184, %v4208
    %v4217 = vlaneseq
    %v4218 = vshrl.u32 %v4217, 7
    %v4219 = vsub.s32 2, %v4218
    %v4220 = vrot.slane %v3890, %v4219
    %v4221 = vlaneseq
    %v4222 = vshrl.u32 %v4221, 7
    %v4223 = vsub.s32 2, %v4222
    %v4224 = vrot.slane %v3892, %v4223
    %v4225 = vlaneseq
    %v4226 = vshrl.u32 %v4225, 7
    %v4227 = vsub.s32 2, %v4226
    %v4228 = vrot.slane %v3894, %v4227
    %v4229 = vlaneseq
    %v4230 = vshrl.u32 %v4229, 7
    %v4231 = vsub.s32 2, %v4230
    %v4232 = vrot.slane %v3896, %v4231
    %v4233 = vmul.f32 %v4220, %v1636
    %v4234 = vmul.f32 %v4220, %v1637
    %v4235 = vmul.f32 %v4224, %v1638
    %v4236 = vmul.f32 %v4224, %v1639
    %v4237 = vmul.f32 %v4228, %v1640
    %v4238 = vmul.f32 %v4228, %v1641
    %v4239 = vmul.f32 %v4232, %v1642
    %v4240 = vmul.f32 %v4232, %v1643
    %v4241 = vadd.f32 %v4209, %v4233
    %v4242 = vadd.f32 %v4210, %v4234
    %v4243 = vadd.f32 %v4211, %v4235
    %v4244 = vadd.f32 %v4212, %v4236
    %v4245 = vadd.f32 %v4213, %v4237
    %v4246 = vadd.f32 %v4214, %v4238
    %v4247 = vadd.f32 %v4215, %v4239
    %v4248 = vadd.f32 %v4216, %v4240
    %v4249 = vlaneseq
    %v4250 = vshrl.u32 %v4249, 7
    %v4251 = vsub.s32 3, %v4250
    %v4252 = vrot.slane %v3890, %v4251
    %v4253 = vlaneseq
    %v4254 = vshrl.u32 %v4253, 7
    %v4255 = vsub.s32 3, %v4254
    %v4256 = vrot.slane %v3892, %v4255
    %v4257 = vlaneseq
    %v4258 = vshrl.u32 %v4257, 7
    %v4259 = vsub.s32 3, %v4258
    %v4260 = vrot.slane %v3894, %v4259
    %v4261 = vlaneseq
    %v4262 = vshrl.u32 %v4261, 7
    %v4263 = vsub.s32 3, %v4262
    %v4264 = vrot.slane %v3896, %v4263
    %v4265 = vmul.f32 %v4252, %v1660
    %v4266 = vmul.f32 %v4252, %v1661
    %v4267 = vmul.f32 %v4256, %v1662
    %v4268 = vmul.f32 %v4256, %v1663
    %v4269 = vmul.f32 %v4260, %v1664
    %v4270 = vmul.f32 %v4260, %v1665
    %v4271 = vmul.f32 %v4264, %v1666
    %v4272 = vmul.f32 %v4264, %v1667
    %v4273 = vadd.f32 %v4241, %v4265
    %v4274 = vadd.f32 %v4242, %v4266
    %v4275 = vadd.f32 %v4243, %v4267
    %v4276 = vadd.f32 %v4244, %v4268
    %v4277 = vadd.f32 %v4245, %v4269
    %v4278 = vadd.f32 %v4246, %v4270
    %v4279 = vadd.f32 %v4247, %v4271
    %v4280 = vadd.f32 %v4248, %v4272
    %v4281 = vlaneseq
    %v4282 = vshrl.u32 %v4281, 7
    %v4283 = vsub.s32 4, %v4282
    %v4284 = vrot.slane %v3890, %v4283
    %v4285 = vlaneseq
    %v4286 = vshrl.u32 %v4285, 7
    %v4287 = vsub.s32 4, %v4286
    %v4288 = vrot.slane %v3892, %v4287
    %v4289 = vlaneseq
    %v4290 = vshrl.u32 %v4289, 7
    %v4291 = vsub.s32 4, %v4290
    %v4292 = vrot.slane %v3894, %v4291
    %v4293 = vlaneseq
    %v4294 = vshrl.u32 %v4293, 7
    %v4295 = vsub.s32 4, %v4294
    %v4296 = vrot.slane %v3896, %v4295
    %v4297 = vmul.f32 %v4284, %v1684
    %v4298 = vmul.f32 %v4284, %v1685
    %v4299 = vmul.f32 %v4288, %v1686
    %v4300 = vmul.f32 %v4288, %v1687
    %v4301 = vmul.f32 %v4292, %v1688
    %v4302 = vmul.f32 %v4292, %v1689
    %v4303 = vmul.f32 %v4296, %v1690
    %v4304 = vmul.f32 %v4296, %v1691
    %v4305 = vadd.f32 %v4273, %v4297
    %v4306 = vadd.f32 %v4274, %v4298
    %v4307 = vadd.f32 %v4275, %v4299
    %v4308 = vadd.f32 %v4276, %v4300
    %v4309 = vadd.f32 %v4277, %v4301
    %v4310 = vadd.f32 %v4278, %v4302
    %v4311 = vadd.f32 %v4279, %v4303
    %v4312 = vadd.f32 %v4280, %v4304
    %v4313 = vlaneseq
    %v4314 = vshrl.u32 %v4313, 7
    %v4315 = vsub.s32 5, %v4314
    %v4316 = vrot.slane %v3890, %v4315
    %v4317 = vlaneseq
    %v4318 = vshrl.u32 %v4317, 7
    %v4319 = vsub.s32 5, %v4318
    %v4320 = vrot.slane %v3892, %v4319
    %v4321 = vlaneseq
    %v4322 = vshrl.u32 %v4321, 7
    %v4323 = vsub.s32 5, %v4322
    %v4324 = vrot.slane %v3894, %v4323
    %v4325 = vlaneseq
    %v4326 = vshrl.u32 %v4325, 7
    %v4327 = vsub.s32 5, %v4326
    %v4328 = vrot.slane %v3896, %v4327
    %v4329 = vmul.f32 %v4316, %v1708
    %v4330 = vmul.f32 %v4316, %v1709
    %v4331 = vmul.f32 %v4320, %v1710
    %v4332 = vmul.f32 %v4320, %v1711
    %v4333 = vmul.f32 %v4324, %v1712
    %v4334 = vmul.f32 %v4324, %v1713
    %v4335 = vmul.f32 %v4328, %v1714
    %v4336 = vmul.f32 %v4328, %v1715
    %v4337 = vadd.f32 %v4305, %v4329
    %v4338 = vadd.f32 %v4306, %v4330
    %v4339 = vadd.f32 %v4307, %v4331
    %v4340 = vadd.f32 %v4308, %v4332
    %v4341 = vadd.f32 %v4309, %v4333
    %v4342 = vadd.f32 %v4310, %v4334
    %v4343 = vadd.f32 %v4311, %v4335
    %v4344 = vadd.f32 %v4312, %v4336
    %v4345 = vlaneseq
    %v4346 = vshrl.u32 %v4345, 7
    %v4347 = vsub.s32 6, %v4346
    %v4348 = vrot.slane %v3890, %v4347
    %v4349 = vlaneseq
    %v4350 = vshrl.u32 %v4349, 7
    %v4351 = vsub.s32 6, %v4350
    %v4352 = vrot.slane %v3892, %v4351
    %v4353 = vlaneseq
    %v4354 = vshrl.u32 %v4353, 7
    %v4355 = vsub.s32 6, %v4354
    %v4356 = vrot.slane %v3894, %v4355
    %v4357 = vlaneseq
    %v4358 = vshrl.u32 %v4357, 7
    %v4359 = vsub.s32 6, %v4358
    %v4360 = vrot.slane %v3896, %v4359
    %v4361 = vmul.f32 %v4348, %v1732
    %v4362 = vmul.f32 %v4348, %v1733
    %v4363 = vmul.f32 %v4352, %v1734
    %v4364 = vmul.f32 %v4352, %v1735
    %v4365 = vmul.f32 %v4356, %v1736
    %v4366 = vmul.f32 %v4356, %v1737
    %v4367 = vmul.f32 %v4360, %v1738
    %v4368 = vmul.f32 %v4360, %v1739
    %v4369 = vadd.f32 %v4337, %v4361
    %v4370 = vadd.f32 %v4338, %v4362
    %v4371 = vadd.f32 %v4339, %v4363
    %v4372 = vadd.f32 %v4340, %v4364
    %v4373 = vadd.f32 %v4341, %v4365
    %v4374 = vadd.f32 %v4342, %v4366
    %v4375 = vadd.f32 %v4343, %v4367
    %v4376 = vadd.f32 %v4344, %v4368
    %v4377 = vlaneseq
    %v4378 = vshrl.u32 %v4377, 7
    %v4379 = vsub.s32 7, %v4378
    %v4380 = vrot.slane %v3890, %v4379
    %v4381 = vlaneseq
    %v4382 = vshrl.u32 %v4381, 7
    %v4383 = vsub.s32 7, %v4382
    %v4384 = vrot.slane %v3892, %v4383
    %v4385 = vlaneseq
    %v4386 = vshrl.u32 %v4385, 7
    %v4387 = vsub.s32 7, %v4386
    %v4388 = vrot.slane %v3894, %v4387
    %v4389 = vlaneseq
    %v4390 = vshrl.u32 %v4389, 7
    %v4391 = vsub.s32 7, %v4390
    %v4392 = vrot.slane %v3896, %v4391
    %v4393 = vmul.f32 %v4380, %v1756
    %v4394 = vmul.f32 %v4380, %v1757
    %v4395 = vmul.f32 %v4384, %v1758
    %v4396 = vmul.f32 %v4384, %v1759
    %v4397 = vmul.f32 %v4388, %v1760
    %v4398 = vmul.f32 %v4388, %v1761
    %v4399 = vmul.f32 %v4392, %v1762
    %v4400 = vmul.f32 %v4392, %v1763
    %v4401 = vadd.f32 %v4369, %v4393
    %v4402 = vadd.f32 %v4370, %v4394
    %v4403 = vadd.f32 %v4371, %v4395
    %v4404 = vadd.f32 %v4372, %v4396
    %v4405 = vadd.f32 %v4373, %v4397
    %v4406 = vadd.f32 %v4374, %v4398
    %v4407 = vadd.f32 %v4375, %v4399
    %v4408 = vadd.f32 %v4376, %v4400
    %v4409 = vmul.f32 %v4401, %v4401
    %v4410 = vmul.f32 %v4402, %v4402
    %v4411 = vmul.f32 %v4403, %v4403
    %v4412 = vmul.f32 %v4404, %v4404
    %v4413 = vmul.f32 %v4405, %v4405
    %v4414 = vmul.f32 %v4406, %v4406
    %v4415 = vmul.f32 %v4407, %v4407
    %v4416 = vmul.f32 %v4408, %v4408
    %v4417 = vadd.f32 %v4409, %v4410
    %v4418 = vrot.slane %v4417, 4
    %v4419 = vadd.f32 %v4417, %v4418
    %v4420 = vrot.slane %v4419, 2
    %v4421 = vadd.f32 %v4419, %v4420
    %v4422 = vrot.slane %v4421, 1
    %v4423 = vadd.f32 %v4421, %v4422
    %v4424 = vadd.f32 %v4411, %v4412
    %v4425 = vrot.slane %v4424, 4
    %v4426 = vadd.f32 %v4424, %v4425
    %v4427 = vrot.slane %v4426, 2
    %v4428 = vadd.f32 %v4426, %v4427
    %v4429 = vrot.slane %v4428, 1
    %v4430 = vadd.f32 %v4428, %v4429
    %v4431 = vadd.f32 %v4413, %v4414
    %v4432 = vrot.slane %v4431, 4
    %v4433 = vadd.f32 %v4431, %v4432
    %v4434 = vrot.slane %v4433, 2
    %v4435 = vadd.f32 %v4433, %v4434
    %v4436 = vrot.slane %v4435, 1
    %v4437 = vadd.f32 %v4435, %v4436
    %v4438 = vadd.f32 %v4415, %v4416
    %v4439 = vrot.slane %v4438, 4
    %v4440 = vadd.f32 %v4438, %v4439
    %v4441 = vrot.slane %v4440, 2
    %v4442 = vadd.f32 %v4440, %v4441
    %v4443 = vrot.slane %v4442, 1
    %v4444 = vadd.f32 %v4442, %v4443
    %v4445 = vadd.f32 %v4423, 1e-07
    %v4446 = vadd.f32 %v4430, 1e-07
    %v4447 = vadd.f32 %v4437, 1e-07
    %v4448 = vadd.f32 %v4444, 1e-07
    %v4449 = vrsqrt.pop %v4445
    %v4450 = vrsqrt.pop %v4446
    %v4451 = vrsqrt.pop %v4447
    %v4452 = vrsqrt.pop %v4448
    %v4453 = vadd.f32 %v4423, 1.0
    %v4454 = vadd.f32 %v4430, 1.0
    %v4455 = vadd.f32 %v4437, 1.0
    %v4456 = vadd.f32 %v4444, 1.0
    %v4457 = vrcp.pop %v4453
    %v4458 = vrcp.pop %v4454
    %v4459 = vrcp.pop %v4455
    %v4460 = vrcp.pop %v4456
    %v4461 = vmul.f32 %v4423, %v4457
    %v4462 = vmul.f32 %v4430, %v4458
    %v4463 = vmul.f32 %v4437, %v4459
    %v4464 = vmul.f32 %v4444, %v4460
    %v4465 = vmul.f32 %v4461, %v4449
    %v4466 = vmul.f32 %v4462, %v4450
    %v4467 = vmul.f32 %v4463, %v4451
    %v4468 = vmul.f32 %v4464, %v4452
    %v4469 = vmul.f32 %v4465, %v4401
    %v4470 = vmul.f32 %v4465, %v4402
    %v4471 = vmul.f32 %v4466, %v4403
    %v4472 = vmul.f32 %v4466, %v4404
    %v4473 = vmul.f32 %v4467, %v4405
    %v4474 = vmul.f32 %v4467, %v4406
    %v4475 = vmul.f32 %v4468, %v4407
    %v4476 = vmul.f32 %v4468, %v4408
    %4477 = vst [vmem:[#allocation3] sm:$0xff] %v4469
    %4478 = vst [vmem:[#allocation3 + $0x8] sm:$0xff] %v4470
    %4479 = vst [vmem:[#allocation3 + $0x10] sm:$0xff] %v4471
    %4480 = vst [vmem:[#allocation3 + $0x18] sm:$0xff] %v4472
    %4481 = vst [vmem:[#allocation3 + $0x20] sm:$0xff] %v4473
    %4482 = vst [vmem:[#allocation3 + $0x28] sm:$0xff] %v4474
    %4483 = vst [vmem:[#allocation3 + $0x30] sm:$0xff] %v4475
    %4484 = vst [vmem:[#allocation3 + $0x38] sm:$0xff] %v4476
    // Predicated region
    $region10: #{tpu_custom_call.1} parent=1 // pred_check
      _
    $region11: #{tpu_custom_call.1} parent=1 // pred_check_branch
      %4486 = sbr.rel (0) target = $region13
    $region12: #{tpu_custom_call.1} parent=1 // pred_region
      %s4488 = ssub.s32 1024, 1024
      %4489 = vsyncadd [#allocation4], %s4488
      %s4490 = sshll.u32 [#allocation3], 4
      %s4491 = int_to_ptr.vmem [resolvable:$true] %s4490
      %4496 = dma.vmem_to_hbm [thread:$0]  %s4491, 1024, %s2, [#allocation4], 128, 128, 8
    $region13: #{tpu_custom_call.1} parent=1 // pred_fallthru
      _
    // Predicated region
    $region14: #{tpu_custom_call.1} parent=1 // pred_check
      _
    $region15: #{tpu_custom_call.1} parent=1 // pred_check_branch
      %4498 = sbr.rel (0) target = $region17
    $region16: #{tpu_custom_call.1} parent=1 // pred_region
      %4499 = dma.done [#allocation4], 1024
    $region17: #{tpu_custom_call.1} parent=1 // pred_fallthru
      _
    %4500 = vsyncpa [#allocation4], 1

</llo_original>
